<compile_context>
chip_gen: v6e
topology: v6e:2x2x1
jax: 0.10.0
libtpu: 0.0.40
codegen_flags: <defaults>
</compile_context>

<pallas_src>
import jax
import jax.numpy as jnp
from jax import lax
from jax.experimental import pallas as pl
from jax.experimental.pallas import tpu as pltpu


# ------------------------------ small helpers ------------------------------- #
def _round_up(x, m):
    return ((x + m - 1) // m) * m


def _pick_chunk(seq_len, max_chunk=4):
    # Largest divisor of seq_len <= max_chunk (use 8-32 at production sizes).
    for c in range(min(seq_len, max_chunk), 0, -1):
        if seq_len % c == 0:
            return c
    return seq_len


def _vmem_limit_bytes():
    # Generation-aware VMEM budget: ~100 MiB on v5e/v6e (128 MiB physical),
    # <= ~56 MiB on v7x (64 MiB physical).
    try:
        cap = pltpu.get_tpu_info().vmem_capacity_bytes
    except Exception:
        cap = 64 * 1024 * 1024
    return int(min(100 * 1024 * 1024, cap * 7 // 8))


# ------------------------------ fused kernel -------------------------------- #
def make_kernel(num_layers, t_chunk, num_chunks, b_pad, h_pad, c_pad):
    def kernel(*refs):
        x_ref = refs[0]                                   # (t_chunk*b_pad, D) bf16
        layer_refs = [refs[1 + 4 * l: 1 + 4 * (l + 1)] for l in range(num_layers)]
        base = 1 + 4 * num_layers
        w_out_ref, b_out_ref = refs[base], refs[base + 1]  # (H_pad,C_pad) bf16 / (1,C_pad) f32
        cls_ref, logp_ref = refs[base + 2], refs[base + 3]
        h_state, gi_chunk = refs[base + 4], refs[base + 5]  # persistent / per-chunk scratch

        c = pl.program_id(0)

        @pl.when(c == 0)
        def _init():
            h_state[...] = jnp.zeros_like(h_state)

        # Layer-0 input projections for the whole chunk: ONE big matmul (M = T*B),
        # with folded r/z biases and the input-side n bias added here, out of the
        # serial loop.
        w_ih0_ref, _, b_i0_ref, _ = layer_refs[0]
        gi_chunk[...] = (
            jnp.dot(x_ref[...], w_ih0_ref[...], preferred_element_type=jnp.float32)
            + b_i0_ref[...])

        # Serial recurrence over the chunk.  t_chunk is small & static -> partial
        # unroll; the grid axis bounds total unrolled program size.
        hs = [h_state[l] for l in range(num_layers)]
        for t in range(t_chunk):
            for l in range(num_layers):
                w_ih_ref, w_hh_ref, b_i_ref, b_hn_ref = layer_refs[l]
                h_prev = hs[l]                            # f32 state
                if l == 0:
                    gi = gi_chunk[t * b_pad:(t + 1) * b_pad, :]   # static 8-aligned rows
                else:
                    gi = (jnp.dot(hs[l - 1].astype(jnp.bfloat16), w_ih_ref[...],
                                  preferred_element_type=jnp.float32)
                          + b_i_ref[...])
                gh = jnp.dot(h_prev.astype(jnp.bfloat16), w_hh_ref[...],
                             preferred_element_type=jnp.float32)
                # 128-aligned gate slices of the fused (., 3*H_pad) results.
                r = jax.nn.sigmoid(gi[:, 0:h_pad] + gh[:, 0:h_pad])
                z = jax.nn.sigmoid(gi[:, h_pad:2 * h_pad] + gh[:, h_pad:2 * h_pad])
                n = jnp.tanh(gi[:, 2 * h_pad:3 * h_pad]
                             + r * (gh[:, 2 * h_pad:3 * h_pad] + b_hn_ref[...]))
                hs[l] = (1.0 - z) * n + z * h_prev        # f32 elementwise (v5e-safe)

        for l in range(num_layers):
            h_state[l] = hs[l]

        @pl.when(c == num_chunks - 1)
        def _finalize():
            # Fused classifier: Linear -> log_softmax -> argmax.  Padded class
            # columns carry a -1e30 bias so they never win and vanish in the lse.
            scores = (jnp.dot(hs[num_layers - 1].astype(jnp.bfloat16), w_out_ref[...],
                              preferred_element_type=jnp.float32)
                      + b_out_ref[...])
            m = jnp.max(scores, axis=1, keepdims=True)
            lse = m + jnp.log(jnp.sum(jnp.exp(scores - m), axis=1, keepdims=True))
            logp_ref[...] = scores - lse                  # lane-dense (b_pad, 128)
            col = lax.broadcasted_iota(jnp.int32, scores.shape, 1)
            cand = jnp.where(scores == m, col, jnp.int32(c_pad))
            cls_ref[...] = jnp.min(cand, axis=1, keepdims=True)  # first max, like torch

    return kernel


# --------------------------------- forward ---------------------------------- #
def sentiment_gru_forward(X, packed):
    emb = packed["embeddings"]
    S, B = X.shape
    D = emb.shape[1]
    H_pad, C_pad = packed["h_pad"], packed["c_pad"]
    C = packed["num_classes"]
    L = len(packed["layers"])
    b_pad = _round_up(max(B, 1), 8)

    # Embedding lookup (frozen table) stays in plain JAX; cast to bf16 to halve the
    # HBM round-trip of the (S, B, D) activation into the kernel.
    # TODO(synk): move the gather in-kernel (scalar-prefetch token ids + per-row DMA
    # from an HBM-resident table) and fuse it with the layer-0 projection.
    x = jnp.take(emb, X, axis=0).astype(jnp.bfloat16)      # (S, B, D)
    x = jnp.pad(x, ((0, 0), (0, b_pad - B), (0, 0)))       # sublane-align batch
    x2d = x.reshape(S * b_pad, D)                          # rows = t*b_pad + b

    t_chunk = _pick_chunk(S)
    num_chunks = S // t_chunk

    kernel = make_kernel(L, t_chunk, num_chunks, b_pad, H_pad, C_pad)

    flat = [x2d]
    in_specs = [pl.BlockSpec((t_chunk * b_pad, D), lambda c: (c, 0))]
    for lp in packed["layers"]:
        flat += [lp["w_ih"], lp["w_hh"], lp["b_i"], lp["b_hn"]]
        in_specs += [pl.BlockSpec(lp["w_ih"].shape, lambda c: (0, 0)),
                     pl.BlockSpec(lp["w_hh"].shape, lambda c: (0, 0)),
                     pl.BlockSpec(lp["b_i"].shape, lambda c: (0, 0)),
                     pl.BlockSpec(lp["b_hn"].shape, lambda c: (0, 0))]
    flat += [packed["w_out"], packed["b_out"]]
    in_specs += [pl.BlockSpec(packed["w_out"].shape, lambda c: (0, 0)),
                 pl.BlockSpec(packed["b_out"].shape, lambda c: (0, 0))]

    cls, logp = pl.pallas_call(
        kernel,
        grid_spec=pltpu.PrefetchScalarGridSpec(
            num_scalar_prefetch=0,
            grid=(num_chunks,),                            # serial time-chunk axis
            in_specs=in_specs,
            out_specs=(pl.BlockSpec((b_pad, 1), lambda c: (0, 0)),
                       pl.BlockSpec((b_pad, C_pad), lambda c: (0, 0))),
            scratch_shapes=[
                pltpu.VMEM((L, b_pad, H_pad), jnp.float32),            # persistent h
                pltpu.VMEM((t_chunk * b_pad, 3 * H_pad), jnp.float32),  # chunk gi0
            ]),
        out_shape=(jax.ShapeDtypeStruct((b_pad, 1), jnp.int32),
                   jax.ShapeDtypeStruct((b_pad, C_pad), jnp.float32)),
        compiler_params=pltpu.CompilerParams(
            dimension_semantics=("arbitrary",),
            vmem_limit_bytes=_vmem_limit_bytes()),
    )(*flat)
    return cls[:B, 0], logp[:B, :C]


# ----------------------------- parameter setup ------------------------------ #
def init_params(key, vocab_size, emb_dim, hidden, num_layers, num_classes):
    keys = jax.random.split(key, 3 + 4 * num_layers)
    ki = iter(keys)
    params = {"embeddings": jax.random.normal(next(ki), (vocab_size, emb_dim),
                                              dtype=jnp.float32)}
    bound = 1.0 / (hidden ** 0.5)
    layers = []
    for layer in range(num_layers):
        d_in = emb_dim if layer == 0 else hidden
        layers.append(dict(  # PyTorch layout: rows ordered (W_ir | W_iz | W_in)
            w_ih=jax.random.uniform(next(ki), (3 * hidden, d_in),
                                    minval=-bound, maxval=bound, dtype=jnp.float32),
            w_hh=jax.random.uniform(next(ki), (3 * hidden, hidden),
                                    minval=-bound, maxval=bound, dtype=jnp.float32),
            b_ih=jax.random.uniform(next(ki), (3 * hidden,),
                                    minval=-bound, maxval=bound, dtype=jnp.float32),
            b_hh=jax.random.uniform(next(ki), (3 * hidden,),
                                    minval=-bound, maxval=bound, dtype=jnp.float32)))
    params["gru_layers"] = layers
    params["w_out"] = jax.random.uniform(next(ki), (num_classes, hidden),
                                         minval=-bound, maxval=bound, dtype=jnp.float32)
    params["b_out"] = jax.random.uniform(next(ki), (num_classes,),
                                         minval=-bound, maxval=bound, dtype=jnp.float32)
    return params


def _pack_gate_cols(w_t, h, h_pad):
    """w_t: (d_in, 3h) with columns gate-ordered [r|z|n] -> (d_in, 3*h_pad)."""
    parts = [jnp.pad(w_t[:, g * h:(g + 1) * h], ((0, 0), (0, h_pad - h)))
             for g in range(3)]
    return jnp.concatenate(parts, axis=1)


def _pad_vec(b, h, h_pad):
    return jnp.pad(b, (0, h_pad - h))


def pack_params(params):
    """PyTorch-layout params -> fused/padded/bf16 kernel operands (done once)."""
    H = params["gru_layers"][0]["w_hh"].shape[1]
    C = params["w_out"].shape[0]
    h_pad = _round_up(H, 128)
    c_pad = _round_up(C, 128)

    packed_layers = []
    for i, lp in enumerate(params["gru_layers"]):
        d_in = lp["w_ih"].shape[1]
        d_in_pad = d_in if i == 0 else h_pad
        w_ih = _pack_gate_cols(lp["w_ih"].T, H, h_pad)
        w_ih = jnp.pad(w_ih, ((0, d_in_pad - d_in), (0, 0)))
        w_hh = _pack_gate_cols(lp["w_hh"].T, H, h_pad)
        w_hh = jnp.pad(w_hh, ((0, h_pad - H), (0, 0)))
        b_ih, b_hh = lp["b_ih"], lp["b_hh"]
        b_i = jnp.concatenate([
            _pad_vec(b_ih[0:H] + b_hh[0:H], H, h_pad),          # r (folded)
            _pad_vec(b_ih[H:2 * H] + b_hh[H:2 * H], H, h_pad),  # z (folded)
            _pad_vec(b_ih[2 * H:3 * H], H, h_pad),              # n (input side)
        ]).reshape(1, 3 * h_pad)
        b_hn = _pad_vec(b_hh[2 * H:3 * H], H, h_pad).reshape(1, h_pad)
        packed_layers.append(dict(
            w_ih=w_ih.astype(jnp.bfloat16), w_hh=w_hh.astype(jnp.bfloat16),
            b_i=b_i.astype(jnp.float32), b_hn=b_hn.astype(jnp.float32)))

    w_out = jnp.zeros((h_pad, c_pad), jnp.float32).at[:H, :C].set(params["w_out"].T)
    b_out = jnp.full((1, c_pad), -1e30, jnp.float32).at[0, :C].set(params["b_out"])
    return dict(embeddings=params["embeddings"], layers=packed_layers,
                w_out=w_out.astype(jnp.bfloat16), b_out=b_out,
                hidden=H, h_pad=h_pad, num_classes=C, c_pad=c_pad)


if __name__ == "__main__":
    VOCAB, EMB_DIM, HIDDEN, NUM_LAYERS, NUM_CLASSES = 50, 16, 32, 2, 3
    SEQ_LEN, BATCH = 8, 2

    key = jax.random.PRNGKey(0)
    kp, kx = jax.random.split(key)
    params = init_params(kp, VOCAB, EMB_DIM, HIDDEN, NUM_LAYERS, NUM_CLASSES)
    packed = pack_params(params)

    # X: (seq_len, batch) int32 token ids (nn.GRU default batch_first=False)
    X = jax.random.randint(kx, (SEQ_LEN, BATCH), 0, VOCAB, dtype=jnp.int32)

    sentiment_class, log_prob = sentiment_gru_forward(X, packed)
    jax.block_until_ready((sentiment_class, log_prob))

    assert sentiment_class.shape == (BATCH,)
    assert log_prob.shape == (BATCH, NUM_CLASSES)
    assert sentiment_class.dtype == jnp.int32
    # self-consistency: log-probs exponentiate to a distribution; class in range
    assert bool(jnp.all(jnp.abs(jnp.sum(jnp.exp(log_prob), axis=1) - 1.0) < 1e-3))
    assert bool(jnp.all((sentiment_class >= 0) & (sentiment_class < NUM_CLASSES)))
    print("KERNEL_OK")
</pallas_src>

<mosaic_0001>
module attributes {stable_mosaic.version = 11 : i64} {
  func.func @kernel(%arg0: i32, %arg1: memref<32x16xbf16, #tpu.memory_space<vmem>>, %arg2: memref<16x384xbf16, #tpu.memory_space<vmem>>, %arg3: memref<128x384xbf16, #tpu.memory_space<vmem>>, %arg4: memref<1x384xf32, #tpu.memory_space<vmem>>, %arg5: memref<1x128xf32, #tpu.memory_space<vmem>>, %arg6: memref<128x384xbf16, #tpu.memory_space<vmem>>, %arg7: memref<128x384xbf16, #tpu.memory_space<vmem>>, %arg8: memref<1x384xf32, #tpu.memory_space<vmem>>, %arg9: memref<1x128xf32, #tpu.memory_space<vmem>>, %arg10: memref<128x128xbf16, #tpu.memory_space<vmem>>, %arg11: memref<1x128xf32, #tpu.memory_space<vmem>>, %arg12: memref<8x1xi32, #tpu.memory_space<vmem>>, %arg13: memref<8x128xf32, #tpu.memory_space<vmem>>, %arg14: memref<2x8x128xf32, #tpu.memory_space<vmem>>, %arg15: memref<32x384xf32, #tpu.memory_space<vmem>>) attributes {dimension_semantics = [#tpu.dimension_semantics<arbitrary>], iteration_bounds = array<i64: 2>, scalar_prefetch = 0 : i64, scratch_operands = 2 : i64, tpu.core_type = #tpu.core_type<tc>, window_params = [{transform_indices = @transform_0, window_bounds = array<i64: 32, 16>}, {pipeline_mode = #tpu.pipeline_mode<synchronous>, transform_indices = @transform_1, window_bounds = array<i64: 16, 384>}, {pipeline_mode = #tpu.pipeline_mode<synchronous>, transform_indices = @transform_2, window_bounds = array<i64: 128, 384>}, {pipeline_mode = #tpu.pipeline_mode<synchronous>, transform_indices = @transform_3, window_bounds = array<i64: 1, 384>}, {pipeline_mode = #tpu.pipeline_mode<synchronous>, transform_indices = @transform_4, window_bounds = array<i64: 1, 128>}, {pipeline_mode = #tpu.pipeline_mode<synchronous>, transform_indices = @transform_5, window_bounds = array<i64: 128, 384>}, {pipeline_mode = #tpu.pipeline_mode<synchronous>, transform_indices = @transform_6, window_bounds = array<i64: 128, 384>}, {pipeline_mode = #tpu.pipeline_mode<synchronous>, transform_indices = @transform_7, window_bounds = array<i64: 1, 384>}, {pipeline_mode = #tpu.pipeline_mode<synchronous>, transform_indices = @transform_8, window_bounds = array<i64: 1, 128>}, {pipeline_mode = #tpu.pipeline_mode<synchronous>, transform_indices = @transform_9, window_bounds = array<i64: 128, 128>}, {pipeline_mode = #tpu.pipeline_mode<synchronous>, transform_indices = @transform_10, window_bounds = array<i64: 1, 128>}, {pipeline_mode = #tpu.pipeline_mode<synchronous>, transform_indices = @transform_11, window_bounds = array<i64: 8, 1>}, {pipeline_mode = #tpu.pipeline_mode<synchronous>, transform_indices = @transform_12, window_bounds = array<i64: 8, 128>}]} {
    %c0_i32 = arith.constant 0 : i32
    %0 = arith.cmpi eq, %arg0, %c0_i32 : i32
    %1 = arith.extui %0 : i1 to i32
    %c0_i32_0 = arith.constant 0 : i32
    %2 = arith.cmpi ne, %1, %c0_i32_0 : i32
    scf.if %2 {
      %cst_109 = arith.constant 0.000000e+00 : f32
      %307 = vector.broadcast %cst_109 : f32 to vector<2x8x128xf32>
      %c0_110 = arith.constant 0 : index
      %c0_111 = arith.constant 0 : index
      %c0_112 = arith.constant 0 : index
      %308 = vector.load %arg14[%c0_110, %c0_111, %c0_112] : memref<2x8x128xf32, #tpu.memory_space<vmem>>, vector<2x8x128xf32>
      tpu.vector_store %arg14[%c0_110, %c0_111, %c0_112], %307 {strides = array<i32>} : memref<2x8x128xf32, #tpu.memory_space<vmem>>, vector<2x8x128xf32>,
    } else {
    }
    %c0 = arith.constant 0 : index
    %c0_1 = arith.constant 0 : index
    %3 = vector.load %arg1[%c0, %c0_1] : memref<32x16xbf16, #tpu.memory_space<vmem>>, vector<32x16xbf16>
    %c0_2 = arith.constant 0 : index
    %c0_3 = arith.constant 0 : index
    %4 = vector.load %arg2[%c0_2, %c0_3] : memref<16x384xbf16, #tpu.memory_space<vmem>>, vector<16x384xbf16>
    %cst = arith.constant dense<0.000000e+00> : vector<32x384xf32>
    %5 = tpu.matmul %3, %4, %cst {dimension_numbers = #tpu.dot_dimension_numbers<[1], [0], [0], [1], [0, 0, 1, 1], [], []>} : vector<32x16xbf16>, vector<16x384xbf16>, vector<32x384xf32> -> vector<32x384xf32>
    %c0_4 = arith.constant 0 : index
    %c0_5 = arith.constant 0 : index
    %6 = vector.load %arg4[%c0_4, %c0_5] : memref<1x384xf32, #tpu.memory_space<vmem>>, vector<1x384xf32>
    %7 = vector.broadcast %6 : vector<1x384xf32> to vector<32x384xf32>
    %8 = arith.addf %5, %7 : vector<32x384xf32>
    %c0_6 = arith.constant 0 : index
    %c0_7 = arith.constant 0 : index
    %9 = vector.load %arg15[%c0_6, %c0_7] : memref<32x384xf32, #tpu.memory_space<vmem>>, vector<32x384xf32>
    tpu.vector_store %arg15[%c0_6, %c0_7], %8 {strides = array<i32>} : memref<32x384xf32, #tpu.memory_space<vmem>>, vector<32x384xf32>,
    %c0_8 = arith.constant 0 : index
    %c0_9 = arith.constant 0 : index
    %c0_10 = arith.constant 0 : index
    %10 = vector.load %arg14[%c0_8, %c0_9, %c0_10] : memref<2x8x128xf32, #tpu.memory_space<vmem>>, vector<1x8x128xf32>
    %11 = vector.shape_cast %10 : vector<1x8x128xf32> to vector<8x128xf32>
    %c1 = arith.constant 1 : index
    %c0_11 = arith.constant 0 : index
    %c0_12 = arith.constant 0 : index
    %12 = vector.load %arg14[%c1, %c0_11, %c0_12] : memref<2x8x128xf32, #tpu.memory_space<vmem>>, vector<1x8x128xf32>
    %13 = vector.shape_cast %12 : vector<1x8x128xf32> to vector<8x128xf32>
    %c0_13 = arith.constant 0 : index
    %c0_14 = arith.constant 0 : index
    %14 = vector.load %arg15[%c0_13, %c0_14] : memref<32x384xf32, #tpu.memory_space<vmem>>, vector<8x384xf32>
    %15 = arith.truncf %11 : vector<8x128xf32> to vector<8x128xbf16>
    %c0_15 = arith.constant 0 : index
    %c0_16 = arith.constant 0 : index
    %16 = vector.load %arg3[%c0_15, %c0_16] : memref<128x384xbf16, #tpu.memory_space<vmem>>, vector<128x384xbf16>
    %cst_17 = arith.constant dense<0.000000e+00> : vector<8x384xf32>
    %17 = tpu.matmul %15, %16, %cst_17 {dimension_numbers = #tpu.dot_dimension_numbers<[1], [0], [0], [1], [0, 0, 1, 1], [], []>} : vector<8x128xbf16>, vector<128x384xbf16>, vector<8x384xf32> -> vector<8x384xf32>
    %18 = vector.extract_strided_slice %14 {offsets = [0, 0], sizes = [8, 128], strides = [1, 1]} : vector<8x384xf32> to vector<8x128xf32>
    %19 = vector.extract_strided_slice %17 {offsets = [0, 0], sizes = [8, 128], strides = [1, 1]} : vector<8x384xf32> to vector<8x128xf32>
    %20 = arith.addf %18, %19 : vector<8x128xf32>
    %21 = arith.negf %20 : vector<8x128xf32>
    %22 = math.exp %21 : vector<8x128xf32>
    %cst_18 = arith.constant 1.000000e+00 : f32
    %23 = vector.broadcast %cst_18 : f32 to vector<8x128xf32>
    %24 = arith.addf %23, %22 : vector<8x128xf32>
    %25 = arith.divf %23, %24 : vector<8x128xf32>
    %26 = vector.extract_strided_slice %14 {offsets = [0, 128], sizes = [8, 128], strides = [1, 1]} : vector<8x384xf32> to vector<8x128xf32>
    %27 = vector.extract_strided_slice %17 {offsets = [0, 128], sizes = [8, 128], strides = [1, 1]} : vector<8x384xf32> to vector<8x128xf32>
    %28 = arith.addf %26, %27 : vector<8x128xf32>
    %29 = arith.negf %28 : vector<8x128xf32>
    %30 = math.exp %29 : vector<8x128xf32>
    %cst_19 = arith.constant 1.000000e+00 : f32
    %31 = vector.broadcast %cst_19 : f32 to vector<8x128xf32>
    %32 = arith.addf %31, %30 : vector<8x128xf32>
    %33 = arith.divf %31, %32 : vector<8x128xf32>
    %34 = vector.extract_strided_slice %14 {offsets = [0, 256], sizes = [8, 128], strides = [1, 1]} : vector<8x384xf32> to vector<8x128xf32>
    %35 = vector.extract_strided_slice %17 {offsets = [0, 256], sizes = [8, 128], strides = [1, 1]} : vector<8x384xf32> to vector<8x128xf32>
    %c0_20 = arith.constant 0 : index
    %c0_21 = arith.constant 0 : index
    %36 = vector.load %arg5[%c0_20, %c0_21] : memref<1x128xf32, #tpu.memory_space<vmem>>, vector<1x128xf32>
    %37 = vector.broadcast %36 : vector<1x128xf32> to vector<8x128xf32>
    %38 = arith.addf %35, %37 : vector<8x128xf32>
    %39 = arith.mulf %25, %38 : vector<8x128xf32>
    %40 = arith.addf %34, %39 : vector<8x128xf32>
    %41 = math.tanh %40 : vector<8x128xf32>
    %cst_22 = arith.constant 1.000000e+00 : f32
    %42 = vector.broadcast %cst_22 : f32 to vector<8x128xf32>
    %43 = arith.subf %42, %33 : vector<8x128xf32>
    %44 = arith.mulf %43, %41 : vector<8x128xf32>
    %45 = arith.mulf %33, %11 : vector<8x128xf32>
    %46 = arith.addf %44, %45 : vector<8x128xf32>
    %47 = arith.truncf %46 : vector<8x128xf32> to vector<8x128xbf16>
    %c0_23 = arith.constant 0 : index
    %c0_24 = arith.constant 0 : index
    %48 = vector.load %arg6[%c0_23, %c0_24] : memref<128x384xbf16, #tpu.memory_space<vmem>>, vector<128x384xbf16>
    %cst_25 = arith.constant dense<0.000000e+00> : vector<8x384xf32>
    %49 = tpu.matmul %47, %48, %cst_25 {dimension_numbers = #tpu.dot_dimension_numbers<[1], [0], [0], [1], [0, 0, 1, 1], [], []>} : vector<8x128xbf16>, vector<128x384xbf16>, vector<8x384xf32> -> vector<8x384xf32>
    %c0_26 = arith.constant 0 : index
    %c0_27 = arith.constant 0 : index
    %50 = vector.load %arg8[%c0_26, %c0_27] : memref<1x384xf32, #tpu.memory_space<vmem>>, vector<1x384xf32>
    %51 = vector.broadcast %50 : vector<1x384xf32> to vector<8x384xf32>
    %52 = arith.addf %49, %51 : vector<8x384xf32>
    %53 = arith.truncf %13 : vector<8x128xf32> to vector<8x128xbf16>
    %c0_28 = arith.constant 0 : index
    %c0_29 = arith.constant 0 : index
    %54 = vector.load %arg7[%c0_28, %c0_29] : memref<128x384xbf16, #tpu.memory_space<vmem>>, vector<128x384xbf16>
    %cst_30 = arith.constant dense<0.000000e+00> : vector<8x384xf32>
    %55 = tpu.matmul %53, %54, %cst_30 {dimension_numbers = #tpu.dot_dimension_numbers<[1], [0], [0], [1], [0, 0, 1, 1], [], []>} : vector<8x128xbf16>, vector<128x384xbf16>, vector<8x384xf32> -> vector<8x384xf32>
    %56 = vector.extract_strided_slice %52 {offsets = [0, 0], sizes = [8, 128], strides = [1, 1]} : vector<8x384xf32> to vector<8x128xf32>
    %57 = vector.extract_strided_slice %55 {offsets = [0, 0], sizes = [8, 128], strides = [1, 1]} : vector<8x384xf32> to vector<8x128xf32>
    %58 = arith.addf %56, %57 : vector<8x128xf32>
    %59 = arith.negf %58 : vector<8x128xf32>
    %60 = math.exp %59 : vector<8x128xf32>
    %cst_31 = arith.constant 1.000000e+00 : f32
    %61 = vector.broadcast %cst_31 : f32 to vector<8x128xf32>
    %62 = arith.addf %61, %60 : vector<8x128xf32>
    %63 = arith.divf %61, %62 : vector<8x128xf32>
    %64 = vector.extract_strided_slice %52 {offsets = [0, 128], sizes = [8, 128], strides = [1, 1]} : vector<8x384xf32> to vector<8x128xf32>
    %65 = vector.extract_strided_slice %55 {offsets = [0, 128], sizes = [8, 128], strides = [1, 1]} : vector<8x384xf32> to vector<8x128xf32>
    %66 = arith.addf %64, %65 : vector<8x128xf32>
    %67 = arith.negf %66 : vector<8x128xf32>
    %68 = math.exp %67 : vector<8x128xf32>
    %cst_32 = arith.constant 1.000000e+00 : f32
    %69 = vector.broadcast %cst_32 : f32 to vector<8x128xf32>
    %70 = arith.addf %69, %68 : vector<8x128xf32>
    %71 = arith.divf %69, %70 : vector<8x128xf32>
    %72 = vector.extract_strided_slice %52 {offsets = [0, 256], sizes = [8, 128], strides = [1, 1]} : vector<8x384xf32> to vector<8x128xf32>
    %73 = vector.extract_strided_slice %55 {offsets = [0, 256], sizes = [8, 128], strides = [1, 1]} : vector<8x384xf32> to vector<8x128xf32>
    %c0_33 = arith.constant 0 : index
    %c0_34 = arith.constant 0 : index
    %74 = vector.load %arg9[%c0_33, %c0_34] : memref<1x128xf32, #tpu.memory_space<vmem>>, vector<1x128xf32>
    %75 = vector.broadcast %74 : vector<1x128xf32> to vector<8x128xf32>
    %76 = arith.addf %73, %75 : vector<8x128xf32>
    %77 = arith.mulf %63, %76 : vector<8x128xf32>
    %78 = arith.addf %72, %77 : vector<8x128xf32>
    %79 = math.tanh %78 : vector<8x128xf32>
    %cst_35 = arith.constant 1.000000e+00 : f32
    %80 = vector.broadcast %cst_35 : f32 to vector<8x128xf32>
    %81 = arith.subf %80, %71 : vector<8x128xf32>
    %82 = arith.mulf %81, %79 : vector<8x128xf32>
    %83 = arith.mulf %71, %13 : vector<8x128xf32>
    %84 = arith.addf %82, %83 : vector<8x128xf32>
    %c8 = arith.constant 8 : index
    %c0_36 = arith.constant 0 : index
    %85 = vector.load %arg15[%c8, %c0_36] : memref<32x384xf32, #tpu.memory_space<vmem>>, vector<8x384xf32>
    %86 = arith.truncf %46 : vector<8x128xf32> to vector<8x128xbf16>
    %c0_37 = arith.constant 0 : index
    %c0_38 = arith.constant 0 : index
    %87 = vector.load %arg3[%c0_37, %c0_38] : memref<128x384xbf16, #tpu.memory_space<vmem>>, vector<128x384xbf16>
    %cst_39 = arith.constant dense<0.000000e+00> : vector<8x384xf32>
    %88 = tpu.matmul %86, %87, %cst_39 {dimension_numbers = #tpu.dot_dimension_numbers<[1], [0], [0], [1], [0, 0, 1, 1], [], []>} : vector<8x128xbf16>, vector<128x384xbf16>, vector<8x384xf32> -> vector<8x384xf32>
    %89 = vector.extract_strided_slice %85 {offsets = [0, 0], sizes = [8, 128], strides = [1, 1]} : vector<8x384xf32> to vector<8x128xf32>
    %90 = vector.extract_strided_slice %88 {offsets = [0, 0], sizes = [8, 128], strides = [1, 1]} : vector<8x384xf32> to vector<8x128xf32>
    %91 = arith.addf %89, %90 : vector<8x128xf32>
    %92 = arith.negf %91 : vector<8x128xf32>
    %93 = math.exp %92 : vector<8x128xf32>
    %cst_40 = arith.constant 1.000000e+00 : f32
    %94 = vector.broadcast %cst_40 : f32 to vector<8x128xf32>
    %95 = arith.addf %94, %93 : vector<8x128xf32>
    %96 = arith.divf %94, %95 : vector<8x128xf32>
    %97 = vector.extract_strided_slice %85 {offsets = [0, 128], sizes = [8, 128], strides = [1, 1]} : vector<8x384xf32> to vector<8x128xf32>
    %98 = vector.extract_strided_slice %88 {offsets = [0, 128], sizes = [8, 128], strides = [1, 1]} : vector<8x384xf32> to vector<8x128xf32>
    %99 = arith.addf %97, %98 : vector<8x128xf32>
    %100 = arith.negf %99 : vector<8x128xf32>
    %101 = math.exp %100 : vector<8x128xf32>
    %cst_41 = arith.constant 1.000000e+00 : f32
    %102 = vector.broadcast %cst_41 : f32 to vector<8x128xf32>
    %103 = arith.addf %102, %101 : vector<8x128xf32>
    %104 = arith.divf %102, %103 : vector<8x128xf32>
    %105 = vector.extract_strided_slice %85 {offsets = [0, 256], sizes = [8, 128], strides = [1, 1]} : vector<8x384xf32> to vector<8x128xf32>
    %106 = vector.extract_strided_slice %88 {offsets = [0, 256], sizes = [8, 128], strides = [1, 1]} : vector<8x384xf32> to vector<8x128xf32>
    %c0_42 = arith.constant 0 : index
    %c0_43 = arith.constant 0 : index
    %107 = vector.load %arg5[%c0_42, %c0_43] : memref<1x128xf32, #tpu.memory_space<vmem>>, vector<1x128xf32>
    %108 = vector.broadcast %107 : vector<1x128xf32> to vector<8x128xf32>
    %109 = arith.addf %106, %108 : vector<8x128xf32>
    %110 = arith.mulf %96, %109 : vector<8x128xf32>
    %111 = arith.addf %105, %110 : vector<8x128xf32>
    %112 = math.tanh %111 : vector<8x128xf32>
    %cst_44 = arith.constant 1.000000e+00 : f32
    %113 = vector.broadcast %cst_44 : f32 to vector<8x128xf32>
    %114 = arith.subf %113, %104 : vector<8x128xf32>
    %115 = arith.mulf %114, %112 : vector<8x128xf32>
    %116 = arith.mulf %104, %46 : vector<8x128xf32>
    %117 = arith.addf %115, %116 : vector<8x128xf32>
    %118 = arith.truncf %117 : vector<8x128xf32> to vector<8x128xbf16>
    %c0_45 = arith.constant 0 : index
    %c0_46 = arith.constant 0 : index
    %119 = vector.load %arg6[%c0_45, %c0_46] : memref<128x384xbf16, #tpu.memory_space<vmem>>, vector<128x384xbf16>
    %cst_47 = arith.constant dense<0.000000e+00> : vector<8x384xf32>
    %120 = tpu.matmul %118, %119, %cst_47 {dimension_numbers = #tpu.dot_dimension_numbers<[1], [0], [0], [1], [0, 0, 1, 1], [], []>} : vector<8x128xbf16>, vector<128x384xbf16>, vector<8x384xf32> -> vector<8x384xf32>
    %c0_48 = arith.constant 0 : index
    %c0_49 = arith.constant 0 : index
    %121 = vector.load %arg8[%c0_48, %c0_49] : memref<1x384xf32, #tpu.memory_space<vmem>>, vector<1x384xf32>
    %122 = vector.broadcast %121 : vector<1x384xf32> to vector<8x384xf32>
    %123 = arith.addf %120, %122 : vector<8x384xf32>
    %124 = arith.truncf %84 : vector<8x128xf32> to vector<8x128xbf16>
    %c0_50 = arith.constant 0 : index
    %c0_51 = arith.constant 0 : index
    %125 = vector.load %arg7[%c0_50, %c0_51] : memref<128x384xbf16, #tpu.memory_space<vmem>>, vector<128x384xbf16>
    %cst_52 = arith.constant dense<0.000000e+00> : vector<8x384xf32>
    %126 = tpu.matmul %124, %125, %cst_52 {dimension_numbers = #tpu.dot_dimension_numbers<[1], [0], [0], [1], [0, 0, 1, 1], [], []>} : vector<8x128xbf16>, vector<128x384xbf16>, vector<8x384xf32> -> vector<8x384xf32>
    %127 = vector.extract_strided_slice %123 {offsets = [0, 0], sizes = [8, 128], strides = [1, 1]} : vector<8x384xf32> to vector<8x128xf32>
    %128 = vector.extract_strided_slice %126 {offsets = [0, 0], sizes = [8, 128], strides = [1, 1]} : vector<8x384xf32> to vector<8x128xf32>
    %129 = arith.addf %127, %128 : vector<8x128xf32>
    %130 = arith.negf %129 : vector<8x128xf32>
    %131 = math.exp %130 : vector<8x128xf32>
    %cst_53 = arith.constant 1.000000e+00 : f32
    %132 = vector.broadcast %cst_53 : f32 to vector<8x128xf32>
    %133 = arith.addf %132, %131 : vector<8x128xf32>
    %134 = arith.divf %132, %133 : vector<8x128xf32>
    %135 = vector.extract_strided_slice %123 {offsets = [0, 128], sizes = [8, 128], strides = [1, 1]} : vector<8x384xf32> to vector<8x128xf32>
    %136 = vector.extract_strided_slice %126 {offsets = [0, 128], sizes = [8, 128], strides = [1, 1]} : vector<8x384xf32> to vector<8x128xf32>
    %137 = arith.addf %135, %136 : vector<8x128xf32>
    %138 = arith.negf %137 : vector<8x128xf32>
    %139 = math.exp %138 : vector<8x128xf32>
    %cst_54 = arith.constant 1.000000e+00 : f32
    %140 = vector.broadcast %cst_54 : f32 to vector<8x128xf32>
    %141 = arith.addf %140, %139 : vector<8x128xf32>
    %142 = arith.divf %140, %141 : vector<8x128xf32>
    %143 = vector.extract_strided_slice %123 {offsets = [0, 256], sizes = [8, 128], strides = [1, 1]} : vector<8x384xf32> to vector<8x128xf32>
    %144 = vector.extract_strided_slice %126 {offsets = [0, 256], sizes = [8, 128], strides = [1, 1]} : vector<8x384xf32> to vector<8x128xf32>
    %c0_55 = arith.constant 0 : index
    %c0_56 = arith.constant 0 : index
    %145 = vector.load %arg9[%c0_55, %c0_56] : memref<1x128xf32, #tpu.memory_space<vmem>>, vector<1x128xf32>
    %146 = vector.broadcast %145 : vector<1x128xf32> to vector<8x128xf32>
    %147 = arith.addf %144, %146 : vector<8x128xf32>
    %148 = arith.mulf %134, %147 : vector<8x128xf32>
    %149 = arith.addf %143, %148 : vector<8x128xf32>
    %150 = math.tanh %149 : vector<8x128xf32>
    %cst_57 = arith.constant 1.000000e+00 : f32
    %151 = vector.broadcast %cst_57 : f32 to vector<8x128xf32>
    %152 = arith.subf %151, %142 : vector<8x128xf32>
    %153 = arith.mulf %152, %150 : vector<8x128xf32>
    %154 = arith.mulf %142, %84 : vector<8x128xf32>
    %155 = arith.addf %153, %154 : vector<8x128xf32>
    %c16 = arith.constant 16 : index
    %c0_58 = arith.constant 0 : index
    %156 = vector.load %arg15[%c16, %c0_58] : memref<32x384xf32, #tpu.memory_space<vmem>>, vector<8x384xf32>
    %157 = arith.truncf %117 : vector<8x128xf32> to vector<8x128xbf16>
    %c0_59 = arith.constant 0 : index
    %c0_60 = arith.constant 0 : index
    %158 = vector.load %arg3[%c0_59, %c0_60] : memref<128x384xbf16, #tpu.memory_space<vmem>>, vector<128x384xbf16>
    %cst_61 = arith.constant dense<0.000000e+00> : vector<8x384xf32>
    %159 = tpu.matmul %157, %158, %cst_61 {dimension_numbers = #tpu.dot_dimension_numbers<[1], [0], [0], [1], [0, 0, 1, 1], [], []>} : vector<8x128xbf16>, vector<128x384xbf16>, vector<8x384xf32> -> vector<8x384xf32>
    %160 = vector.extract_strided_slice %156 {offsets = [0, 0], sizes = [8, 128], strides = [1, 1]} : vector<8x384xf32> to vector<8x128xf32>
    %161 = vector.extract_strided_slice %159 {offsets = [0, 0], sizes = [8, 128], strides = [1, 1]} : vector<8x384xf32> to vector<8x128xf32>
    %162 = arith.addf %160, %161 : vector<8x128xf32>
    %163 = arith.negf %162 : vector<8x128xf32>
    %164 = math.exp %163 : vector<8x128xf32>
    %cst_62 = arith.constant 1.000000e+00 : f32
    %165 = vector.broadcast %cst_62 : f32 to vector<8x128xf32>
    %166 = arith.addf %165, %164 : vector<8x128xf32>
    %167 = arith.divf %165, %166 : vector<8x128xf32>
    %168 = vector.extract_strided_slice %156 {offsets = [0, 128], sizes = [8, 128], strides = [1, 1]} : vector<8x384xf32> to vector<8x128xf32>
    %169 = vector.extract_strided_slice %159 {offsets = [0, 128], sizes = [8, 128], strides = [1, 1]} : vector<8x384xf32> to vector<8x128xf32>
    %170 = arith.addf %168, %169 : vector<8x128xf32>
    %171 = arith.negf %170 : vector<8x128xf32>
    %172 = math.exp %171 : vector<8x128xf32>
    %cst_63 = arith.constant 1.000000e+00 : f32
    %173 = vector.broadcast %cst_63 : f32 to vector<8x128xf32>
    %174 = arith.addf %173, %172 : vector<8x128xf32>
    %175 = arith.divf %173, %174 : vector<8x128xf32>
    %176 = vector.extract_strided_slice %156 {offsets = [0, 256], sizes = [8, 128], strides = [1, 1]} : vector<8x384xf32> to vector<8x128xf32>
    %177 = vector.extract_strided_slice %159 {offsets = [0, 256], sizes = [8, 128], strides = [1, 1]} : vector<8x384xf32> to vector<8x128xf32>
    %c0_64 = arith.constant 0 : index
    %c0_65 = arith.constant 0 : index
    %178 = vector.load %arg5[%c0_64, %c0_65] : memref<1x128xf32, #tpu.memory_space<vmem>>, vector<1x128xf32>
    %179 = vector.broadcast %178 : vector<1x128xf32> to vector<8x128xf32>
    %180 = arith.addf %177, %179 : vector<8x128xf32>
    %181 = arith.mulf %167, %180 : vector<8x128xf32>
    %182 = arith.addf %176, %181 : vector<8x128xf32>
    %183 = math.tanh %182 : vector<8x128xf32>
    %cst_66 = arith.constant 1.000000e+00 : f32
    %184 = vector.broadcast %cst_66 : f32 to vector<8x128xf32>
    %185 = arith.subf %184, %175 : vector<8x128xf32>
    %186 = arith.mulf %185, %183 : vector<8x128xf32>
    %187 = arith.mulf %175, %117 : vector<8x128xf32>
    %188 = arith.addf %186, %187 : vector<8x128xf32>
    %189 = arith.truncf %188 : vector<8x128xf32> to vector<8x128xbf16>
    %c0_67 = arith.constant 0 : index
    %c0_68 = arith.constant 0 : index
    %190 = vector.load %arg6[%c0_67, %c0_68] : memref<128x384xbf16, #tpu.memory_space<vmem>>, vector<128x384xbf16>
    %cst_69 = arith.constant dense<0.000000e+00> : vector<8x384xf32>
    %191 = tpu.matmul %189, %190, %cst_69 {dimension_numbers = #tpu.dot_dimension_numbers<[1], [0], [0], [1], [0, 0, 1, 1], [], []>} : vector<8x128xbf16>, vector<128x384xbf16>, vector<8x384xf32> -> vector<8x384xf32>
    %c0_70 = arith.constant 0 : index
    %c0_71 = arith.constant 0 : index
    %192 = vector.load %arg8[%c0_70, %c0_71] : memref<1x384xf32, #tpu.memory_space<vmem>>, vector<1x384xf32>
    %193 = vector.broadcast %192 : vector<1x384xf32> to vector<8x384xf32>
    %194 = arith.addf %191, %193 : vector<8x384xf32>
    %195 = arith.truncf %155 : vector<8x128xf32> to vector<8x128xbf16>
    %c0_72 = arith.constant 0 : index
    %c0_73 = arith.constant 0 : index
    %196 = vector.load %arg7[%c0_72, %c0_73] : memref<128x384xbf16, #tpu.memory_space<vmem>>, vector<128x384xbf16>
    %cst_74 = arith.constant dense<0.000000e+00> : vector<8x384xf32>
    %197 = tpu.matmul %195, %196, %cst_74 {dimension_numbers = #tpu.dot_dimension_numbers<[1], [0], [0], [1], [0, 0, 1, 1], [], []>} : vector<8x128xbf16>, vector<128x384xbf16>, vector<8x384xf32> -> vector<8x384xf32>
    %198 = vector.extract_strided_slice %194 {offsets = [0, 0], sizes = [8, 128], strides = [1, 1]} : vector<8x384xf32> to vector<8x128xf32>
    %199 = vector.extract_strided_slice %197 {offsets = [0, 0], sizes = [8, 128], strides = [1, 1]} : vector<8x384xf32> to vector<8x128xf32>
    %200 = arith.addf %198, %199 : vector<8x128xf32>
    %201 = arith.negf %200 : vector<8x128xf32>
    %202 = math.exp %201 : vector<8x128xf32>
    %cst_75 = arith.constant 1.000000e+00 : f32
    %203 = vector.broadcast %cst_75 : f32 to vector<8x128xf32>
    %204 = arith.addf %203, %202 : vector<8x128xf32>
    %205 = arith.divf %203, %204 : vector<8x128xf32>
    %206 = vector.extract_strided_slice %194 {offsets = [0, 128], sizes = [8, 128], strides = [1, 1]} : vector<8x384xf32> to vector<8x128xf32>
    %207 = vector.extract_strided_slice %197 {offsets = [0, 128], sizes = [8, 128], strides = [1, 1]} : vector<8x384xf32> to vector<8x128xf32>
    %208 = arith.addf %206, %207 : vector<8x128xf32>
    %209 = arith.negf %208 : vector<8x128xf32>
    %210 = math.exp %209 : vector<8x128xf32>
    %cst_76 = arith.constant 1.000000e+00 : f32
    %211 = vector.broadcast %cst_76 : f32 to vector<8x128xf32>
    %212 = arith.addf %211, %210 : vector<8x128xf32>
    %213 = arith.divf %211, %212 : vector<8x128xf32>
    %214 = vector.extract_strided_slice %194 {offsets = [0, 256], sizes = [8, 128], strides = [1, 1]} : vector<8x384xf32> to vector<8x128xf32>
    %215 = vector.extract_strided_slice %197 {offsets = [0, 256], sizes = [8, 128], strides = [1, 1]} : vector<8x384xf32> to vector<8x128xf32>
    %c0_77 = arith.constant 0 : index
    %c0_78 = arith.constant 0 : index
    %216 = vector.load %arg9[%c0_77, %c0_78] : memref<1x128xf32, #tpu.memory_space<vmem>>, vector<1x128xf32>
    %217 = vector.broadcast %216 : vector<1x128xf32> to vector<8x128xf32>
    %218 = arith.addf %215, %217 : vector<8x128xf32>
    %219 = arith.mulf %205, %218 : vector<8x128xf32>
    %220 = arith.addf %214, %219 : vector<8x128xf32>
    %221 = math.tanh %220 : vector<8x128xf32>
    %cst_79 = arith.constant 1.000000e+00 : f32
    %222 = vector.broadcast %cst_79 : f32 to vector<8x128xf32>
    %223 = arith.subf %222, %213 : vector<8x128xf32>
    %224 = arith.mulf %223, %221 : vector<8x128xf32>
    %225 = arith.mulf %213, %155 : vector<8x128xf32>
    %226 = arith.addf %224, %225 : vector<8x128xf32>
    %c24 = arith.constant 24 : index
    %c0_80 = arith.constant 0 : index
    %227 = vector.load %arg15[%c24, %c0_80] : memref<32x384xf32, #tpu.memory_space<vmem>>, vector<8x384xf32>
    %228 = arith.truncf %188 : vector<8x128xf32> to vector<8x128xbf16>
    %c0_81 = arith.constant 0 : index
    %c0_82 = arith.constant 0 : index
    %229 = vector.load %arg3[%c0_81, %c0_82] : memref<128x384xbf16, #tpu.memory_space<vmem>>, vector<128x384xbf16>
    %cst_83 = arith.constant dense<0.000000e+00> : vector<8x384xf32>
    %230 = tpu.matmul %228, %229, %cst_83 {dimension_numbers = #tpu.dot_dimension_numbers<[1], [0], [0], [1], [0, 0, 1, 1], [], []>} : vector<8x128xbf16>, vector<128x384xbf16>, vector<8x384xf32> -> vector<8x384xf32>
    %231 = vector.extract_strided_slice %227 {offsets = [0, 0], sizes = [8, 128], strides = [1, 1]} : vector<8x384xf32> to vector<8x128xf32>
    %232 = vector.extract_strided_slice %230 {offsets = [0, 0], sizes = [8, 128], strides = [1, 1]} : vector<8x384xf32> to vector<8x128xf32>
    %233 = arith.addf %231, %232 : vector<8x128xf32>
    %234 = arith.negf %233 : vector<8x128xf32>
    %235 = math.exp %234 : vector<8x128xf32>
    %cst_84 = arith.constant 1.000000e+00 : f32
    %236 = vector.broadcast %cst_84 : f32 to vector<8x128xf32>
    %237 = arith.addf %236, %235 : vector<8x128xf32>
    %238 = arith.divf %236, %237 : vector<8x128xf32>
    %239 = vector.extract_strided_slice %227 {offsets = [0, 128], sizes = [8, 128], strides = [1, 1]} : vector<8x384xf32> to vector<8x128xf32>
    %240 = vector.extract_strided_slice %230 {offsets = [0, 128], sizes = [8, 128], strides = [1, 1]} : vector<8x384xf32> to vector<8x128xf32>
    %241 = arith.addf %239, %240 : vector<8x128xf32>
    %242 = arith.negf %241 : vector<8x128xf32>
    %243 = math.exp %242 : vector<8x128xf32>
    %cst_85 = arith.constant 1.000000e+00 : f32
    %244 = vector.broadcast %cst_85 : f32 to vector<8x128xf32>
    %245 = arith.addf %244, %243 : vector<8x128xf32>
    %246 = arith.divf %244, %245 : vector<8x128xf32>
    %247 = vector.extract_strided_slice %227 {offsets = [0, 256], sizes = [8, 128], strides = [1, 1]} : vector<8x384xf32> to vector<8x128xf32>
    %248 = vector.extract_strided_slice %230 {offsets = [0, 256], sizes = [8, 128], strides = [1, 1]} : vector<8x384xf32> to vector<8x128xf32>
    %c0_86 = arith.constant 0 : index
    %c0_87 = arith.constant 0 : index
    %249 = vector.load %arg5[%c0_86, %c0_87] : memref<1x128xf32, #tpu.memory_space<vmem>>, vector<1x128xf32>
    %250 = vector.broadcast %249 : vector<1x128xf32> to vector<8x128xf32>
    %251 = arith.addf %248, %250 : vector<8x128xf32>
    %252 = arith.mulf %238, %251 : vector<8x128xf32>
    %253 = arith.addf %247, %252 : vector<8x128xf32>
    %254 = math.tanh %253 : vector<8x128xf32>
    %cst_88 = arith.constant 1.000000e+00 : f32
    %255 = vector.broadcast %cst_88 : f32 to vector<8x128xf32>
    %256 = arith.subf %255, %246 : vector<8x128xf32>
    %257 = arith.mulf %256, %254 : vector<8x128xf32>
    %258 = arith.mulf %246, %188 : vector<8x128xf32>
    %259 = arith.addf %257, %258 : vector<8x128xf32>
    %260 = arith.truncf %259 : vector<8x128xf32> to vector<8x128xbf16>
    %c0_89 = arith.constant 0 : index
    %c0_90 = arith.constant 0 : index
    %261 = vector.load %arg6[%c0_89, %c0_90] : memref<128x384xbf16, #tpu.memory_space<vmem>>, vector<128x384xbf16>
    %cst_91 = arith.constant dense<0.000000e+00> : vector<8x384xf32>
    %262 = tpu.matmul %260, %261, %cst_91 {dimension_numbers = #tpu.dot_dimension_numbers<[1], [0], [0], [1], [0, 0, 1, 1], [], []>} : vector<8x128xbf16>, vector<128x384xbf16>, vector<8x384xf32> -> vector<8x384xf32>
    %c0_92 = arith.constant 0 : index
    %c0_93 = arith.constant 0 : index
    %263 = vector.load %arg8[%c0_92, %c0_93] : memref<1x384xf32, #tpu.memory_space<vmem>>, vector<1x384xf32>
    %264 = vector.broadcast %263 : vector<1x384xf32> to vector<8x384xf32>
    %265 = arith.addf %262, %264 : vector<8x384xf32>
    %266 = arith.truncf %226 : vector<8x128xf32> to vector<8x128xbf16>
    %c0_94 = arith.constant 0 : index
    %c0_95 = arith.constant 0 : index
    %267 = vector.load %arg7[%c0_94, %c0_95] : memref<128x384xbf16, #tpu.memory_space<vmem>>, vector<128x384xbf16>
    %cst_96 = arith.constant dense<0.000000e+00> : vector<8x384xf32>
    %268 = tpu.matmul %266, %267, %cst_96 {dimension_numbers = #tpu.dot_dimension_numbers<[1], [0], [0], [1], [0, 0, 1, 1], [], []>} : vector<8x128xbf16>, vector<128x384xbf16>, vector<8x384xf32> -> vector<8x384xf32>
    %269 = vector.extract_strided_slice %265 {offsets = [0, 0], sizes = [8, 128], strides = [1, 1]} : vector<8x384xf32> to vector<8x128xf32>
    %270 = vector.extract_strided_slice %268 {offsets = [0, 0], sizes = [8, 128], strides = [1, 1]} : vector<8x384xf32> to vector<8x128xf32>
    %271 = arith.addf %269, %270 : vector<8x128xf32>
    %272 = arith.negf %271 : vector<8x128xf32>
    %273 = math.exp %272 : vector<8x128xf32>
    %cst_97 = arith.constant 1.000000e+00 : f32
    %274 = vector.broadcast %cst_97 : f32 to vector<8x128xf32>
    %275 = arith.addf %274, %273 : vector<8x128xf32>
    %276 = arith.divf %274, %275 : vector<8x128xf32>
    %277 = vector.extract_strided_slice %265 {offsets = [0, 128], sizes = [8, 128], strides = [1, 1]} : vector<8x384xf32> to vector<8x128xf32>
    %278 = vector.extract_strided_slice %268 {offsets = [0, 128], sizes = [8, 128], strides = [1, 1]} : vector<8x384xf32> to vector<8x128xf32>
    %279 = arith.addf %277, %278 : vector<8x128xf32>
    %280 = arith.negf %279 : vector<8x128xf32>
    %281 = math.exp %280 : vector<8x128xf32>
    %cst_98 = arith.constant 1.000000e+00 : f32
    %282 = vector.broadcast %cst_98 : f32 to vector<8x128xf32>
    %283 = arith.addf %282, %281 : vector<8x128xf32>
    %284 = arith.divf %282, %283 : vector<8x128xf32>
    %285 = vector.extract_strided_slice %265 {offsets = [0, 256], sizes = [8, 128], strides = [1, 1]} : vector<8x384xf32> to vector<8x128xf32>
    %286 = vector.extract_strided_slice %268 {offsets = [0, 256], sizes = [8, 128], strides = [1, 1]} : vector<8x384xf32> to vector<8x128xf32>
    %c0_99 = arith.constant 0 : index
    %c0_100 = arith.constant 0 : index
    %287 = vector.load %arg9[%c0_99, %c0_100] : memref<1x128xf32, #tpu.memory_space<vmem>>, vector<1x128xf32>
    %288 = vector.broadcast %287 : vector<1x128xf32> to vector<8x128xf32>
    %289 = arith.addf %286, %288 : vector<8x128xf32>
    %290 = arith.mulf %276, %289 : vector<8x128xf32>
    %291 = arith.addf %285, %290 : vector<8x128xf32>
    %292 = math.tanh %291 : vector<8x128xf32>
    %cst_101 = arith.constant 1.000000e+00 : f32
    %293 = vector.broadcast %cst_101 : f32 to vector<8x128xf32>
    %294 = arith.subf %293, %284 : vector<8x128xf32>
    %295 = arith.mulf %294, %292 : vector<8x128xf32>
    %296 = arith.mulf %284, %226 : vector<8x128xf32>
    %297 = arith.addf %295, %296 : vector<8x128xf32>
    %c0_102 = arith.constant 0 : index
    %c0_103 = arith.constant 0 : index
    %c0_104 = arith.constant 0 : index
    %298 = vector.load %arg14[%c0_102, %c0_103, %c0_104] : memref<2x8x128xf32, #tpu.memory_space<vmem>>, vector<1x8x128xf32>
    %299 = vector.shape_cast %298 : vector<1x8x128xf32> to vector<8x128xf32>
    %300 = vector.shape_cast %259 : vector<8x128xf32> to vector<1x8x128xf32>
    tpu.vector_store %arg14[%c0_102, %c0_103, %c0_104], %300 {strides = array<i32>} : memref<2x8x128xf32, #tpu.memory_space<vmem>>, vector<1x8x128xf32>,
    %c1_105 = arith.constant 1 : index
    %c0_106 = arith.constant 0 : index
    %c0_107 = arith.constant 0 : index
    %301 = vector.load %arg14[%c1_105, %c0_106, %c0_107] : memref<2x8x128xf32, #tpu.memory_space<vmem>>, vector<1x8x128xf32>
    %302 = vector.shape_cast %301 : vector<1x8x128xf32> to vector<8x128xf32>
    %303 = vector.shape_cast %297 : vector<8x128xf32> to vector<1x8x128xf32>
    tpu.vector_store %arg14[%c1_105, %c0_106, %c0_107], %303 {strides = array<i32>} : memref<2x8x128xf32, #tpu.memory_space<vmem>>, vector<1x8x128xf32>,
    %c1_i32 = arith.constant 1 : i32
    %304 = arith.cmpi eq, %arg0, %c1_i32 : i32
    %305 = arith.extui %304 : i1 to i32
    %c0_i32_108 = arith.constant 0 : i32
    %306 = arith.cmpi ne, %305, %c0_i32_108 : i32
    scf.if %306 {
      %307 = arith.truncf %297 : vector<8x128xf32> to vector<8x128xbf16>
      %c0_109 = arith.constant 0 : index
      %c0_110 = arith.constant 0 : index
      %308 = vector.load %arg10[%c0_109, %c0_110] : memref<128x128xbf16, #tpu.memory_space<vmem>>, vector<128x128xbf16>
      %cst_111 = arith.constant dense<0.000000e+00> : vector<8x128xf32>
      %309 = tpu.matmul %307, %308, %cst_111 {dimension_numbers = #tpu.dot_dimension_numbers<[1], [0], [0], [1], [0, 0, 1, 1], [], []>} : vector<8x128xbf16>, vector<128x128xbf16>, vector<8x128xf32> -> vector<8x128xf32>
      %c0_112 = arith.constant 0 : index
      %c0_113 = arith.constant 0 : index
      %310 = vector.load %arg11[%c0_112, %c0_113] : memref<1x128xf32, #tpu.memory_space<vmem>>, vector<1x128xf32>
      %311 = vector.broadcast %310 : vector<1x128xf32> to vector<8x128xf32>
      %312 = arith.addf %309, %311 : vector<8x128xf32>
      %cst_114 = arith.constant dense<0xFF800000> : vector<8xf32>
      %313 = vector.multi_reduction <maximumf>, %312, %cst_114 [1] : vector<8x128xf32> to vector<8xf32>
      %314 = vector.shape_cast %313 : vector<8xf32> to vector<8x1xf32>
      %315 = vector.broadcast %314 : vector<8x1xf32> to vector<8x128xf32>
      %316 = arith.subf %312, %315 : vector<8x128xf32>
      %317 = math.exp %316 : vector<8x128xf32>
      %cst_115 = arith.constant dense<0.000000e+00> : vector<8xf32>
      %318 = vector.multi_reduction <add>, %317, %cst_115 [1] : vector<8x128xf32> to vector<8xf32>
      %319 = vector.shape_cast %318 : vector<8xf32> to vector<8x1xf32>
      %320 = math.log %319 : vector<8x1xf32>
      %321 = arith.addf %314, %320 : vector<8x1xf32>
      %322 = vector.broadcast %321 : vector<8x1xf32> to vector<8x128xf32>
      %323 = arith.subf %312, %322 : vector<8x128xf32>
      %c0_116 = arith.constant 0 : index
      %c0_117 = arith.constant 0 : index
      %324 = vector.load %arg13[%c0_116, %c0_117] : memref<8x128xf32, #tpu.memory_space<vmem>>, vector<8x128xf32>
      tpu.vector_store %arg13[%c0_116, %c0_117], %323 {strides = array<i32>} : memref<8x128xf32, #tpu.memory_space<vmem>>, vector<8x128xf32>,
      %325 = tpu.iota {dimensions = array<i32: 1>} : vector<8x128xi32>
      %326 = vector.broadcast %314 : vector<8x1xf32> to vector<8x128xf32>
      %327 = arith.cmpf oeq, %312, %326 : vector<8x128xf32>
      %c128_i32 = arith.constant 128 : i32
      %328 = vector.broadcast %c128_i32 : i32 to vector<8x128xi32>
      %329 = arith.select %327, %325, %328 : vector<8x128xi1>, vector<8x128xi32>
      %cst_118 = arith.constant dense<2147483647> : vector<8xi32>
      %330 = vector.multi_reduction <minsi>, %329, %cst_118 [1] : vector<8x128xi32> to vector<8xi32>
      %331 = vector.shape_cast %330 : vector<8xi32> to vector<8x1xi32>
      %c0_119 = arith.constant 0 : index
      %c0_120 = arith.constant 0 : index
      %332 = vector.load %arg12[%c0_119, %c0_120] : memref<8x1xi32, #tpu.memory_space<vmem>>, vector<8x1xi32>
      tpu.vector_store %arg12[%c0_119, %c0_120], %331 {strides = array<i32>} : memref<8x1xi32, #tpu.memory_space<vmem>>, vector<8x1xi32>,
    } else {
    }
    return
  }
  func.func @transform_0(%arg0: i32) -> (i32, i32) {
    %c0_i32 = arith.constant 0 : i32
    %c0_i32_0 = arith.constant 0 : i32
    return %arg0, %c0_i32 : i32, i32
  }
  func.func @transform_1(%arg0: i32) -> (i32, i32) {
    %c0_i32 = arith.constant 0 : i32
    %c0_i32_0 = arith.constant 0 : i32
    %c0_i32_1 = arith.constant 0 : i32
    return %c0_i32, %c0_i32_0 : i32, i32
  }
  func.func @transform_2(%arg0: i32) -> (i32, i32) {
    %c0_i32 = arith.constant 0 : i32
    %c0_i32_0 = arith.constant 0 : i32
    %c0_i32_1 = arith.constant 0 : i32
    return %c0_i32, %c0_i32_0 : i32, i32
  }
  func.func @transform_3(%arg0: i32) -> (i32, i32) {
    %c0_i32 = arith.constant 0 : i32
    %c0_i32_0 = arith.constant 0 : i32
    %c0_i32_1 = arith.constant 0 : i32
    return %c0_i32, %c0_i32_0 : i32, i32
  }
  func.func @transform_4(%arg0: i32) -> (i32, i32) {
    %c0_i32 = arith.constant 0 : i32
    %c0_i32_0 = arith.constant 0 : i32
    %c0_i32_1 = arith.constant 0 : i32
    return %c0_i32, %c0_i32_0 : i32, i32
  }
  func.func @transform_5(%arg0: i32) -> (i32, i32) {
    %c0_i32 = arith.constant 0 : i32
    %c0_i32_0 = arith.constant 0 : i32
    %c0_i32_1 = arith.constant 0 : i32
    return %c0_i32, %c0_i32_0 : i32, i32
  }
  func.func @transform_6(%arg0: i32) -> (i32, i32) {
    %c0_i32 = arith.constant 0 : i32
    %c0_i32_0 = arith.constant 0 : i32
    %c0_i32_1 = arith.constant 0 : i32
    return %c0_i32, %c0_i32_0 : i32, i32
  }
  func.func @transform_7(%arg0: i32) -> (i32, i32) {
    %c0_i32 = arith.constant 0 : i32
    %c0_i32_0 = arith.constant 0 : i32
    %c0_i32_1 = arith.constant 0 : i32
    return %c0_i32, %c0_i32_0 : i32, i32
  }
  func.func @transform_8(%arg0: i32) -> (i32, i32) {
    %c0_i32 = arith.constant 0 : i32
    %c0_i32_0 = arith.constant 0 : i32
    %c0_i32_1 = arith.constant 0 : i32
    return %c0_i32, %c0_i32_0 : i32, i32
  }
  func.func @transform_9(%arg0: i32) -> (i32, i32) {
    %c0_i32 = arith.constant 0 : i32
    %c0_i32_0 = arith.constant 0 : i32
    %c0_i32_1 = arith.constant 0 : i32
    return %c0_i32, %c0_i32_0 : i32, i32
  }
  func.func @transform_10(%arg0: i32) -> (i32, i32) {
    %c0_i32 = arith.constant 0 : i32
    %c0_i32_0 = arith.constant 0 : i32
    %c0_i32_1 = arith.constant 0 : i32
    return %c0_i32, %c0_i32_0 : i32, i32
  }
  func.func @transform_11(%arg0: i32) -> (i32, i32) {
    %c0_i32 = arith.constant 0 : i32
    %c0_i32_0 = arith.constant 0 : i32
    %c0_i32_1 = arith.constant 0 : i32
    return %c0_i32, %c0_i32_0 : i32, i32
  }
  func.func @transform_12(%arg0: i32) -> (i32, i32) {
    %c0_i32 = arith.constant 0 : i32
    %c0_i32_0 = arith.constant 0 : i32
    %c0_i32_1 = arith.constant 0 : i32
    return %c0_i32, %c0_i32_0 : i32, i32
  }
}

</mosaic_0001>

<llo_original>
// kernel: tpu_custom_call.1
$region0: #{tpu_custom_call.1}
  #allocation0 [shape = 'u32[]', space=smem, size = 0x4, offset = 0x4, fixed_abs, tag = 'smem constant byte address 0x4 - core index']
  #allocation1 [shape = 'u32[144,128]{1,0:T(1,128)}', space=vmem, size = 0x12000, scoped, tag = 'internal scratch']
  #allocation2 [shape = 'f32[2,8,128]{2,1,0:T(8,128)}', space=vmem, size = 0x2000, scoped, tag = 'scratch operand']
  #allocation3 [shape = 'f32[32,384]{1,0:T(8,128)}', space=vmem, size = 0xc000, scoped, tag = 'scratch operand']
  %s0 = inlined_call_operand.vmem [shape: bf16[64,16], index: 0, kind: input, shape index: {}]
  %s1 = inlined_call_operand.vmem [shape: bf16[16,384], index: 1, kind: input, shape index: {}]
  %s2 = inlined_call_operand.hbm [shape: bf16[128,384], index: 2, kind: input, shape index: {}]
  %s3 = inlined_call_operand.vmem [shape: f32[1,384], index: 3, kind: input, shape index: {}]
  %s4 = inlined_call_operand.vmem [shape: f32[1,128], index: 4, kind: input, shape index: {}]
  %s5 = inlined_call_operand.hbm [shape: bf16[128,384], index: 5, kind: input, shape index: {}]
  %s6 = inlined_call_operand.hbm [shape: bf16[128,384], index: 6, kind: input, shape index: {}]
  %s7 = inlined_call_operand.vmem [shape: f32[1,384], index: 7, kind: input, shape index: {}]
  %s8 = inlined_call_operand.vmem [shape: f32[1,128], index: 8, kind: input, shape index: {}]
  %s9 = inlined_call_operand.hbm [shape: bf16[128,128], index: 9, kind: input, shape index: {}]
  %s10 = inlined_call_operand.vmem [shape: f32[1,128], index: 10, kind: input, shape index: {}]
  %s11 = inlined_call_operand.vmem [shape: s32[8,1], index: 11, kind: output, shape index: {0}]
  %s12 = inlined_call_operand.hbm [shape: f32[8,128], index: 12, kind: output, shape index: {1}]
  %13 = xla_tuple %s11, %s12
  %s14 = sld [smem:[#allocation0]]
  $region109: #{tpu_custom_call.1} parent=0
    _
  %s16 = ssub.s32 1, %s14
  %s17 = scalar_select 0, %s16, %s14
  $region1: #{tpu_custom_call.1} parent=0
    #allocation4 [shape = 'u8[98304]{0}', space=vmem, size = 0x18000, scoped, tag = 'input window, operand 2, single buffered']
    #allocation5 [shape = 's32[2]{0}', space=sflag, size = 0x8, scoped, tag = 'scoped memory for tpu_custom_call.1']
    #allocation6 [shape = 's32[2]{0}', space=sflag, size = 0x8, scoped, tag = 'scoped memory for tpu_custom_call.1']
    #allocation7 [shape = 'u8[98304]{0}', space=vmem, size = 0x18000, scoped, tag = 'input window, operand 5, single buffered']
    #allocation8 [shape = 's32[1]{0}', space=sflag, size = 0x4, scoped, tag = 'scoped memory for tpu_custom_call.1']
    #allocation9 [shape = 'u8[98304]{0}', space=vmem, size = 0x18000, scoped, tag = 'input window, operand 6, single buffered']
    #allocation10 [shape = 'u8[32768]{0}', space=vmem, size = 0x8000, scoped, tag = 'input window, operand 9, single buffered']
    #allocation11 [shape = 's32[1]{0}', space=sflag, size = 0x4, scoped, tag = 'scoped memory for tpu_custom_call.1']
    #allocation12 [shape = 'u8[4096]{0}', space=vmem, size = 0x1000, scoped, tag = 'output window, operand 1, single buffered']
    %18 = vsyncpa [#allocation5], 0
    %19 = vsyncpa [#allocation8], 0
    %20 = vsyncpa [#allocation11], 0
    %21 = vsyncpa [#allocation6], 0
    loop: start=0, step=1, limit=4
    $region2: #{tpu_custom_call.1} parent=1 // loop_pre_header
      _
    $region3: #{tpu_custom_call.1} parent=1 // loop_header
      %s23 = sphi 0, %s27
      %p24 = scmp.ge.s32.totalorder %s23, 4
      %s33 = sphi 0, %s35
      %s36 = sphi 0, %s33
      %s37 = sphi 0, %s36
      %s53 = sphi 0, %s37
      %s57 = sphi 0, %s57
      %s59 = sphi 0, %s57
      %s60 = sphi 0, %s59
      %s74 = sphi 0, %s60
      %s78 = sphi 0, %s78
      %s80 = sphi 0, %s78
      %s81 = sphi 0, %s80
      %s95 = sphi 0, %s81
      %s99 = sphi 0, %s99
      %s101 = sphi 0, %s99
      %s102 = sphi 0, %s101
      %s116 = sphi 0, %s102
      %s120 = sphi 0, %s120
      %s122 = sphi 0, %s120
      %s123 = sphi 0, %s122
      %s137 = sphi 0, %s123
      %s141 = sphi 0, %s141
      %s143 = sphi 0, %s141
      %s144 = sphi 0, %s143
      %s158 = sphi 0, %s144
      %s162 = sphi 0, %s162
      %s164 = sphi 0, %s162
      %s165 = sphi 0, %s164
      %s179 = sphi 0, %s165
      %s183 = sphi 0, %s183
      %s185 = sphi 0, %s183
      %s186 = sphi 0, %s185
      %s200 = sphi 0, %s186
      %s204 = sphi 0, %s204
      %s206 = sphi 0, %s204
      %s207 = sphi 0, %s206
      %s221 = sphi 0, %s207
      %s225 = sphi 0, %s225
      %s227 = sphi 0, %s225
      %s228 = sphi 0, %s227
      %s242 = sphi 0, %s228
      %s246 = sphi 0, %s246
      %s248 = sphi 0, %s246
      %s249 = sphi 0, %s248
      %s263 = sphi 0, %s249
      %s267 = sphi 0, %s267
      %s269 = sphi 0, %s267
      %s270 = sphi 0, %s269
      %s284 = sphi 0, %s270
      %s288 = sphi 0, %s288
      %s290 = sphi 0, %s288
      %s291 = sphi 0, %s290
      %s305 = sphi 0, %s291
    $region4: #{tpu_custom_call.1} parent=1 // loop_header_branch
      %26 = sbr.rel (%p24) target = $region8
    $region5: #{tpu_custom_call.1} parent=1 // loop_body
      %s28 = ssub.s32 %s23, 1
      %s29 = ssub.s32 %s23, 2
      %s30 = sadd.s32 %s23, 1
      %s31 = ssub.s32 %s23, %s30
      %p32 = scmp.eq.s32.totalorder %s31, 0
      %s34 = sadd.s32 %s33, 1
      %s35 = scalar_select %p32, %s33, %s34
      %p38 = pneg %p32
      %p39 = scmp.eq.s32.totalorder %s23, 1
      %p40 = por %p38, %p39
      %p41 = scmp.ne.s32.totalorder %s33, %s36
      %p42 = scmp.eq.s32.totalorder %s23, 0
      %p43 = por %p41, %p42
      %p44 = scmp.ne.s32.totalorder %s33, %s36
      %p45 = scmp.eq.s32.totalorder %s28, 1
      %p46 = por %p44, %p45
      %p47 = scmp.ne.s32.totalorder %s36, %s37
      %p48 = scmp.eq.s32.totalorder %s28, 0
      %p49 = por %p47, %p48
      %p50 = scmp.ne.s32.totalorder %s36, %s37
      %p51 = scmp.eq.s32.totalorder %s29, 1
      %p52 = por %p50, %p51
      %p54 = scmp.ne.s32.totalorder %s37, %s53
      %p55 = scmp.eq.s32.totalorder %s29, 0
      %p56 = por %p54, %p55
      %s58 = sadd.s32 %s57, 1
      %p61 = scmp.eq.s32.totalorder %s23, 1
      %p62 = scmp.ne.s32.totalorder %s57, %s59
      %p63 = scmp.eq.s32.totalorder %s23, 0
      %p64 = por %p62, %p63
      %p65 = scmp.ne.s32.totalorder %s57, %s59
      %p66 = scmp.eq.s32.totalorder %s28, 1
      %p67 = por %p65, %p66
      %p68 = scmp.ne.s32.totalorder %s59, %s60
      %p69 = scmp.eq.s32.totalorder %s28, 0
      %p70 = por %p68, %p69
      %p71 = scmp.ne.s32.totalorder %s59, %s60
      %p72 = scmp.eq.s32.totalorder %s29, 1
      %p73 = por %p71, %p72
      %p75 = scmp.ne.s32.totalorder %s60, %s74
      %p76 = scmp.eq.s32.totalorder %s29, 0
      %p77 = por %p75, %p76
      %s79 = sadd.s32 %s78, 1
      %p82 = scmp.eq.s32.totalorder %s23, 1
      %p83 = scmp.ne.s32.totalorder %s78, %s80
      %p84 = scmp.eq.s32.totalorder %s23, 0
      %p85 = por %p83, %p84
      %p86 = scmp.ne.s32.totalorder %s78, %s80
      %p87 = scmp.eq.s32.totalorder %s28, 1
      %p88 = por %p86, %p87
      %p89 = scmp.ne.s32.totalorder %s80, %s81
      %p90 = scmp.eq.s32.totalorder %s28, 0
      %p91 = por %p89, %p90
      %p92 = scmp.ne.s32.totalorder %s80, %s81
      %p93 = scmp.eq.s32.totalorder %s29, 1
      %p94 = por %p92, %p93
      %p96 = scmp.ne.s32.totalorder %s81, %s95
      %p97 = scmp.eq.s32.totalorder %s29, 0
      %p98 = por %p96, %p97
      %s100 = sadd.s32 %s99, 1
      %p103 = scmp.eq.s32.totalorder %s23, 1
      %p104 = scmp.ne.s32.totalorder %s99, %s101
      %p105 = scmp.eq.s32.totalorder %s23, 0
      %p106 = por %p104, %p105
      %p107 = scmp.ne.s32.totalorder %s99, %s101
      %p108 = scmp.eq.s32.totalorder %s28, 1
      %p109 = por %p107, %p108
      %p110 = scmp.ne.s32.totalorder %s101, %s102
      %p111 = scmp.eq.s32.totalorder %s28, 0
      %p112 = por %p110, %p111
      %p113 = scmp.ne.s32.totalorder %s101, %s102
      %p114 = scmp.eq.s32.totalorder %s29, 1
      %p115 = por %p113, %p114
      %p117 = scmp.ne.s32.totalorder %s102, %s116
      %p118 = scmp.eq.s32.totalorder %s29, 0
      %p119 = por %p117, %p118
      %s121 = sadd.s32 %s120, 1
      %p124 = scmp.eq.s32.totalorder %s23, 1
      %p125 = scmp.ne.s32.totalorder %s120, %s122
      %p126 = scmp.eq.s32.totalorder %s23, 0
      %p127 = por %p125, %p126
      %p128 = scmp.ne.s32.totalorder %s120, %s122
      %p129 = scmp.eq.s32.totalorder %s28, 1
      %p130 = por %p128, %p129
      %p131 = scmp.ne.s32.totalorder %s122, %s123
      %p132 = scmp.eq.s32.totalorder %s28, 0
      %p133 = por %p131, %p132
      %p134 = scmp.ne.s32.totalorder %s122, %s123
      %p135 = scmp.eq.s32.totalorder %s29, 1
      %p136 = por %p134, %p135
      %p138 = scmp.ne.s32.totalorder %s123, %s137
      %p139 = scmp.eq.s32.totalorder %s29, 0
      %p140 = por %p138, %p139
      %s142 = sadd.s32 %s141, 1
      %p145 = scmp.eq.s32.totalorder %s23, 1
      %p146 = scmp.ne.s32.totalorder %s141, %s143
      %p147 = scmp.eq.s32.totalorder %s23, 0
      %p148 = por %p146, %p147
      %p149 = scmp.ne.s32.totalorder %s141, %s143
      %p150 = scmp.eq.s32.totalorder %s28, 1
      %p151 = por %p149, %p150
      %p152 = scmp.ne.s32.totalorder %s143, %s144
      %p153 = scmp.eq.s32.totalorder %s28, 0
      %p154 = por %p152, %p153
      %p155 = scmp.ne.s32.totalorder %s143, %s144
      %p156 = scmp.eq.s32.totalorder %s29, 1
      %p157 = por %p155, %p156
      %p159 = scmp.ne.s32.totalorder %s144, %s158
      %p160 = scmp.eq.s32.totalorder %s29, 0
      %p161 = por %p159, %p160
      %s163 = sadd.s32 %s162, 1
      %p166 = scmp.eq.s32.totalorder %s23, 1
      %p167 = scmp.ne.s32.totalorder %s162, %s164
      %p168 = scmp.eq.s32.totalorder %s23, 0
      %p169 = por %p167, %p168
      %p170 = scmp.ne.s32.totalorder %s162, %s164
      %p171 = scmp.eq.s32.totalorder %s28, 1
      %p172 = por %p170, %p171
      %p173 = scmp.ne.s32.totalorder %s164, %s165
      %p174 = scmp.eq.s32.totalorder %s28, 0
      %p175 = por %p173, %p174
      %p176 = scmp.ne.s32.totalorder %s164, %s165
      %p177 = scmp.eq.s32.totalorder %s29, 1
      %p178 = por %p176, %p177
      %p180 = scmp.ne.s32.totalorder %s165, %s179
      %p181 = scmp.eq.s32.totalorder %s29, 0
      %p182 = por %p180, %p181
      %s184 = sadd.s32 %s183, 1
      %p187 = scmp.eq.s32.totalorder %s23, 1
      %p188 = scmp.ne.s32.totalorder %s183, %s185
      %p189 = scmp.eq.s32.totalorder %s23, 0
      %p190 = por %p188, %p189
      %p191 = scmp.ne.s32.totalorder %s183, %s185
      %p192 = scmp.eq.s32.totalorder %s28, 1
      %p193 = por %p191, %p192
      %p194 = scmp.ne.s32.totalorder %s185, %s186
      %p195 = scmp.eq.s32.totalorder %s28, 0
      %p196 = por %p194, %p195
      %p197 = scmp.ne.s32.totalorder %s185, %s186
      %p198 = scmp.eq.s32.totalorder %s29, 1
      %p199 = por %p197, %p198
      %p201 = scmp.ne.s32.totalorder %s186, %s200
      %p202 = scmp.eq.s32.totalorder %s29, 0
      %p203 = por %p201, %p202
      %s205 = sadd.s32 %s204, 1
      %p208 = scmp.eq.s32.totalorder %s23, 1
      %p209 = scmp.ne.s32.totalorder %s204, %s206
      %p210 = scmp.eq.s32.totalorder %s23, 0
      %p211 = por %p209, %p210
      %p212 = scmp.ne.s32.totalorder %s204, %s206
      %p213 = scmp.eq.s32.totalorder %s28, 1
      %p214 = por %p212, %p213
      %p215 = scmp.ne.s32.totalorder %s206, %s207
      %p216 = scmp.eq.s32.totalorder %s28, 0
      %p217 = por %p215, %p216
      %p218 = scmp.ne.s32.totalorder %s206, %s207
      %p219 = scmp.eq.s32.totalorder %s29, 1
      %p220 = por %p218, %p219
      %p222 = scmp.ne.s32.totalorder %s207, %s221
      %p223 = scmp.eq.s32.totalorder %s29, 0
      %p224 = por %p222, %p223
      %s226 = sadd.s32 %s225, 1
      %p229 = scmp.eq.s32.totalorder %s23, 1
      %p230 = scmp.ne.s32.totalorder %s225, %s227
      %p231 = scmp.eq.s32.totalorder %s23, 0
      %p232 = por %p230, %p231
      %p233 = scmp.ne.s32.totalorder %s225, %s227
      %p234 = scmp.eq.s32.totalorder %s28, 1
      %p235 = por %p233, %p234
      %p236 = scmp.ne.s32.totalorder %s227, %s228
      %p237 = scmp.eq.s32.totalorder %s28, 0
      %p238 = por %p236, %p237
      %p239 = scmp.ne.s32.totalorder %s227, %s228
      %p240 = scmp.eq.s32.totalorder %s29, 1
      %p241 = por %p239, %p240
      %p243 = scmp.ne.s32.totalorder %s228, %s242
      %p244 = scmp.eq.s32.totalorder %s29, 0
      %p245 = por %p243, %p244
      %s247 = sadd.s32 %s246, 1
      %p250 = scmp.eq.s32.totalorder %s23, 1
      %p251 = scmp.ne.s32.totalorder %s246, %s248
      %p252 = scmp.eq.s32.totalorder %s23, 0
      %p253 = por %p251, %p252
      %p254 = scmp.ne.s32.totalorder %s246, %s248
      %p255 = scmp.eq.s32.totalorder %s28, 1
      %p256 = por %p254, %p255
      %p257 = scmp.ne.s32.totalorder %s248, %s249
      %p258 = scmp.eq.s32.totalorder %s28, 0
      %p259 = por %p257, %p258
      %p260 = scmp.ne.s32.totalorder %s248, %s249
      %p261 = scmp.eq.s32.totalorder %s29, 1
      %p262 = por %p260, %p261
      %p264 = scmp.ne.s32.totalorder %s249, %s263
      %p265 = scmp.eq.s32.totalorder %s29, 0
      %p266 = por %p264, %p265
      %s268 = sadd.s32 %s267, 1
      %p271 = scmp.eq.s32.totalorder %s23, 1
      %p272 = scmp.ne.s32.totalorder %s267, %s269
      %p273 = scmp.eq.s32.totalorder %s23, 0
      %p274 = por %p272, %p273
      %p275 = scmp.ne.s32.totalorder %s267, %s269
      %p276 = scmp.eq.s32.totalorder %s28, 1
      %p277 = por %p275, %p276
      %p278 = scmp.ne.s32.totalorder %s269, %s270
      %p279 = scmp.eq.s32.totalorder %s28, 0
      %p280 = por %p278, %p279
      %p281 = scmp.ne.s32.totalorder %s269, %s270
      %p282 = scmp.eq.s32.totalorder %s29, 1
      %p283 = por %p281, %p282
      %p285 = scmp.ne.s32.totalorder %s270, %s284
      %p286 = scmp.eq.s32.totalorder %s29, 0
      %p287 = por %p285, %p286
      %s289 = sadd.s32 %s288, 1
      %p292 = scmp.eq.s32.totalorder %s23, 1
      %p293 = scmp.ne.s32.totalorder %s288, %s290
      %p294 = scmp.eq.s32.totalorder %s23, 0
      %p295 = por %p293, %p294
      %p296 = scmp.ne.s32.totalorder %s288, %s290
      %p297 = scmp.eq.s32.totalorder %s28, 1
      %p298 = por %p296, %p297
      %p299 = scmp.ne.s32.totalorder %s290, %s291
      %p300 = scmp.eq.s32.totalorder %s28, 0
      %p301 = por %p299, %p300
      %p302 = scmp.ne.s32.totalorder %s290, %s291
      %p303 = scmp.eq.s32.totalorder %s29, 1
      %p304 = por %p302, %p303
      %p306 = scmp.ne.s32.totalorder %s291, %s305
      %p307 = scmp.eq.s32.totalorder %s29, 0
      %p308 = por %p306, %p307
      %p309 = scmp.le.s32.totalorder 1, %s23
      %p310 = scmp.lt.s32.totalorder %s23, 3
      %p311 = pnand %p309, %p310
      %p312 = pneg %p311
      // Predicated region
      $region9: #{tpu_custom_call.1} parent=5 // pred_check
        _
      $region10: #{tpu_custom_call.1} parent=5 // pred_check_branch
        %314 = sbr.rel (%p311) target = $region12
      $region11: #{tpu_custom_call.1} parent=5 // pred_region
        %s315 = ssub.s32 %s23, 1
        // Predicated region
        $region13: #{tpu_custom_call.1} parent=11 // pred_check
          %p316 = pneg %p70
        $region14: #{tpu_custom_call.1} parent=11 // pred_check_branch
          %318 = sbr.rel (%p316) target = $region16
        $region15: #{tpu_custom_call.1} parent=11 // pred_region
          _
        $region16: #{tpu_custom_call.1} parent=11 // pred_fallthru
          _
        // Predicated region
        $region17: #{tpu_custom_call.1} parent=11 // pred_check
          %p319 = pneg %p91
        $region18: #{tpu_custom_call.1} parent=11 // pred_check_branch
          %321 = sbr.rel (%p319) target = $region20
        $region19: #{tpu_custom_call.1} parent=11 // pred_region
          %s323 = ssub.s32 3072, 3072
          %324 = vsyncadd [#allocation5], %s323
          %s325 = sshll.u32 [#allocation4], 4
          %s326 = int_to_ptr.vmem [resolvable:$true] %s325
          %331 = dma.hbm_to_vmem [thread:$0]  %s2, 3072, %s326, [#allocation5], 192, 192, 12
        $region20: #{tpu_custom_call.1} parent=11 // pred_fallthru
          _
        // Predicated region
        $region21: #{tpu_custom_call.1} parent=11 // pred_check
          %p332 = pneg %p112
        $region22: #{tpu_custom_call.1} parent=11 // pred_check_branch
          %334 = sbr.rel (%p332) target = $region24
        $region23: #{tpu_custom_call.1} parent=11 // pred_region
          _
        $region24: #{tpu_custom_call.1} parent=11 // pred_fallthru
          _
        // Predicated region
        $region25: #{tpu_custom_call.1} parent=11 // pred_check
          %p335 = pneg %p133
        $region26: #{tpu_custom_call.1} parent=11 // pred_check_branch
          %337 = sbr.rel (%p335) target = $region28
        $region27: #{tpu_custom_call.1} parent=11 // pred_region
          _
        $region28: #{tpu_custom_call.1} parent=11 // pred_fallthru
          _
        // Predicated region
        $region29: #{tpu_custom_call.1} parent=11 // pred_check
          %p338 = pneg %p154
        $region30: #{tpu_custom_call.1} parent=11 // pred_check_branch
          %340 = sbr.rel (%p338) target = $region32
        $region31: #{tpu_custom_call.1} parent=11 // pred_region
          %s342 = ssub.s32 3072, 3072
          %343 = vsyncadd [#allocation8], %s342
          %s344 = sshll.u32 [#allocation7], 4
          %s345 = int_to_ptr.vmem [resolvable:$true] %s344
          %350 = dma.hbm_to_vmem [thread:$0]  %s5, 3072, %s345, [#allocation8], 192, 192, 12
        $region32: #{tpu_custom_call.1} parent=11 // pred_fallthru
          _
        // Predicated region
        $region33: #{tpu_custom_call.1} parent=11 // pred_check
          %p351 = pneg %p175
        $region34: #{tpu_custom_call.1} parent=11 // pred_check_branch
          %353 = sbr.rel (%p351) target = $region36
        $region35: #{tpu_custom_call.1} parent=11 // pred_region
          %s355 = ssub.s32 3072, 3072
          %356 = vsyncadd [#allocation8], %s355
          %s357 = sshll.u32 [#allocation9], 4
          %s358 = int_to_ptr.vmem [resolvable:$true] %s357
          %363 = dma.hbm_to_vmem [thread:$0]  %s6, 3072, %s358, [#allocation8], 192, 192, 12
        $region36: #{tpu_custom_call.1} parent=11 // pred_fallthru
          _
        // Predicated region
        $region37: #{tpu_custom_call.1} parent=11 // pred_check
          %p364 = pneg %p196
        $region38: #{tpu_custom_call.1} parent=11 // pred_check_branch
          %366 = sbr.rel (%p364) target = $region40
        $region39: #{tpu_custom_call.1} parent=11 // pred_region
          _
        $region40: #{tpu_custom_call.1} parent=11 // pred_fallthru
          _
        // Predicated region
        $region41: #{tpu_custom_call.1} parent=11 // pred_check
          %p367 = pneg %p217
        $region42: #{tpu_custom_call.1} parent=11 // pred_check_branch
          %369 = sbr.rel (%p367) target = $region44
        $region43: #{tpu_custom_call.1} parent=11 // pred_region
          _
        $region44: #{tpu_custom_call.1} parent=11 // pred_fallthru
          _
        // Predicated region
        $region45: #{tpu_custom_call.1} parent=11 // pred_check
          %p370 = pneg %p238
        $region46: #{tpu_custom_call.1} parent=11 // pred_check_branch
          %372 = sbr.rel (%p370) target = $region48
        $region47: #{tpu_custom_call.1} parent=11 // pred_region
          %s374 = ssub.s32 1024, 1024
          %375 = vsyncadd [#allocation11], %s374
          %s376 = sshll.u32 [#allocation10], 4
          %s377 = int_to_ptr.vmem [resolvable:$true] %s376
          %382 = dma.hbm_to_vmem [thread:$0]  %s9, 1024, %s377, [#allocation11], 64, 64, 4
        $region48: #{tpu_custom_call.1} parent=11 // pred_fallthru
          _
        // Predicated region
        $region49: #{tpu_custom_call.1} parent=11 // pred_check
          %p383 = pneg %p259
        $region50: #{tpu_custom_call.1} parent=11 // pred_check_branch
          %385 = sbr.rel (%p383) target = $region52
        $region51: #{tpu_custom_call.1} parent=11 // pred_region
          _
        $region52: #{tpu_custom_call.1} parent=11 // pred_fallthru
          _
      $region12: #{tpu_custom_call.1} parent=5 // pred_fallthru
        _
      %p386 = scmp.lt.s32.totalorder %s23, 2
      // Predicated region
      $region53: #{tpu_custom_call.1} parent=5 // pred_check
        %p387 = pneg %p386
      $region54: #{tpu_custom_call.1} parent=5 // pred_check_branch
        %389 = sbr.rel (%p387) target = $region56
      $region55: #{tpu_custom_call.1} parent=5 // pred_region
        // Predicated region
        $region57: #{tpu_custom_call.1} parent=55 // pred_check
          %p390 = pneg %p43
        $region58: #{tpu_custom_call.1} parent=55 // pred_check_branch
          %392 = sbr.rel (%p390) target = $region60
        $region59: #{tpu_custom_call.1} parent=55 // pred_region
          %s393 = smul.u32 4, %s23
          %p394 = scmp.lt.s32.totalorder %s393, 7
          %s395 = scalar_select %p394, %s393, 7
          %s396 = smul.addr %s395, 4
          %s397 = scalar_lea.vmem %s0, %s396
          %s398 = smul.u32 4, %s23
        $region60: #{tpu_custom_call.1} parent=55 // pred_fallthru
          _
      $region56: #{tpu_custom_call.1} parent=5 // pred_fallthru
        _
      %p399 = scmp.le.s32.totalorder 1, %s23
      %p400 = scmp.lt.s32.totalorder %s23, 3
      %p401 = pnand %p399, %p400
      %p402 = pneg %p401
      // Predicated region
      $region61: #{tpu_custom_call.1} parent=5 // pred_check
        _
      $region62: #{tpu_custom_call.1} parent=5 // pred_check_branch
        %404 = sbr.rel (%p401) target = $region64
      $region63: #{tpu_custom_call.1} parent=5 // pred_region
        %s405 = ssub.s32 %s23, 1
        // Predicated region
        $region65: #{tpu_custom_call.1} parent=63 // pred_check
          %p406 = pneg %p91
        $region66: #{tpu_custom_call.1} parent=63 // pred_check_branch
          %408 = sbr.rel (%p406) target = $region68
        $region67: #{tpu_custom_call.1} parent=63 // pred_region
          %409 = dma.done [#allocation5], 3072
        $region68: #{tpu_custom_call.1} parent=63 // pred_fallthru
          _
        // Predicated region
        $region69: #{tpu_custom_call.1} parent=63 // pred_check
          %p410 = pneg %p154
        $region70: #{tpu_custom_call.1} parent=63 // pred_check_branch
          %412 = sbr.rel (%p410) target = $region72
        $region71: #{tpu_custom_call.1} parent=63 // pred_region
          %413 = dma.done [#allocation8], 3072
        $region72: #{tpu_custom_call.1} parent=63 // pred_fallthru
          _
        // Predicated region
        $region73: #{tpu_custom_call.1} parent=63 // pred_check
          %p414 = pneg %p175
        $region74: #{tpu_custom_call.1} parent=63 // pred_check_branch
          %416 = sbr.rel (%p414) target = $region76
        $region75: #{tpu_custom_call.1} parent=63 // pred_region
          %417 = dma.done [#allocation8], 3072
        $region76: #{tpu_custom_call.1} parent=63 // pred_fallthru
          _
        // Predicated region
        $region77: #{tpu_custom_call.1} parent=63 // pred_check
          %p418 = pneg %p238
        $region78: #{tpu_custom_call.1} parent=63 // pred_check_branch
          %420 = sbr.rel (%p418) target = $region80
        $region79: #{tpu_custom_call.1} parent=63 // pred_region
          %421 = dma.done [#allocation11], 1024
        $region80: #{tpu_custom_call.1} parent=63 // pred_fallthru
          _
        %s422 = smul.u32 4, %s28
        %p423 = scmp.lt.s32.totalorder %s422, 7
        %s424 = scalar_select %p423, %s422, 7
        %s425 = smul.addr %s424, 4
        %s426 = scalar_lea.vmem %s0, %s425
        %p427 = pneg %p49
        %p428 = pneg %p46
        %p429 = pneg %p70
        %p430 = pneg %p67
        %p431 = pneg %p91
        %p432 = pneg %p88
        %p433 = pneg %p112
        %p434 = pneg %p109
        %p435 = pneg %p133
        %p436 = pneg %p130
        %p437 = pneg %p154
        %p438 = pneg %p151
        %p439 = pneg %p175
        %p440 = pneg %p172
        %p441 = pneg %p196
        %p442 = pneg %p193
        %p443 = pneg %p217
        %p444 = pneg %p214
        %p445 = pneg %p238
        %p446 = pneg %p235
        %p447 = pneg %p259
        %p448 = pneg %p256
        %p449 = pneg %p280
        %p450 = pneg %p277
        %p451 = pneg %p301
        %p452 = pneg %p298
        %s453 = smul.u32 4, %s28
        %p454 = scmp.lt.s32.totalorder %s453, 7
        %s455 = scalar_select %p454, %s453, 7
        %s456 = smul.addr %s455, 4
        %s457 = scalar_lea.vmem %s0, %s456
        %s458 = smul.u32 4, %s28
        %p460 = scmp.eq.s32.totalorder %s28, 0
        // Predicated region
        $region81: #{tpu_custom_call.1} parent=63 // pred_check
          %p461 = pneg %p460
        $region82: #{tpu_custom_call.1} parent=63 // pred_check_branch
          %463 = sbr.rel (%p461) target = $region84
        $region83: #{tpu_custom_call.1} parent=63 // pred_region
          %464 = vst [vmem:[#allocation2] sm:$0xff] 0.0
          %465 = vst [vmem:[#allocation2 + $0x8] sm:$0xff] 0.0
        $region84: #{tpu_custom_call.1} parent=63 // pred_fallthru
          _
        %v466 = vld [vmem:[%s457] sm:$0xf]
        %v467 = vld [vmem:[%s457 + $0x4] sm:$0xf]
        %v468 = vld [vmem:[%s457 + $0x8] sm:$0xf]
        %v469 = vld [vmem:[%s457 + $0xc] sm:$0xf]
        %v470 = vld [vmem:[%s1] sm:$0xff]
        %v471 = vld [vmem:[%s1 + $0x8] sm:$0xf]
        %v472 = vld [vmem:[%s1 + $0xc] sm:$0xff]
        %v473 = vld [vmem:[%s1 + $0x14] sm:$0xf]
        %v474 = vld [vmem:[%s3] sm:$0x7]
        %v476 = vlaneseq
        %v477 = vshrl.u32 %v476, 7
        %v478 = vsub.s32 0, %v477
        %v479 = vrot.slane %v474, %v478
        %v480 = vlaneseq
        %v481 = vshrl.u32 %v480, 7
        %v482 = vsub.s32 1, %v481
        %v483 = vrot.slane %v474, %v482
        %v484 = vlaneseq
        %v485 = vshrl.u32 %v484, 7
        %v486 = vsub.s32 2, %v485
        %v487 = vrot.slane %v474, %v486
        %v495 = vunpack.c.l.b16 %v466
        %v496 = vunpack.c.l.b16 %v467
        %v497 = vunpack.c.l.b16 %v468
        %v498 = vunpack.c.l.b16 %v469
        %v499 = vpack.c.b16 %v496, %v495
        %v500 = vpack.c.b16 %v498, %v497
        %v505 = vunpack.c.l.b16 %v470
        %v506 = vunpack.c.h.b16 %v470
        %v507 = vunpack.c.l.b16 %v471
        %v508 = vunpack.c.l.b16 %v472
        %v509 = vunpack.c.h.b16 %v472
        %v510 = vunpack.c.l.b16 %v473
        %v511 = vpack.c.b16 %v508, %v505
        %v512 = vpack.c.b16 %v509, %v506
        %v513 = vpack.c.b16 %v510, %v507
        %vm517 = vcmask 130048
        %v519 = vsel %vm517, %v499, 0
        %v522 = vsel %vm517, %v500, 0
        %524 = vmatprep.subr.bf16.mxu0 0
        %525 = vmatpush1.bf16.msra.mxu0 0
        %526 = vmatprep.subr.bf16.mxu0 0
        %527 = vmatpush1.bf16.msra.mxu0 0
        %528 = vmatprep.subr.bf16.mxu0 0
        %529 = vmatpush1.bf16.msra.mxu0 0
        %530 = vmatprep.subr.bf16.mxu0 0
        %531 = vmatpush1.bf16.msra.mxu0 0
        %532 = vmatprep.subr.bf16.mxu0 0
        %533 = vmatpush1.bf16.msra.mxu0 0
        %534 = vmatprep.subr.bf16.mxu0 0
        %535 = vmatpush1.bf16.msra.mxu0 0
        %536 = vmatprep.subr.bf16.mxu0 0
        %537 = vmatpush1.bf16.msra.mxu0 0
        %538 = vmatprep.subr.bf16.mxu0 %v512
        %539 = vmatpush1.bf16.msra.mxu0 %v511
        %540 = vmatprep.subr.bf16.mxu0 0
        %541 = vmatpush2.bf16.msra.mxu0 0
        %542 = vmatprep.subr.bf16.mxu0 0
        %543 = vmatpush2.bf16.msra.mxu0 0
        %544 = vmatprep.subr.bf16.mxu0 0
        %545 = vmatpush2.bf16.msra.mxu0 0
        %546 = vmatprep.subr.bf16.mxu0 0
        %547 = vmatpush2.bf16.msra.mxu0 0
        %548 = vmatprep.subr.bf16.mxu0 0
        %549 = vmatpush2.bf16.msra.mxu0 0
        %550 = vmatprep.subr.bf16.mxu0 0
        %551 = vmatpush2.bf16.msra.mxu0 0
        %552 = vmatprep.subr.bf16.mxu0 0
        %553 = vmatpush2.bf16.msra.mxu0 0
        %554 = vmatprep.subr.bf16.mxu0 0
        %555 = vmatpush2.bf16.msra.mxu0 0
        %556 = vmatprep.mubr.bf16.mxu0 0
        %557 = vmatmul.mubr.bf16.gmra.mxu0 %v519
        %v558 = vpop.f32.mrf.mxu0
        %v559 = vadd.f32 %v479, %v558
        %v560 = vpop.f32.mrf.mxu0
        %v561 = vadd.f32 %v483, %v560
        %v562 = vpop.f32.mrf.mxu0
        %v563 = vadd.f32 %v479, %v562
        %v564 = vpop.f32.mrf.mxu0
        %v565 = vadd.f32 %v483, %v564
        %566 = vmatprep.mubr.bf16.mxu0 0
        %567 = vmatmul.mubr.bf16.gmra.mxu0 %v522
        %v568 = vpop.f32.mrf.mxu0
        %v569 = vadd.f32 %v479, %v568
        %v570 = vpop.f32.mrf.mxu0
        %v571 = vadd.f32 %v483, %v570
        %v572 = vpop.f32.mrf.mxu0
        %v573 = vadd.f32 %v479, %v572
        %v574 = vpop.f32.mrf.mxu0
        %v575 = vadd.f32 %v483, %v574
        %576 = vdwg.mxu0
        %577 = vmatprep.subr.bf16.mxu0 0
        %578 = vmatpush1.bf16.msra.mxu0 0
        %579 = vmatprep.subr.bf16.mxu0 0
        %580 = vmatpush1.bf16.msra.mxu0 0
        %581 = vmatprep.subr.bf16.mxu0 0
        %582 = vmatpush1.bf16.msra.mxu0 0
        %583 = vmatprep.subr.bf16.mxu0 0
        %584 = vmatpush1.bf16.msra.mxu0 0
        %585 = vmatprep.subr.bf16.mxu0 0
        %586 = vmatpush1.bf16.msra.mxu0 0
        %587 = vmatprep.subr.bf16.mxu0 0
        %588 = vmatpush1.bf16.msra.mxu0 0
        %589 = vmatprep.subr.bf16.mxu0 0
        %590 = vmatpush1.bf16.msra.mxu0 0
        %591 = vmatprep.subr.bf16.mxu0 0
        %592 = vmatpush1.bf16.msra.mxu0 %v513
        %593 = vmatprep.subr.bf16.mxu0 0
        %594 = vmatpush2.bf16.msra.mxu0 0
        %595 = vmatprep.subr.bf16.mxu0 0
        %596 = vmatpush2.bf16.msra.mxu0 0
        %597 = vmatprep.subr.bf16.mxu0 0
        %598 = vmatpush2.bf16.msra.mxu0 0
        %599 = vmatprep.subr.bf16.mxu0 0
        %600 = vmatpush2.bf16.msra.mxu0 0
        %601 = vmatprep.subr.bf16.mxu0 0
        %602 = vmatpush2.bf16.msra.mxu0 0
        %603 = vmatprep.subr.bf16.mxu0 0
        %604 = vmatpush2.bf16.msra.mxu0 0
        %605 = vmatprep.subr.bf16.mxu0 0
        %606 = vmatpush2.bf16.msra.mxu0 0
        %607 = vmatprep.subr.bf16.mxu0 0
        %608 = vmatpush2.bf16.msra.mxu0 0
        %609 = vmatprep.mubr.bf16.mxu0 0
        %610 = vmatmul.mubr.bf16.gmra.mxu0 %v519
        %v611 = vpop.f32.mrf.mxu0
        %v612 = vadd.f32 %v487, %v611
        %v613 = vpop.f32.mrf.mxu0
        %v614 = vpop.f32.mrf.mxu0
        %v615 = vadd.f32 %v487, %v614
        %v616 = vpop.f32.mrf.mxu0
        %617 = vmatprep.mubr.bf16.mxu0 0
        %618 = vmatmul.mubr.bf16.gmra.mxu0 %v522
        %v619 = vpop.f32.mrf.mxu0
        %v620 = vadd.f32 %v487, %v619
        %v621 = vpop.f32.mrf.mxu0
        %v622 = vpop.f32.mrf.mxu0
        %v623 = vadd.f32 %v487, %v622
        %v624 = vpop.f32.mrf.mxu0
        %625 = vdwg.mxu0
        %626 = vst [vmem:[#allocation3] sm:$0xff] %v559
        %627 = vst [vmem:[#allocation3 + $0x8] sm:$0xff] %v561
        %628 = vst [vmem:[#allocation3 + $0x10] sm:$0xff] %v612
        %629 = vst [vmem:[#allocation3 + $0x18] sm:$0xff] %v563
        %630 = vst [vmem:[#allocation3 + $0x20] sm:$0xff] %v565
        %631 = vst [vmem:[#allocation3 + $0x28] sm:$0xff] %v615
        %632 = vst [vmem:[#allocation3 + $0x30] sm:$0xff] %v569
        %633 = vst [vmem:[#allocation3 + $0x38] sm:$0xff] %v571
        %634 = vst [vmem:[#allocation3 + $0x40] sm:$0xff] %v620
        %635 = vst [vmem:[#allocation3 + $0x48] sm:$0xff] %v573
        %636 = vst [vmem:[#allocation3 + $0x50] sm:$0xff] %v575
        %637 = vst [vmem:[#allocation3 + $0x58] sm:$0xff] %v623
        %v638 = vld [vmem:[#allocation2] sm:$0xff]
        %s639 = scalar_lea.vmem [#allocation2], 8
        %v640 = vld [vmem:[%s639] sm:$0xff]
        %v641 = vld [vmem:[#allocation3] sm:$0xff]
        %v642 = vld [vmem:[#allocation3 + $0x8] sm:$0xff]
        %v643 = vld [vmem:[#allocation3 + $0x10] sm:$0xff]
        %v644 = vpack.c.bf16 %v638, %v638
        %v645 = vld [vmem:[#allocation4] sm:$0xff]
        %v646 = vld [vmem:[#allocation4 + $0x8] sm:$0xf]
        %v647 = vld [vmem:[#allocation4 + $0xc] sm:$0xff]
        %v648 = vld [vmem:[#allocation4 + $0x14] sm:$0xf]
        %v649 = vld [vmem:[#allocation4 + $0x18] sm:$0xff]
        %v650 = vld [vmem:[#allocation4 + $0x20] sm:$0xf]
        %v651 = vld [vmem:[#allocation4 + $0x24] sm:$0xff]
        %v652 = vld [vmem:[#allocation4 + $0x2c] sm:$0xf]
        %v653 = vld [vmem:[#allocation4 + $0x30] sm:$0xff]
        %v654 = vld [vmem:[#allocation4 + $0x38] sm:$0xf]
        %v655 = vld [vmem:[#allocation4 + $0x3c] sm:$0xff]
        %v656 = vld [vmem:[#allocation4 + $0x44] sm:$0xf]
        %v657 = vld [vmem:[#allocation4 + $0x48] sm:$0xff]
        %v658 = vld [vmem:[#allocation4 + $0x50] sm:$0xf]
        %v659 = vld [vmem:[#allocation4 + $0x54] sm:$0xff]
        %v660 = vld [vmem:[#allocation4 + $0x5c] sm:$0xf]
        %v661 = vld [vmem:[#allocation4 + $0x60] sm:$0xff]
        %v662 = vld [vmem:[#allocation4 + $0x68] sm:$0xf]
        %v663 = vld [vmem:[#allocation4 + $0x6c] sm:$0xff]
        %v664 = vld [vmem:[#allocation4 + $0x74] sm:$0xf]
        %v665 = vld [vmem:[#allocation4 + $0x78] sm:$0xff]
        %v666 = vld [vmem:[#allocation4 + $0x80] sm:$0xf]
        %v667 = vld [vmem:[#allocation4 + $0x84] sm:$0xff]
        %v668 = vld [vmem:[#allocation4 + $0x8c] sm:$0xf]
        %v669 = vld [vmem:[#allocation4 + $0x90] sm:$0xff]
        %v670 = vld [vmem:[#allocation4 + $0x98] sm:$0xf]
        %v671 = vld [vmem:[#allocation4 + $0x9c] sm:$0xff]
        %v672 = vld [vmem:[#allocation4 + $0xa4] sm:$0xf]
        %v673 = vld [vmem:[#allocation4 + $0xa8] sm:$0xff]
        %v674 = vld [vmem:[#allocation4 + $0xb0] sm:$0xf]
        %v675 = vld [vmem:[#allocation4 + $0xb4] sm:$0xff]
        %v676 = vld [vmem:[#allocation4 + $0xbc] sm:$0xf]
        %v709 = vunpack.c.l.b16 %v645
        %v710 = vunpack.c.h.b16 %v645
        %v711 = vunpack.c.l.b16 %v646
        %v712 = vunpack.c.l.b16 %v647
        %v713 = vunpack.c.h.b16 %v647
        %v714 = vunpack.c.l.b16 %v648
        %v715 = vunpack.c.l.b16 %v649
        %v716 = vunpack.c.h.b16 %v649
        %v717 = vunpack.c.l.b16 %v650
        %v718 = vunpack.c.l.b16 %v651
        %v719 = vunpack.c.h.b16 %v651
        %v720 = vunpack.c.l.b16 %v652
        %v721 = vunpack.c.l.b16 %v653
        %v722 = vunpack.c.h.b16 %v653
        %v723 = vunpack.c.l.b16 %v654
        %v724 = vunpack.c.l.b16 %v655
        %v725 = vunpack.c.h.b16 %v655
        %v726 = vunpack.c.l.b16 %v656
        %v727 = vunpack.c.l.b16 %v657
        %v728 = vunpack.c.h.b16 %v657
        %v729 = vunpack.c.l.b16 %v658
        %v730 = vunpack.c.l.b16 %v659
        %v731 = vunpack.c.h.b16 %v659
        %v732 = vunpack.c.l.b16 %v660
        %v733 = vunpack.c.l.b16 %v661
        %v734 = vunpack.c.h.b16 %v661
        %v735 = vunpack.c.l.b16 %v662
        %v736 = vunpack.c.l.b16 %v663
        %v737 = vunpack.c.h.b16 %v663
        %v738 = vunpack.c.l.b16 %v664
        %v739 = vunpack.c.l.b16 %v665
        %v740 = vunpack.c.h.b16 %v665
        %v741 = vunpack.c.l.b16 %v666
        %v742 = vunpack.c.l.b16 %v667
        %v743 = vunpack.c.h.b16 %v667
        %v744 = vunpack.c.l.b16 %v668
        %v745 = vunpack.c.l.b16 %v669
        %v746 = vunpack.c.h.b16 %v669
        %v747 = vunpack.c.l.b16 %v670
        %v748 = vunpack.c.l.b16 %v671
        %v749 = vunpack.c.h.b16 %v671
        %v750 = vunpack.c.l.b16 %v672
        %v751 = vunpack.c.l.b16 %v673
        %v752 = vunpack.c.h.b16 %v673
        %v753 = vunpack.c.l.b16 %v674
        %v754 = vunpack.c.l.b16 %v675
        %v755 = vunpack.c.h.b16 %v675
        %v756 = vunpack.c.l.b16 %v676
        %v757 = vpack.c.b16 %v712, %v709
        %v758 = vpack.c.b16 %v713, %v710
        %v759 = vpack.c.b16 %v714, %v711
        %v760 = vpack.c.b16 %v718, %v715
        %v761 = vpack.c.b16 %v719, %v716
        %v762 = vpack.c.b16 %v720, %v717
        %v763 = vpack.c.b16 %v724, %v721
        %v764 = vpack.c.b16 %v725, %v722
        %v765 = vpack.c.b16 %v726, %v723
        %v766 = vpack.c.b16 %v730, %v727
        %v767 = vpack.c.b16 %v731, %v728
        %v768 = vpack.c.b16 %v732, %v729
        %v769 = vpack.c.b16 %v736, %v733
        %v770 = vpack.c.b16 %v737, %v734
        %v771 = vpack.c.b16 %v738, %v735
        %v772 = vpack.c.b16 %v742, %v739
        %v773 = vpack.c.b16 %v743, %v740
        %v774 = vpack.c.b16 %v744, %v741
        %v775 = vpack.c.b16 %v748, %v745
        %v776 = vpack.c.b16 %v749, %v746
        %v777 = vpack.c.b16 %v750, %v747
        %v778 = vpack.c.b16 %v754, %v751
        %v779 = vpack.c.b16 %v755, %v752
        %v780 = vpack.c.b16 %v756, %v753
        %805 = vmatprep.subr.bf16.mxu0 %v779
        %806 = vmatpush1.bf16.msra.mxu0 %v778
        %807 = vmatprep.subr.bf16.mxu0 %v776
        %808 = vmatpush1.bf16.msra.mxu0 %v775
        %809 = vmatprep.subr.bf16.mxu0 %v773
        %810 = vmatpush1.bf16.msra.mxu0 %v772
        %811 = vmatprep.subr.bf16.mxu0 %v770
        %812 = vmatpush1.bf16.msra.mxu0 %v769
        %813 = vmatprep.subr.bf16.mxu0 %v767
        %814 = vmatpush1.bf16.msra.mxu0 %v766
        %815 = vmatprep.subr.bf16.mxu0 %v764
        %816 = vmatpush1.bf16.msra.mxu0 %v763
        %817 = vmatprep.subr.bf16.mxu0 %v761
        %818 = vmatpush1.bf16.msra.mxu0 %v760
        %819 = vmatprep.subr.bf16.mxu0 %v758
        %820 = vmatpush1.bf16.msra.mxu0 %v757
        %821 = vmatprep.subr.bf16.mxu0 0
        %822 = vmatpush2.bf16.msra.mxu0 0
        %823 = vmatprep.subr.bf16.mxu0 0
        %824 = vmatpush2.bf16.msra.mxu0 0
        %825 = vmatprep.subr.bf16.mxu0 0
        %826 = vmatpush2.bf16.msra.mxu0 0
        %827 = vmatprep.subr.bf16.mxu0 0
        %828 = vmatpush2.bf16.msra.mxu0 0
        %829 = vmatprep.subr.bf16.mxu0 0
        %830 = vmatpush2.bf16.msra.mxu0 0
        %831 = vmatprep.subr.bf16.mxu0 0
        %832 = vmatpush2.bf16.msra.mxu0 0
        %833 = vmatprep.subr.bf16.mxu0 0
        %834 = vmatpush2.bf16.msra.mxu0 0
        %835 = vmatprep.subr.bf16.mxu0 0
        %836 = vmatpush2.bf16.msra.mxu0 0
        %837 = vmatprep.mubr.bf16.mxu0 0
        %838 = vmatmul.mubr.bf16.gmra.mxu0 %v644
        %v839 = vpop.f32.mrf.mxu0
        %v840 = vadd.f32 0.0, %v839
        %v841 = vpop.f32.mrf.mxu0
        %v842 = vadd.f32 0.0, %v841
        %v843 = vpop.f32.mrf.mxu0
        %v844 = vpop.f32.mrf.mxu0
        %845 = vdwg.mxu0
        %846 = vmatprep.subr.bf16.mxu0 0
        %847 = vmatpush1.bf16.msra.mxu0 %v780
        %848 = vmatprep.subr.bf16.mxu0 0
        %849 = vmatpush1.bf16.msra.mxu0 %v777
        %850 = vmatprep.subr.bf16.mxu0 0
        %851 = vmatpush1.bf16.msra.mxu0 %v774
        %852 = vmatprep.subr.bf16.mxu0 0
        %853 = vmatpush1.bf16.msra.mxu0 %v771
        %854 = vmatprep.subr.bf16.mxu0 0
        %855 = vmatpush1.bf16.msra.mxu0 %v768
        %856 = vmatprep.subr.bf16.mxu0 0
        %857 = vmatpush1.bf16.msra.mxu0 %v765
        %858 = vmatprep.subr.bf16.mxu0 0
        %859 = vmatpush1.bf16.msra.mxu0 %v762
        %860 = vmatprep.subr.bf16.mxu0 0
        %861 = vmatpush1.bf16.msra.mxu0 %v759
        %862 = vmatprep.subr.bf16.mxu0 0
        %863 = vmatpush2.bf16.msra.mxu0 0
        %864 = vmatprep.subr.bf16.mxu0 0
        %865 = vmatpush2.bf16.msra.mxu0 0
        %866 = vmatprep.subr.bf16.mxu0 0
        %867 = vmatpush2.bf16.msra.mxu0 0
        %868 = vmatprep.subr.bf16.mxu0 0
        %869 = vmatpush2.bf16.msra.mxu0 0
        %870 = vmatprep.subr.bf16.mxu0 0
        %871 = vmatpush2.bf16.msra.mxu0 0
        %872 = vmatprep.subr.bf16.mxu0 0
        %873 = vmatpush2.bf16.msra.mxu0 0
        %874 = vmatprep.subr.bf16.mxu0 0
        %875 = vmatpush2.bf16.msra.mxu0 0
        %876 = vmatprep.subr.bf16.mxu0 0
        %877 = vmatpush2.bf16.msra.mxu0 0
        %878 = vmatprep.mubr.bf16.mxu0 0
        %879 = vmatmul.mubr.bf16.gmra.mxu0 %v644
        %v880 = vpop.f32.mrf.mxu0
        %v881 = vadd.f32 0.0, %v880
        %v882 = vpop.f32.mrf.mxu0
        %v883 = vpop.f32.mrf.mxu0
        %v884 = vpop.f32.mrf.mxu0
        %885 = vdwg.mxu0
        %v886 = vadd.f32 %v641, %v840
        %v887 = vxor.u32 %v886, 2147483648
        %v888 = vmul.f32 %v887, 1.442695
        %v889 = vpow.pop %v888
        %v890 = vadd.f32 %v889, 1.0
        %v891 = vrcp.pop %v890
        %v892 = vmul.f32 1.0, %v891
        %v893 = vadd.f32 %v642, %v842
        %v894 = vxor.u32 %v893, 2147483648
        %v895 = vmul.f32 %v894, 1.442695
        %v896 = vpow.pop %v895
        %v897 = vadd.f32 %v896, 1.0
        %v898 = vrcp.pop %v897
        %v899 = vmul.f32 1.0, %v898
        %v900 = vld [vmem:[%s4] sm:$0x1]
        %v902 = vlaneseq
        %v903 = vshrl.u32 %v902, 7
        %v904 = vsub.s32 0, %v903
        %v905 = vrot.slane %v900, %v904
        %v907 = vadd.f32 %v881, %v905
        %v908 = vmul.f32 %v892, %v907
        %v909 = vadd.f32 %v643, %v908
        %v910 = vtanh.pop %v909
        %v911 = vsub.f32 1.0, %v899
        %v912 = vmul.f32 %v911, %v910
        %v913 = vmul.f32 %v899, %v638
        %v914 = vadd.f32 %v912, %v913
        %v915 = vpack.c.bf16 %v914, %v914
        %v916 = vld [vmem:[#allocation7] sm:$0xff]
        %v917 = vld [vmem:[#allocation7 + $0x8] sm:$0xf]
        %v918 = vld [vmem:[#allocation7 + $0xc] sm:$0xff]
        %v919 = vld [vmem:[#allocation7 + $0x14] sm:$0xf]
        %v920 = vld [vmem:[#allocation7 + $0x18] sm:$0xff]
        %v921 = vld [vmem:[#allocation7 + $0x20] sm:$0xf]
        %v922 = vld [vmem:[#allocation7 + $0x24] sm:$0xff]
        %v923 = vld [vmem:[#allocation7 + $0x2c] sm:$0xf]
        %v924 = vld [vmem:[#allocation7 + $0x30] sm:$0xff]
        %v925 = vld [vmem:[#allocation7 + $0x38] sm:$0xf]
        %v926 = vld [vmem:[#allocation7 + $0x3c] sm:$0xff]
        %v927 = vld [vmem:[#allocation7 + $0x44] sm:$0xf]
        %v928 = vld [vmem:[#allocation7 + $0x48] sm:$0xff]
        %v929 = vld [vmem:[#allocation7 + $0x50] sm:$0xf]
        %v930 = vld [vmem:[#allocation7 + $0x54] sm:$0xff]
        %v931 = vld [vmem:[#allocation7 + $0x5c] sm:$0xf]
        %v932 = vld [vmem:[#allocation7 + $0x60] sm:$0xff]
        %v933 = vld [vmem:[#allocation7 + $0x68] sm:$0xf]
        %v934 = vld [vmem:[#allocation7 + $0x6c] sm:$0xff]
        %v935 = vld [vmem:[#allocation7 + $0x74] sm:$0xf]
        %v936 = vld [vmem:[#allocation7 + $0x78] sm:$0xff]
        %v937 = vld [vmem:[#allocation7 + $0x80] sm:$0xf]
        %v938 = vld [vmem:[#allocation7 + $0x84] sm:$0xff]
        %v939 = vld [vmem:[#allocation7 + $0x8c] sm:$0xf]
        %v940 = vld [vmem:[#allocation7 + $0x90] sm:$0xff]
        %v941 = vld [vmem:[#allocation7 + $0x98] sm:$0xf]
        %v942 = vld [vmem:[#allocation7 + $0x9c] sm:$0xff]
        %v943 = vld [vmem:[#allocation7 + $0xa4] sm:$0xf]
        %v944 = vld [vmem:[#allocation7 + $0xa8] sm:$0xff]
        %v945 = vld [vmem:[#allocation7 + $0xb0] sm:$0xf]
        %v946 = vld [vmem:[#allocation7 + $0xb4] sm:$0xff]
        %v947 = vld [vmem:[#allocation7 + $0xbc] sm:$0xf]
        %v948 = vld [vmem:[%s7] sm:$0x7]
        %v950 = vlaneseq
        %v951 = vshrl.u32 %v950, 7
        %v952 = vsub.s32 0, %v951
        %v953 = vrot.slane %v948, %v952
        %v954 = vlaneseq
        %v955 = vshrl.u32 %v954, 7
        %v956 = vsub.s32 1, %v955
        %v957 = vrot.slane %v948, %v956
        %v958 = vlaneseq
        %v959 = vshrl.u32 %v958, 7
        %v960 = vsub.s32 2, %v959
        %v961 = vrot.slane %v948, %v960
        %v997 = vunpack.c.l.b16 %v916
        %v998 = vunpack.c.h.b16 %v916
        %v999 = vunpack.c.l.b16 %v917
        %v1000 = vunpack.c.l.b16 %v918
        %v1001 = vunpack.c.h.b16 %v918
        %v1002 = vunpack.c.l.b16 %v919
        %v1003 = vunpack.c.l.b16 %v920
        %v1004 = vunpack.c.h.b16 %v920
        %v1005 = vunpack.c.l.b16 %v921
        %v1006 = vunpack.c.l.b16 %v922
        %v1007 = vunpack.c.h.b16 %v922
        %v1008 = vunpack.c.l.b16 %v923
        %v1009 = vunpack.c.l.b16 %v924
        %v1010 = vunpack.c.h.b16 %v924
        %v1011 = vunpack.c.l.b16 %v925
        %v1012 = vunpack.c.l.b16 %v926
        %v1013 = vunpack.c.h.b16 %v926
        %v1014 = vunpack.c.l.b16 %v927
        %v1015 = vunpack.c.l.b16 %v928
        %v1016 = vunpack.c.h.b16 %v928
        %v1017 = vunpack.c.l.b16 %v929
        %v1018 = vunpack.c.l.b16 %v930
        %v1019 = vunpack.c.h.b16 %v930
        %v1020 = vunpack.c.l.b16 %v931
        %v1021 = vunpack.c.l.b16 %v932
        %v1022 = vunpack.c.h.b16 %v932
        %v1023 = vunpack.c.l.b16 %v933
        %v1024 = vunpack.c.l.b16 %v934
        %v1025 = vunpack.c.h.b16 %v934
        %v1026 = vunpack.c.l.b16 %v935
        %v1027 = vunpack.c.l.b16 %v936
        %v1028 = vunpack.c.h.b16 %v936
        %v1029 = vunpack.c.l.b16 %v937
        %v1030 = vunpack.c.l.b16 %v938
        %v1031 = vunpack.c.h.b16 %v938
        %v1032 = vunpack.c.l.b16 %v939
        %v1033 = vunpack.c.l.b16 %v940
        %v1034 = vunpack.c.h.b16 %v940
        %v1035 = vunpack.c.l.b16 %v941
        %v1036 = vunpack.c.l.b16 %v942
        %v1037 = vunpack.c.h.b16 %v942
        %v1038 = vunpack.c.l.b16 %v943
        %v1039 = vunpack.c.l.b16 %v944
        %v1040 = vunpack.c.h.b16 %v944
        %v1041 = vunpack.c.l.b16 %v945
        %v1042 = vunpack.c.l.b16 %v946
        %v1043 = vunpack.c.h.b16 %v946
        %v1044 = vunpack.c.l.b16 %v947
        %v1045 = vpack.c.b16 %v1000, %v997
        %v1046 = vpack.c.b16 %v1001, %v998
        %v1047 = vpack.c.b16 %v1002, %v999
        %v1048 = vpack.c.b16 %v1006, %v1003
        %v1049 = vpack.c.b16 %v1007, %v1004
        %v1050 = vpack.c.b16 %v1008, %v1005
        %v1051 = vpack.c.b16 %v1012, %v1009
        %v1052 = vpack.c.b16 %v1013, %v1010
        %v1053 = vpack.c.b16 %v1014, %v1011
        %v1054 = vpack.c.b16 %v1018, %v1015
        %v1055 = vpack.c.b16 %v1019, %v1016
        %v1056 = vpack.c.b16 %v1020, %v1017
        %v1057 = vpack.c.b16 %v1024, %v1021
        %v1058 = vpack.c.b16 %v1025, %v1022
        %v1059 = vpack.c.b16 %v1026, %v1023
        %v1060 = vpack.c.b16 %v1030, %v1027
        %v1061 = vpack.c.b16 %v1031, %v1028
        %v1062 = vpack.c.b16 %v1032, %v1029
        %v1063 = vpack.c.b16 %v1036, %v1033
        %v1064 = vpack.c.b16 %v1037, %v1034
        %v1065 = vpack.c.b16 %v1038, %v1035
        %v1066 = vpack.c.b16 %v1042, %v1039
        %v1067 = vpack.c.b16 %v1043, %v1040
        %v1068 = vpack.c.b16 %v1044, %v1041
        %1093 = vmatprep.subr.bf16.mxu0 %v1067
        %1094 = vmatpush1.bf16.msra.mxu0 %v1066
        %1095 = vmatprep.subr.bf16.mxu0 %v1064
        %1096 = vmatpush1.bf16.msra.mxu0 %v1063
        %1097 = vmatprep.subr.bf16.mxu0 %v1061
        %1098 = vmatpush1.bf16.msra.mxu0 %v1060
        %1099 = vmatprep.subr.bf16.mxu0 %v1058
        %1100 = vmatpush1.bf16.msra.mxu0 %v1057
        %1101 = vmatprep.subr.bf16.mxu0 %v1055
        %1102 = vmatpush1.bf16.msra.mxu0 %v1054
        %1103 = vmatprep.subr.bf16.mxu0 %v1052
        %1104 = vmatpush1.bf16.msra.mxu0 %v1051
        %1105 = vmatprep.subr.bf16.mxu0 %v1049
        %1106 = vmatpush1.bf16.msra.mxu0 %v1048
        %1107 = vmatprep.subr.bf16.mxu0 %v1046
        %1108 = vmatpush1.bf16.msra.mxu0 %v1045
        %1109 = vmatprep.subr.bf16.mxu0 0
        %1110 = vmatpush2.bf16.msra.mxu0 0
        %1111 = vmatprep.subr.bf16.mxu0 0
        %1112 = vmatpush2.bf16.msra.mxu0 0
        %1113 = vmatprep.subr.bf16.mxu0 0
        %1114 = vmatpush2.bf16.msra.mxu0 0
        %1115 = vmatprep.subr.bf16.mxu0 0
        %1116 = vmatpush2.bf16.msra.mxu0 0
        %1117 = vmatprep.subr.bf16.mxu0 0
        %1118 = vmatpush2.bf16.msra.mxu0 0
        %1119 = vmatprep.subr.bf16.mxu0 0
        %1120 = vmatpush2.bf16.msra.mxu0 0
        %1121 = vmatprep.subr.bf16.mxu0 0
        %1122 = vmatpush2.bf16.msra.mxu0 0
        %1123 = vmatprep.subr.bf16.mxu0 0
        %1124 = vmatpush2.bf16.msra.mxu0 0
        %1125 = vmatprep.mubr.bf16.mxu0 0
        %1126 = vmatmul.mubr.bf16.gmra.mxu0 %v915
        %v1127 = vpop.f32.mrf.mxu0
        %v1128 = vadd.f32 %v953, %v1127
        %v1129 = vpop.f32.mrf.mxu0
        %v1130 = vadd.f32 %v957, %v1129
        %v1131 = vpop.f32.mrf.mxu0
        %v1132 = vpop.f32.mrf.mxu0
        %1133 = vdwg.mxu0
        %1134 = vmatprep.subr.bf16.mxu0 0
        %1135 = vmatpush1.bf16.msra.mxu0 %v1068
        %1136 = vmatprep.subr.bf16.mxu0 0
        %1137 = vmatpush1.bf16.msra.mxu0 %v1065
        %1138 = vmatprep.subr.bf16.mxu0 0
        %1139 = vmatpush1.bf16.msra.mxu0 %v1062
        %1140 = vmatprep.subr.bf16.mxu0 0
        %1141 = vmatpush1.bf16.msra.mxu0 %v1059
        %1142 = vmatprep.subr.bf16.mxu0 0
        %1143 = vmatpush1.bf16.msra.mxu0 %v1056
        %1144 = vmatprep.subr.bf16.mxu0 0
        %1145 = vmatpush1.bf16.msra.mxu0 %v1053
        %1146 = vmatprep.subr.bf16.mxu0 0
        %1147 = vmatpush1.bf16.msra.mxu0 %v1050
        %1148 = vmatprep.subr.bf16.mxu0 0
        %1149 = vmatpush1.bf16.msra.mxu0 %v1047
        %1150 = vmatprep.subr.bf16.mxu0 0
        %1151 = vmatpush2.bf16.msra.mxu0 0
        %1152 = vmatprep.subr.bf16.mxu0 0
        %1153 = vmatpush2.bf16.msra.mxu0 0
        %1154 = vmatprep.subr.bf16.mxu0 0
        %1155 = vmatpush2.bf16.msra.mxu0 0
        %1156 = vmatprep.subr.bf16.mxu0 0
        %1157 = vmatpush2.bf16.msra.mxu0 0
        %1158 = vmatprep.subr.bf16.mxu0 0
        %1159 = vmatpush2.bf16.msra.mxu0 0
        %1160 = vmatprep.subr.bf16.mxu0 0
        %1161 = vmatpush2.bf16.msra.mxu0 0
        %1162 = vmatprep.subr.bf16.mxu0 0
        %1163 = vmatpush2.bf16.msra.mxu0 0
        %1164 = vmatprep.subr.bf16.mxu0 0
        %1165 = vmatpush2.bf16.msra.mxu0 0
        %1166 = vmatprep.mubr.bf16.mxu0 0
        %1167 = vmatmul.mubr.bf16.gmra.mxu0 %v915
        %v1168 = vpop.f32.mrf.mxu0
        %v1169 = vadd.f32 %v961, %v1168
        %v1170 = vpop.f32.mrf.mxu0
        %v1171 = vpop.f32.mrf.mxu0
        %v1172 = vpop.f32.mrf.mxu0
        %1173 = vdwg.mxu0
        %v1174 = vpack.c.bf16 %v640, %v640
        %v1175 = vld [vmem:[#allocation9] sm:$0xff]
        %v1176 = vld [vmem:[#allocation9 + $0x8] sm:$0xf]
        %v1177 = vld [vmem:[#allocation9 + $0xc] sm:$0xff]
        %v1178 = vld [vmem:[#allocation9 + $0x14] sm:$0xf]
        %v1179 = vld [vmem:[#allocation9 + $0x18] sm:$0xff]
        %v1180 = vld [vmem:[#allocation9 + $0x20] sm:$0xf]
        %v1181 = vld [vmem:[#allocation9 + $0x24] sm:$0xff]
        %v1182 = vld [vmem:[#allocation9 + $0x2c] sm:$0xf]
        %v1183 = vld [vmem:[#allocation9 + $0x30] sm:$0xff]
        %v1184 = vld [vmem:[#allocation9 + $0x38] sm:$0xf]
        %v1185 = vld [vmem:[#allocation9 + $0x3c] sm:$0xff]
        %v1186 = vld [vmem:[#allocation9 + $0x44] sm:$0xf]
        %v1187 = vld [vmem:[#allocation9 + $0x48] sm:$0xff]
        %v1188 = vld [vmem:[#allocation9 + $0x50] sm:$0xf]
        %v1189 = vld [vmem:[#allocation9 + $0x54] sm:$0xff]
        %v1190 = vld [vmem:[#allocation9 + $0x5c] sm:$0xf]
        %v1191 = vld [vmem:[#allocation9 + $0x60] sm:$0xff]
        %v1192 = vld [vmem:[#allocation9 + $0x68] sm:$0xf]
        %v1193 = vld [vmem:[#allocation9 + $0x6c] sm:$0xff]
        %v1194 = vld [vmem:[#allocation9 + $0x74] sm:$0xf]
        %v1195 = vld [vmem:[#allocation9 + $0x78] sm:$0xff]
        %v1196 = vld [vmem:[#allocation9 + $0x80] sm:$0xf]
        %v1197 = vld [vmem:[#allocation9 + $0x84] sm:$0xff]
        %v1198 = vld [vmem:[#allocation9 + $0x8c] sm:$0xf]
        %v1199 = vld [vmem:[#allocation9 + $0x90] sm:$0xff]
        %v1200 = vld [vmem:[#allocation9 + $0x98] sm:$0xf]
        %v1201 = vld [vmem:[#allocation9 + $0x9c] sm:$0xff]
        %v1202 = vld [vmem:[#allocation9 + $0xa4] sm:$0xf]
        %v1203 = vld [vmem:[#allocation9 + $0xa8] sm:$0xff]
        %v1204 = vld [vmem:[#allocation9 + $0xb0] sm:$0xf]
        %v1205 = vld [vmem:[#allocation9 + $0xb4] sm:$0xff]
        %v1206 = vld [vmem:[#allocation9 + $0xbc] sm:$0xf]
        %v1239 = vunpack.c.l.b16 %v1175
        %v1240 = vunpack.c.h.b16 %v1175
        %v1241 = vunpack.c.l.b16 %v1176
        %v1242 = vunpack.c.l.b16 %v1177
        %v1243 = vunpack.c.h.b16 %v1177
        %v1244 = vunpack.c.l.b16 %v1178
        %v1245 = vunpack.c.l.b16 %v1179
        %v1246 = vunpack.c.h.b16 %v1179
        %v1247 = vunpack.c.l.b16 %v1180
        %v1248 = vunpack.c.l.b16 %v1181
        %v1249 = vunpack.c.h.b16 %v1181
        %v1250 = vunpack.c.l.b16 %v1182
        %v1251 = vunpack.c.l.b16 %v1183
        %v1252 = vunpack.c.h.b16 %v1183
        %v1253 = vunpack.c.l.b16 %v1184
        %v1254 = vunpack.c.l.b16 %v1185
        %v1255 = vunpack.c.h.b16 %v1185
        %v1256 = vunpack.c.l.b16 %v1186
        %v1257 = vunpack.c.l.b16 %v1187
        %v1258 = vunpack.c.h.b16 %v1187
        %v1259 = vunpack.c.l.b16 %v1188
        %v1260 = vunpack.c.l.b16 %v1189
        %v1261 = vunpack.c.h.b16 %v1189
        %v1262 = vunpack.c.l.b16 %v1190
        %v1263 = vunpack.c.l.b16 %v1191
        %v1264 = vunpack.c.h.b16 %v1191
        %v1265 = vunpack.c.l.b16 %v1192
        %v1266 = vunpack.c.l.b16 %v1193
        %v1267 = vunpack.c.h.b16 %v1193
        %v1268 = vunpack.c.l.b16 %v1194
        %v1269 = vunpack.c.l.b16 %v1195
        %v1270 = vunpack.c.h.b16 %v1195
        %v1271 = vunpack.c.l.b16 %v1196
        %v1272 = vunpack.c.l.b16 %v1197
        %v1273 = vunpack.c.h.b16 %v1197
        %v1274 = vunpack.c.l.b16 %v1198
        %v1275 = vunpack.c.l.b16 %v1199
        %v1276 = vunpack.c.h.b16 %v1199
        %v1277 = vunpack.c.l.b16 %v1200
        %v1278 = vunpack.c.l.b16 %v1201
        %v1279 = vunpack.c.h.b16 %v1201
        %v1280 = vunpack.c.l.b16 %v1202
        %v1281 = vunpack.c.l.b16 %v1203
        %v1282 = vunpack.c.h.b16 %v1203
        %v1283 = vunpack.c.l.b16 %v1204
        %v1284 = vunpack.c.l.b16 %v1205
        %v1285 = vunpack.c.h.b16 %v1205
        %v1286 = vunpack.c.l.b16 %v1206
        %v1287 = vpack.c.b16 %v1242, %v1239
        %v1288 = vpack.c.b16 %v1243, %v1240
        %v1289 = vpack.c.b16 %v1244, %v1241
        %v1290 = vpack.c.b16 %v1248, %v1245
        %v1291 = vpack.c.b16 %v1249, %v1246
        %v1292 = vpack.c.b16 %v1250, %v1247
        %v1293 = vpack.c.b16 %v1254, %v1251
        %v1294 = vpack.c.b16 %v1255, %v1252
        %v1295 = vpack.c.b16 %v1256, %v1253
        %v1296 = vpack.c.b16 %v1260, %v1257
        %v1297 = vpack.c.b16 %v1261, %v1258
        %v1298 = vpack.c.b16 %v1262, %v1259
        %v1299 = vpack.c.b16 %v1266, %v1263
        %v1300 = vpack.c.b16 %v1267, %v1264
        %v1301 = vpack.c.b16 %v1268, %v1265
        %v1302 = vpack.c.b16 %v1272, %v1269
        %v1303 = vpack.c.b16 %v1273, %v1270
        %v1304 = vpack.c.b16 %v1274, %v1271
        %v1305 = vpack.c.b16 %v1278, %v1275
        %v1306 = vpack.c.b16 %v1279, %v1276
        %v1307 = vpack.c.b16 %v1280, %v1277
        %v1308 = vpack.c.b16 %v1284, %v1281
        %v1309 = vpack.c.b16 %v1285, %v1282
        %v1310 = vpack.c.b16 %v1286, %v1283
        %1335 = vmatprep.subr.bf16.mxu0 %v1309
        %1336 = vmatpush1.bf16.msra.mxu0 %v1308
        %1337 = vmatprep.subr.bf16.mxu0 %v1306
        %1338 = vmatpush1.bf16.msra.mxu0 %v1305
        %1339 = vmatprep.subr.bf16.mxu0 %v1303
        %1340 = vmatpush1.bf16.msra.mxu0 %v1302
        %1341 = vmatprep.subr.bf16.mxu0 %v1300
        %1342 = vmatpush1.bf16.msra.mxu0 %v1299
        %1343 = vmatprep.subr.bf16.mxu0 %v1297
        %1344 = vmatpush1.bf16.msra.mxu0 %v1296
        %1345 = vmatprep.subr.bf16.mxu0 %v1294
        %1346 = vmatpush1.bf16.msra.mxu0 %v1293
        %1347 = vmatprep.subr.bf16.mxu0 %v1291
        %1348 = vmatpush1.bf16.msra.mxu0 %v1290
        %1349 = vmatprep.subr.bf16.mxu0 %v1288
        %1350 = vmatpush1.bf16.msra.mxu0 %v1287
        %1351 = vmatprep.subr.bf16.mxu0 0
        %1352 = vmatpush2.bf16.msra.mxu0 0
        %1353 = vmatprep.subr.bf16.mxu0 0
        %1354 = vmatpush2.bf16.msra.mxu0 0
        %1355 = vmatprep.subr.bf16.mxu0 0
        %1356 = vmatpush2.bf16.msra.mxu0 0
        %1357 = vmatprep.subr.bf16.mxu0 0
        %1358 = vmatpush2.bf16.msra.mxu0 0
        %1359 = vmatprep.subr.bf16.mxu0 0
        %1360 = vmatpush2.bf16.msra.mxu0 0
        %1361 = vmatprep.subr.bf16.mxu0 0
        %1362 = vmatpush2.bf16.msra.mxu0 0
        %1363 = vmatprep.subr.bf16.mxu0 0
        %1364 = vmatpush2.bf16.msra.mxu0 0
        %1365 = vmatprep.subr.bf16.mxu0 0
        %1366 = vmatpush2.bf16.msra.mxu0 0
        %1367 = vmatprep.mubr.bf16.mxu0 0
        %1368 = vmatmul.mubr.bf16.gmra.mxu0 %v1174
        %v1369 = vpop.f32.mrf.mxu0
        %v1370 = vadd.f32 0.0, %v1369
        %v1371 = vpop.f32.mrf.mxu0
        %v1372 = vadd.f32 0.0, %v1371
        %v1373 = vpop.f32.mrf.mxu0
        %v1374 = vpop.f32.mrf.mxu0
        %1375 = vdwg.mxu0
        %1376 = vmatprep.subr.bf16.mxu0 0
        %1377 = vmatpush1.bf16.msra.mxu0 %v1310
        %1378 = vmatprep.subr.bf16.mxu0 0
        %1379 = vmatpush1.bf16.msra.mxu0 %v1307
        %1380 = vmatprep.subr.bf16.mxu0 0
        %1381 = vmatpush1.bf16.msra.mxu0 %v1304
        %1382 = vmatprep.subr.bf16.mxu0 0
        %1383 = vmatpush1.bf16.msra.mxu0 %v1301
        %1384 = vmatprep.subr.bf16.mxu0 0
        %1385 = vmatpush1.bf16.msra.mxu0 %v1298
        %1386 = vmatprep.subr.bf16.mxu0 0
        %1387 = vmatpush1.bf16.msra.mxu0 %v1295
        %1388 = vmatprep.subr.bf16.mxu0 0
        %1389 = vmatpush1.bf16.msra.mxu0 %v1292
        %1390 = vmatprep.subr.bf16.mxu0 0
        %1391 = vmatpush1.bf16.msra.mxu0 %v1289
        %1392 = vmatprep.subr.bf16.mxu0 0
        %1393 = vmatpush2.bf16.msra.mxu0 0
        %1394 = vmatprep.subr.bf16.mxu0 0
        %1395 = vmatpush2.bf16.msra.mxu0 0
        %1396 = vmatprep.subr.bf16.mxu0 0
        %1397 = vmatpush2.bf16.msra.mxu0 0
        %1398 = vmatprep.subr.bf16.mxu0 0
        %1399 = vmatpush2.bf16.msra.mxu0 0
        %1400 = vmatprep.subr.bf16.mxu0 0
        %1401 = vmatpush2.bf16.msra.mxu0 0
        %1402 = vmatprep.subr.bf16.mxu0 0
        %1403 = vmatpush2.bf16.msra.mxu0 0
        %1404 = vmatprep.subr.bf16.mxu0 0
        %1405 = vmatpush2.bf16.msra.mxu0 0
        %1406 = vmatprep.subr.bf16.mxu0 0
        %1407 = vmatpush2.bf16.msra.mxu0 0
        %1408 = vmatprep.mubr.bf16.mxu0 0
        %1409 = vmatmul.mubr.bf16.gmra.mxu0 %v1174
        %v1410 = vpop.f32.mrf.mxu0
        %v1411 = vadd.f32 0.0, %v1410
        %v1412 = vpop.f32.mrf.mxu0
        %v1413 = vpop.f32.mrf.mxu0
        %v1414 = vpop.f32.mrf.mxu0
        %1415 = vdwg.mxu0
        %v1416 = vadd.f32 %v1128, %v1370
        %v1417 = vxor.u32 %v1416, 2147483648
        %v1418 = vmul.f32 %v1417, 1.442695
        %v1419 = vpow.pop %v1418
        %v1420 = vadd.f32 %v1419, 1.0
        %v1421 = vrcp.pop %v1420
        %v1422 = vmul.f32 1.0, %v1421
        %v1423 = vadd.f32 %v1130, %v1372
        %v1424 = vxor.u32 %v1423, 2147483648
        %v1425 = vmul.f32 %v1424, 1.442695
        %v1426 = vpow.pop %v1425
        %v1427 = vadd.f32 %v1426, 1.0
        %v1428 = vrcp.pop %v1427
        %v1429 = vmul.f32 1.0, %v1428
        %v1430 = vld [vmem:[%s8] sm:$0x1]
        %v1432 = vlaneseq
        %v1433 = vshrl.u32 %v1432, 7
        %v1434 = vsub.s32 0, %v1433
        %v1435 = vrot.slane %v1430, %v1434
        %v1437 = vadd.f32 %v1411, %v1435
        %v1438 = vmul.f32 %v1422, %v1437
        %v1439 = vadd.f32 %v1169, %v1438
        %v1440 = vtanh.pop %v1439
        %v1441 = vsub.f32 1.0, %v1429
        %v1442 = vmul.f32 %v1441, %v1440
        %v1443 = vmul.f32 %v1429, %v640
        %v1444 = vadd.f32 %v1442, %v1443
        %v1445 = vld [vmem:[#allocation3 + $0x18] sm:$0xff]
        %v1446 = vld [vmem:[#allocation3 + $0x20] sm:$0xff]
        %v1447 = vld [vmem:[#allocation3 + $0x28] sm:$0xff]
        %1448 = vmatprep.subr.bf16.mxu0 %v779
        %1449 = vmatpush1.bf16.msra.mxu0 %v778
        %1450 = vmatprep.subr.bf16.mxu0 %v776
        %1451 = vmatpush1.bf16.msra.mxu0 %v775
        %1452 = vmatprep.subr.bf16.mxu0 %v773
        %1453 = vmatpush1.bf16.msra.mxu0 %v772
        %1454 = vmatprep.subr.bf16.mxu0 %v770
        %1455 = vmatpush1.bf16.msra.mxu0 %v769
        %1456 = vmatprep.subr.bf16.mxu0 %v767
        %1457 = vmatpush1.bf16.msra.mxu0 %v766
        %1458 = vmatprep.subr.bf16.mxu0 %v764
        %1459 = vmatpush1.bf16.msra.mxu0 %v763
        %1460 = vmatprep.subr.bf16.mxu0 %v761
        %1461 = vmatpush1.bf16.msra.mxu0 %v760
        %1462 = vmatprep.subr.bf16.mxu0 %v758
        %1463 = vmatpush1.bf16.msra.mxu0 %v757
        %1464 = vmatprep.subr.bf16.mxu0 0
        %1465 = vmatpush2.bf16.msra.mxu0 0
        %1466 = vmatprep.subr.bf16.mxu0 0
        %1467 = vmatpush2.bf16.msra.mxu0 0
        %1468 = vmatprep.subr.bf16.mxu0 0
        %1469 = vmatpush2.bf16.msra.mxu0 0
        %1470 = vmatprep.subr.bf16.mxu0 0
        %1471 = vmatpush2.bf16.msra.mxu0 0
        %1472 = vmatprep.subr.bf16.mxu0 0
        %1473 = vmatpush2.bf16.msra.mxu0 0
        %1474 = vmatprep.subr.bf16.mxu0 0
        %1475 = vmatpush2.bf16.msra.mxu0 0
        %1476 = vmatprep.subr.bf16.mxu0 0
        %1477 = vmatpush2.bf16.msra.mxu0 0
        %1478 = vmatprep.subr.bf16.mxu0 0
        %1479 = vmatpush2.bf16.msra.mxu0 0
        %1480 = vmatprep.mubr.bf16.mxu0 0
        %1481 = vmatmul.mubr.bf16.gmra.mxu0 %v915
        %v1482 = vpop.f32.mrf.mxu0
        %v1483 = vadd.f32 0.0, %v1482
        %v1484 = vpop.f32.mrf.mxu0
        %v1485 = vadd.f32 0.0, %v1484
        %v1486 = vpop.f32.mrf.mxu0
        %v1487 = vpop.f32.mrf.mxu0
        %1488 = vdwg.mxu0
        %1489 = vmatprep.subr.bf16.mxu0 0
        %1490 = vmatpush1.bf16.msra.mxu0 %v780
        %1491 = vmatprep.subr.bf16.mxu0 0
        %1492 = vmatpush1.bf16.msra.mxu0 %v777
        %1493 = vmatprep.subr.bf16.mxu0 0
        %1494 = vmatpush1.bf16.msra.mxu0 %v774
        %1495 = vmatprep.subr.bf16.mxu0 0
        %1496 = vmatpush1.bf16.msra.mxu0 %v771
        %1497 = vmatprep.subr.bf16.mxu0 0
        %1498 = vmatpush1.bf16.msra.mxu0 %v768
        %1499 = vmatprep.subr.bf16.mxu0 0
        %1500 = vmatpush1.bf16.msra.mxu0 %v765
        %1501 = vmatprep.subr.bf16.mxu0 0
        %1502 = vmatpush1.bf16.msra.mxu0 %v762
        %1503 = vmatprep.subr.bf16.mxu0 0
        %1504 = vmatpush1.bf16.msra.mxu0 %v759
        %1505 = vmatprep.subr.bf16.mxu0 0
        %1506 = vmatpush2.bf16.msra.mxu0 0
        %1507 = vmatprep.subr.bf16.mxu0 0
        %1508 = vmatpush2.bf16.msra.mxu0 0
        %1509 = vmatprep.subr.bf16.mxu0 0
        %1510 = vmatpush2.bf16.msra.mxu0 0
        %1511 = vmatprep.subr.bf16.mxu0 0
        %1512 = vmatpush2.bf16.msra.mxu0 0
        %1513 = vmatprep.subr.bf16.mxu0 0
        %1514 = vmatpush2.bf16.msra.mxu0 0
        %1515 = vmatprep.subr.bf16.mxu0 0
        %1516 = vmatpush2.bf16.msra.mxu0 0
        %1517 = vmatprep.subr.bf16.mxu0 0
        %1518 = vmatpush2.bf16.msra.mxu0 0
        %1519 = vmatprep.subr.bf16.mxu0 0
        %1520 = vmatpush2.bf16.msra.mxu0 0
        %1521 = vmatprep.mubr.bf16.mxu0 0
        %1522 = vmatmul.mubr.bf16.gmra.mxu0 %v915
        %v1523 = vpop.f32.mrf.mxu0
        %v1524 = vadd.f32 0.0, %v1523
        %v1525 = vpop.f32.mrf.mxu0
        %v1526 = vpop.f32.mrf.mxu0
        %v1527 = vpop.f32.mrf.mxu0
        %1528 = vdwg.mxu0
        %v1529 = vadd.f32 %v1445, %v1483
        %v1530 = vxor.u32 %v1529, 2147483648
        %v1531 = vmul.f32 %v1530, 1.442695
        %v1532 = vpow.pop %v1531
        %v1533 = vadd.f32 %v1532, 1.0
        %v1534 = vrcp.pop %v1533
        %v1535 = vmul.f32 1.0, %v1534
        %v1536 = vadd.f32 %v1446, %v1485
        %v1537 = vxor.u32 %v1536, 2147483648
        %v1538 = vmul.f32 %v1537, 1.442695
        %v1539 = vpow.pop %v1538
        %v1540 = vadd.f32 %v1539, 1.0
        %v1541 = vrcp.pop %v1540
        %v1542 = vmul.f32 1.0, %v1541
        %v1543 = vadd.f32 %v1524, %v905
        %v1544 = vmul.f32 %v1535, %v1543
        %v1545 = vadd.f32 %v1447, %v1544
        %v1546 = vtanh.pop %v1545
        %v1547 = vsub.f32 1.0, %v1542
        %v1548 = vmul.f32 %v1547, %v1546
        %v1549 = vmul.f32 %v1542, %v914
        %v1550 = vadd.f32 %v1548, %v1549
        %v1551 = vpack.c.bf16 %v1550, %v1550
        %1552 = vmatprep.subr.bf16.mxu0 %v1067
        %1553 = vmatpush1.bf16.msra.mxu0 %v1066
        %1554 = vmatprep.subr.bf16.mxu0 %v1064
        %1555 = vmatpush1.bf16.msra.mxu0 %v1063
        %1556 = vmatprep.subr.bf16.mxu0 %v1061
        %1557 = vmatpush1.bf16.msra.mxu0 %v1060
        %1558 = vmatprep.subr.bf16.mxu0 %v1058
        %1559 = vmatpush1.bf16.msra.mxu0 %v1057
        %1560 = vmatprep.subr.bf16.mxu0 %v1055
        %1561 = vmatpush1.bf16.msra.mxu0 %v1054
        %1562 = vmatprep.subr.bf16.mxu0 %v1052
        %1563 = vmatpush1.bf16.msra.mxu0 %v1051
        %1564 = vmatprep.subr.bf16.mxu0 %v1049
        %1565 = vmatpush1.bf16.msra.mxu0 %v1048
        %1566 = vmatprep.subr.bf16.mxu0 %v1046
        %1567 = vmatpush1.bf16.msra.mxu0 %v1045
        %1568 = vmatprep.subr.bf16.mxu0 0
        %1569 = vmatpush2.bf16.msra.mxu0 0
        %1570 = vmatprep.subr.bf16.mxu0 0
        %1571 = vmatpush2.bf16.msra.mxu0 0
        %1572 = vmatprep.subr.bf16.mxu0 0
        %1573 = vmatpush2.bf16.msra.mxu0 0
        %1574 = vmatprep.subr.bf16.mxu0 0
        %1575 = vmatpush2.bf16.msra.mxu0 0
        %1576 = vmatprep.subr.bf16.mxu0 0
        %1577 = vmatpush2.bf16.msra.mxu0 0
        %1578 = vmatprep.subr.bf16.mxu0 0
        %1579 = vmatpush2.bf16.msra.mxu0 0
        %1580 = vmatprep.subr.bf16.mxu0 0
        %1581 = vmatpush2.bf16.msra.mxu0 0
        %1582 = vmatprep.subr.bf16.mxu0 0
        %1583 = vmatpush2.bf16.msra.mxu0 0
        %1584 = vmatprep.mubr.bf16.mxu0 0
        %1585 = vmatmul.mubr.bf16.gmra.mxu0 %v1551
        %v1586 = vpop.f32.mrf.mxu0
        %v1587 = vadd.f32 %v953, %v1586
        %v1588 = vpop.f32.mrf.mxu0
        %v1589 = vadd.f32 %v957, %v1588
        %v1590 = vpop.f32.mrf.mxu0
        %v1591 = vpop.f32.mrf.mxu0
        %1592 = vdwg.mxu0
        %1593 = vmatprep.subr.bf16.mxu0 0
        %1594 = vmatpush1.bf16.msra.mxu0 %v1068
        %1595 = vmatprep.subr.bf16.mxu0 0
        %1596 = vmatpush1.bf16.msra.mxu0 %v1065
        %1597 = vmatprep.subr.bf16.mxu0 0
        %1598 = vmatpush1.bf16.msra.mxu0 %v1062
        %1599 = vmatprep.subr.bf16.mxu0 0
        %1600 = vmatpush1.bf16.msra.mxu0 %v1059
        %1601 = vmatprep.subr.bf16.mxu0 0
        %1602 = vmatpush1.bf16.msra.mxu0 %v1056
        %1603 = vmatprep.subr.bf16.mxu0 0
        %1604 = vmatpush1.bf16.msra.mxu0 %v1053
        %1605 = vmatprep.subr.bf16.mxu0 0
        %1606 = vmatpush1.bf16.msra.mxu0 %v1050
        %1607 = vmatprep.subr.bf16.mxu0 0
        %1608 = vmatpush1.bf16.msra.mxu0 %v1047
        %1609 = vmatprep.subr.bf16.mxu0 0
        %1610 = vmatpush2.bf16.msra.mxu0 0
        %1611 = vmatprep.subr.bf16.mxu0 0
        %1612 = vmatpush2.bf16.msra.mxu0 0
        %1613 = vmatprep.subr.bf16.mxu0 0
        %1614 = vmatpush2.bf16.msra.mxu0 0
        %1615 = vmatprep.subr.bf16.mxu0 0
        %1616 = vmatpush2.bf16.msra.mxu0 0
        %1617 = vmatprep.subr.bf16.mxu0 0
        %1618 = vmatpush2.bf16.msra.mxu0 0
        %1619 = vmatprep.subr.bf16.mxu0 0
        %1620 = vmatpush2.bf16.msra.mxu0 0
        %1621 = vmatprep.subr.bf16.mxu0 0
        %1622 = vmatpush2.bf16.msra.mxu0 0
        %1623 = vmatprep.subr.bf16.mxu0 0
        %1624 = vmatpush2.bf16.msra.mxu0 0
        %1625 = vmatprep.mubr.bf16.mxu0 0
        %1626 = vmatmul.mubr.bf16.gmra.mxu0 %v1551
        %v1627 = vpop.f32.mrf.mxu0
        %v1628 = vadd.f32 %v961, %v1627
        %v1629 = vpop.f32.mrf.mxu0
        %v1630 = vpop.f32.mrf.mxu0
        %v1631 = vpop.f32.mrf.mxu0
        %1632 = vdwg.mxu0
        %v1633 = vpack.c.bf16 %v1444, %v1444
        %1634 = vmatprep.subr.bf16.mxu0 %v1309
        %1635 = vmatpush1.bf16.msra.mxu0 %v1308
        %1636 = vmatprep.subr.bf16.mxu0 %v1306
        %1637 = vmatpush1.bf16.msra.mxu0 %v1305
        %1638 = vmatprep.subr.bf16.mxu0 %v1303
        %1639 = vmatpush1.bf16.msra.mxu0 %v1302
        %1640 = vmatprep.subr.bf16.mxu0 %v1300
        %1641 = vmatpush1.bf16.msra.mxu0 %v1299
        %1642 = vmatprep.subr.bf16.mxu0 %v1297
        %1643 = vmatpush1.bf16.msra.mxu0 %v1296
        %1644 = vmatprep.subr.bf16.mxu0 %v1294
        %1645 = vmatpush1.bf16.msra.mxu0 %v1293
        %1646 = vmatprep.subr.bf16.mxu0 %v1291
        %1647 = vmatpush1.bf16.msra.mxu0 %v1290
        %1648 = vmatprep.subr.bf16.mxu0 %v1288
        %1649 = vmatpush1.bf16.msra.mxu0 %v1287
        %1650 = vmatprep.subr.bf16.mxu0 0
        %1651 = vmatpush2.bf16.msra.mxu0 0
        %1652 = vmatprep.subr.bf16.mxu0 0
        %1653 = vmatpush2.bf16.msra.mxu0 0
        %1654 = vmatprep.subr.bf16.mxu0 0
        %1655 = vmatpush2.bf16.msra.mxu0 0
        %1656 = vmatprep.subr.bf16.mxu0 0
        %1657 = vmatpush2.bf16.msra.mxu0 0
        %1658 = vmatprep.subr.bf16.mxu0 0
        %1659 = vmatpush2.bf16.msra.mxu0 0
        %1660 = vmatprep.subr.bf16.mxu0 0
        %1661 = vmatpush2.bf16.msra.mxu0 0
        %1662 = vmatprep.subr.bf16.mxu0 0
        %1663 = vmatpush2.bf16.msra.mxu0 0
        %1664 = vmatprep.subr.bf16.mxu0 0
        %1665 = vmatpush2.bf16.msra.mxu0 0
        %1666 = vmatprep.mubr.bf16.mxu0 0
        %1667 = vmatmul.mubr.bf16.gmra.mxu0 %v1633
        %v1668 = vpop.f32.mrf.mxu0
        %v1669 = vadd.f32 0.0, %v1668
        %v1670 = vpop.f32.mrf.mxu0
        %v1671 = vadd.f32 0.0, %v1670
        %v1672 = vpop.f32.mrf.mxu0
        %v1673 = vpop.f32.mrf.mxu0
        %1674 = vdwg.mxu0
        %1675 = vmatprep.subr.bf16.mxu0 0
        %1676 = vmatpush1.bf16.msra.mxu0 %v1310
        %1677 = vmatprep.subr.bf16.mxu0 0
        %1678 = vmatpush1.bf16.msra.mxu0 %v1307
        %1679 = vmatprep.subr.bf16.mxu0 0
        %1680 = vmatpush1.bf16.msra.mxu0 %v1304
        %1681 = vmatprep.subr.bf16.mxu0 0
        %1682 = vmatpush1.bf16.msra.mxu0 %v1301
        %1683 = vmatprep.subr.bf16.mxu0 0
        %1684 = vmatpush1.bf16.msra.mxu0 %v1298
        %1685 = vmatprep.subr.bf16.mxu0 0
        %1686 = vmatpush1.bf16.msra.mxu0 %v1295
        %1687 = vmatprep.subr.bf16.mxu0 0
        %1688 = vmatpush1.bf16.msra.mxu0 %v1292
        %1689 = vmatprep.subr.bf16.mxu0 0
        %1690 = vmatpush1.bf16.msra.mxu0 %v1289
        %1691 = vmatprep.subr.bf16.mxu0 0
        %1692 = vmatpush2.bf16.msra.mxu0 0
        %1693 = vmatprep.subr.bf16.mxu0 0
        %1694 = vmatpush2.bf16.msra.mxu0 0
        %1695 = vmatprep.subr.bf16.mxu0 0
        %1696 = vmatpush2.bf16.msra.mxu0 0
        %1697 = vmatprep.subr.bf16.mxu0 0
        %1698 = vmatpush2.bf16.msra.mxu0 0
        %1699 = vmatprep.subr.bf16.mxu0 0
        %1700 = vmatpush2.bf16.msra.mxu0 0
        %1701 = vmatprep.subr.bf16.mxu0 0
        %1702 = vmatpush2.bf16.msra.mxu0 0
        %1703 = vmatprep.subr.bf16.mxu0 0
        %1704 = vmatpush2.bf16.msra.mxu0 0
        %1705 = vmatprep.subr.bf16.mxu0 0
        %1706 = vmatpush2.bf16.msra.mxu0 0
        %1707 = vmatprep.mubr.bf16.mxu0 0
        %1708 = vmatmul.mubr.bf16.gmra.mxu0 %v1633
        %v1709 = vpop.f32.mrf.mxu0
        %v1710 = vadd.f32 0.0, %v1709
        %v1711 = vpop.f32.mrf.mxu0
        %v1712 = vpop.f32.mrf.mxu0
        %v1713 = vpop.f32.mrf.mxu0
        %1714 = vdwg.mxu0
        %v1715 = vadd.f32 %v1587, %v1669
        %v1716 = vxor.u32 %v1715, 2147483648
        %v1717 = vmul.f32 %v1716, 1.442695
        %v1718 = vpow.pop %v1717
        %v1719 = vadd.f32 %v1718, 1.0
        %v1720 = vrcp.pop %v1719
        %v1721 = vmul.f32 1.0, %v1720
        %v1722 = vadd.f32 %v1589, %v1671
        %v1723 = vxor.u32 %v1722, 2147483648
        %v1724 = vmul.f32 %v1723, 1.442695
        %v1725 = vpow.pop %v1724
        %v1726 = vadd.f32 %v1725, 1.0
        %v1727 = vrcp.pop %v1726
        %v1728 = vmul.f32 1.0, %v1727
        %v1729 = vadd.f32 %v1710, %v1435
        %v1730 = vmul.f32 %v1721, %v1729
        %v1731 = vadd.f32 %v1628, %v1730
        %v1732 = vtanh.pop %v1731
        %v1733 = vsub.f32 1.0, %v1728
        %v1734 = vmul.f32 %v1733, %v1732
        %v1735 = vmul.f32 %v1728, %v1444
        %v1736 = vadd.f32 %v1734, %v1735
        %v1737 = vld [vmem:[#allocation3 + $0x30] sm:$0xff]
        %v1738 = vld [vmem:[#allocation3 + $0x38] sm:$0xff]
        %v1739 = vld [vmem:[#allocation3 + $0x40] sm:$0xff]
        %1740 = vmatprep.subr.bf16.mxu0 %v779
        %1741 = vmatpush1.bf16.msra.mxu0 %v778
        %1742 = vmatprep.subr.bf16.mxu0 %v776
        %1743 = vmatpush1.bf16.msra.mxu0 %v775
        %1744 = vmatprep.subr.bf16.mxu0 %v773
        %1745 = vmatpush1.bf16.msra.mxu0 %v772
        %1746 = vmatprep.subr.bf16.mxu0 %v770
        %1747 = vmatpush1.bf16.msra.mxu0 %v769
        %1748 = vmatprep.subr.bf16.mxu0 %v767
        %1749 = vmatpush1.bf16.msra.mxu0 %v766
        %1750 = vmatprep.subr.bf16.mxu0 %v764
        %1751 = vmatpush1.bf16.msra.mxu0 %v763
        %1752 = vmatprep.subr.bf16.mxu0 %v761
        %1753 = vmatpush1.bf16.msra.mxu0 %v760
        %1754 = vmatprep.subr.bf16.mxu0 %v758
        %1755 = vmatpush1.bf16.msra.mxu0 %v757
        %1756 = vmatprep.subr.bf16.mxu0 0
        %1757 = vmatpush2.bf16.msra.mxu0 0
        %1758 = vmatprep.subr.bf16.mxu0 0
        %1759 = vmatpush2.bf16.msra.mxu0 0
        %1760 = vmatprep.subr.bf16.mxu0 0
        %1761 = vmatpush2.bf16.msra.mxu0 0
        %1762 = vmatprep.subr.bf16.mxu0 0
        %1763 = vmatpush2.bf16.msra.mxu0 0
        %1764 = vmatprep.subr.bf16.mxu0 0
        %1765 = vmatpush2.bf16.msra.mxu0 0
        %1766 = vmatprep.subr.bf16.mxu0 0
        %1767 = vmatpush2.bf16.msra.mxu0 0
        %1768 = vmatprep.subr.bf16.mxu0 0
        %1769 = vmatpush2.bf16.msra.mxu0 0
        %1770 = vmatprep.subr.bf16.mxu0 0
        %1771 = vmatpush2.bf16.msra.mxu0 0
        %1772 = vmatprep.mubr.bf16.mxu0 0
        %1773 = vmatmul.mubr.bf16.gmra.mxu0 %v1551
        %v1774 = vpop.f32.mrf.mxu0
        %v1775 = vadd.f32 0.0, %v1774
        %v1776 = vpop.f32.mrf.mxu0
        %v1777 = vadd.f32 0.0, %v1776
        %v1778 = vpop.f32.mrf.mxu0
        %v1779 = vpop.f32.mrf.mxu0
        %1780 = vdwg.mxu0
        %1781 = vmatprep.subr.bf16.mxu0 0
        %1782 = vmatpush1.bf16.msra.mxu0 %v780
        %1783 = vmatprep.subr.bf16.mxu0 0
        %1784 = vmatpush1.bf16.msra.mxu0 %v777
        %1785 = vmatprep.subr.bf16.mxu0 0
        %1786 = vmatpush1.bf16.msra.mxu0 %v774
        %1787 = vmatprep.subr.bf16.mxu0 0
        %1788 = vmatpush1.bf16.msra.mxu0 %v771
        %1789 = vmatprep.subr.bf16.mxu0 0
        %1790 = vmatpush1.bf16.msra.mxu0 %v768
        %1791 = vmatprep.subr.bf16.mxu0 0
        %1792 = vmatpush1.bf16.msra.mxu0 %v765
        %1793 = vmatprep.subr.bf16.mxu0 0
        %1794 = vmatpush1.bf16.msra.mxu0 %v762
        %1795 = vmatprep.subr.bf16.mxu0 0
        %1796 = vmatpush1.bf16.msra.mxu0 %v759
        %1797 = vmatprep.subr.bf16.mxu0 0
        %1798 = vmatpush2.bf16.msra.mxu0 0
        %1799 = vmatprep.subr.bf16.mxu0 0
        %1800 = vmatpush2.bf16.msra.mxu0 0
        %1801 = vmatprep.subr.bf16.mxu0 0
        %1802 = vmatpush2.bf16.msra.mxu0 0
        %1803 = vmatprep.subr.bf16.mxu0 0
        %1804 = vmatpush2.bf16.msra.mxu0 0
        %1805 = vmatprep.subr.bf16.mxu0 0
        %1806 = vmatpush2.bf16.msra.mxu0 0
        %1807 = vmatprep.subr.bf16.mxu0 0
        %1808 = vmatpush2.bf16.msra.mxu0 0
        %1809 = vmatprep.subr.bf16.mxu0 0
        %1810 = vmatpush2.bf16.msra.mxu0 0
        %1811 = vmatprep.subr.bf16.mxu0 0
        %1812 = vmatpush2.bf16.msra.mxu0 0
        %1813 = vmatprep.mubr.bf16.mxu0 0
        %1814 = vmatmul.mubr.bf16.gmra.mxu0 %v1551
        %v1815 = vpop.f32.mrf.mxu0
        %v1816 = vadd.f32 0.0, %v1815
        %v1817 = vpop.f32.mrf.mxu0
        %v1818 = vpop.f32.mrf.mxu0
        %v1819 = vpop.f32.mrf.mxu0
        %1820 = vdwg.mxu0
        %v1821 = vadd.f32 %v1737, %v1775
        %v1822 = vxor.u32 %v1821, 2147483648
        %v1823 = vmul.f32 %v1822, 1.442695
        %v1824 = vpow.pop %v1823
        %v1825 = vadd.f32 %v1824, 1.0
        %v1826 = vrcp.pop %v1825
        %v1827 = vmul.f32 1.0, %v1826
        %v1828 = vadd.f32 %v1738, %v1777
        %v1829 = vxor.u32 %v1828, 2147483648
        %v1830 = vmul.f32 %v1829, 1.442695
        %v1831 = vpow.pop %v1830
        %v1832 = vadd.f32 %v1831, 1.0
        %v1833 = vrcp.pop %v1832
        %v1834 = vmul.f32 1.0, %v1833
        %v1835 = vadd.f32 %v1816, %v905
        %v1836 = vmul.f32 %v1827, %v1835
        %v1837 = vadd.f32 %v1739, %v1836
        %v1838 = vtanh.pop %v1837
        %v1839 = vsub.f32 1.0, %v1834
        %v1840 = vmul.f32 %v1839, %v1838
        %v1841 = vmul.f32 %v1834, %v1550
        %v1842 = vadd.f32 %v1840, %v1841
        %v1843 = vpack.c.bf16 %v1842, %v1842
        %1844 = vmatprep.subr.bf16.mxu0 %v1067
        %1845 = vmatpush1.bf16.msra.mxu0 %v1066
        %1846 = vmatprep.subr.bf16.mxu0 %v1064
        %1847 = vmatpush1.bf16.msra.mxu0 %v1063
        %1848 = vmatprep.subr.bf16.mxu0 %v1061
        %1849 = vmatpush1.bf16.msra.mxu0 %v1060
        %1850 = vmatprep.subr.bf16.mxu0 %v1058
        %1851 = vmatpush1.bf16.msra.mxu0 %v1057
        %1852 = vmatprep.subr.bf16.mxu0 %v1055
        %1853 = vmatpush1.bf16.msra.mxu0 %v1054
        %1854 = vmatprep.subr.bf16.mxu0 %v1052
        %1855 = vmatpush1.bf16.msra.mxu0 %v1051
        %1856 = vmatprep.subr.bf16.mxu0 %v1049
        %1857 = vmatpush1.bf16.msra.mxu0 %v1048
        %1858 = vmatprep.subr.bf16.mxu0 %v1046
        %1859 = vmatpush1.bf16.msra.mxu0 %v1045
        %1860 = vmatprep.subr.bf16.mxu0 0
        %1861 = vmatpush2.bf16.msra.mxu0 0
        %1862 = vmatprep.subr.bf16.mxu0 0
        %1863 = vmatpush2.bf16.msra.mxu0 0
        %1864 = vmatprep.subr.bf16.mxu0 0
        %1865 = vmatpush2.bf16.msra.mxu0 0
        %1866 = vmatprep.subr.bf16.mxu0 0
        %1867 = vmatpush2.bf16.msra.mxu0 0
        %1868 = vmatprep.subr.bf16.mxu0 0
        %1869 = vmatpush2.bf16.msra.mxu0 0
        %1870 = vmatprep.subr.bf16.mxu0 0
        %1871 = vmatpush2.bf16.msra.mxu0 0
        %1872 = vmatprep.subr.bf16.mxu0 0
        %1873 = vmatpush2.bf16.msra.mxu0 0
        %1874 = vmatprep.subr.bf16.mxu0 0
        %1875 = vmatpush2.bf16.msra.mxu0 0
        %1876 = vmatprep.mubr.bf16.mxu0 0
        %1877 = vmatmul.mubr.bf16.gmra.mxu0 %v1843
        %v1878 = vpop.f32.mrf.mxu0
        %v1879 = vadd.f32 %v953, %v1878
        %v1880 = vpop.f32.mrf.mxu0
        %v1881 = vadd.f32 %v957, %v1880
        %v1882 = vpop.f32.mrf.mxu0
        %v1883 = vpop.f32.mrf.mxu0
        %1884 = vdwg.mxu0
        %1885 = vmatprep.subr.bf16.mxu0 0
        %1886 = vmatpush1.bf16.msra.mxu0 %v1068
        %1887 = vmatprep.subr.bf16.mxu0 0
        %1888 = vmatpush1.bf16.msra.mxu0 %v1065
        %1889 = vmatprep.subr.bf16.mxu0 0
        %1890 = vmatpush1.bf16.msra.mxu0 %v1062
        %1891 = vmatprep.subr.bf16.mxu0 0
        %1892 = vmatpush1.bf16.msra.mxu0 %v1059
        %1893 = vmatprep.subr.bf16.mxu0 0
        %1894 = vmatpush1.bf16.msra.mxu0 %v1056
        %1895 = vmatprep.subr.bf16.mxu0 0
        %1896 = vmatpush1.bf16.msra.mxu0 %v1053
        %1897 = vmatprep.subr.bf16.mxu0 0
        %1898 = vmatpush1.bf16.msra.mxu0 %v1050
        %1899 = vmatprep.subr.bf16.mxu0 0
        %1900 = vmatpush1.bf16.msra.mxu0 %v1047
        %1901 = vmatprep.subr.bf16.mxu0 0
        %1902 = vmatpush2.bf16.msra.mxu0 0
        %1903 = vmatprep.subr.bf16.mxu0 0
        %1904 = vmatpush2.bf16.msra.mxu0 0
        %1905 = vmatprep.subr.bf16.mxu0 0
        %1906 = vmatpush2.bf16.msra.mxu0 0
        %1907 = vmatprep.subr.bf16.mxu0 0
        %1908 = vmatpush2.bf16.msra.mxu0 0
        %1909 = vmatprep.subr.bf16.mxu0 0
        %1910 = vmatpush2.bf16.msra.mxu0 0
        %1911 = vmatprep.subr.bf16.mxu0 0
        %1912 = vmatpush2.bf16.msra.mxu0 0
        %1913 = vmatprep.subr.bf16.mxu0 0
        %1914 = vmatpush2.bf16.msra.mxu0 0
        %1915 = vmatprep.subr.bf16.mxu0 0
        %1916 = vmatpush2.bf16.msra.mxu0 0
        %1917 = vmatprep.mubr.bf16.mxu0 0
        %1918 = vmatmul.mubr.bf16.gmra.mxu0 %v1843
        %v1919 = vpop.f32.mrf.mxu0
        %v1920 = vadd.f32 %v961, %v1919
        %v1921 = vpop.f32.mrf.mxu0
        %v1922 = vpop.f32.mrf.mxu0
        %v1923 = vpop.f32.mrf.mxu0
        %1924 = vdwg.mxu0
        %v1925 = vpack.c.bf16 %v1736, %v1736
        %1926 = vmatprep.subr.bf16.mxu0 %v1309
        %1927 = vmatpush1.bf16.msra.mxu0 %v1308
        %1928 = vmatprep.subr.bf16.mxu0 %v1306
        %1929 = vmatpush1.bf16.msra.mxu0 %v1305
        %1930 = vmatprep.subr.bf16.mxu0 %v1303
        %1931 = vmatpush1.bf16.msra.mxu0 %v1302
        %1932 = vmatprep.subr.bf16.mxu0 %v1300
        %1933 = vmatpush1.bf16.msra.mxu0 %v1299
        %1934 = vmatprep.subr.bf16.mxu0 %v1297
        %1935 = vmatpush1.bf16.msra.mxu0 %v1296
        %1936 = vmatprep.subr.bf16.mxu0 %v1294
        %1937 = vmatpush1.bf16.msra.mxu0 %v1293
        %1938 = vmatprep.subr.bf16.mxu0 %v1291
        %1939 = vmatpush1.bf16.msra.mxu0 %v1290
        %1940 = vmatprep.subr.bf16.mxu0 %v1288
        %1941 = vmatpush1.bf16.msra.mxu0 %v1287
        %1942 = vmatprep.subr.bf16.mxu0 0
        %1943 = vmatpush2.bf16.msra.mxu0 0
        %1944 = vmatprep.subr.bf16.mxu0 0
        %1945 = vmatpush2.bf16.msra.mxu0 0
        %1946 = vmatprep.subr.bf16.mxu0 0
        %1947 = vmatpush2.bf16.msra.mxu0 0
        %1948 = vmatprep.subr.bf16.mxu0 0
        %1949 = vmatpush2.bf16.msra.mxu0 0
        %1950 = vmatprep.subr.bf16.mxu0 0
        %1951 = vmatpush2.bf16.msra.mxu0 0
        %1952 = vmatprep.subr.bf16.mxu0 0
        %1953 = vmatpush2.bf16.msra.mxu0 0
        %1954 = vmatprep.subr.bf16.mxu0 0
        %1955 = vmatpush2.bf16.msra.mxu0 0
        %1956 = vmatprep.subr.bf16.mxu0 0
        %1957 = vmatpush2.bf16.msra.mxu0 0
        %1958 = vmatprep.mubr.bf16.mxu0 0
        %1959 = vmatmul.mubr.bf16.gmra.mxu0 %v1925
        %v1960 = vpop.f32.mrf.mxu0
        %v1961 = vadd.f32 0.0, %v1960
        %v1962 = vpop.f32.mrf.mxu0
        %v1963 = vadd.f32 0.0, %v1962
        %v1964 = vpop.f32.mrf.mxu0
        %v1965 = vpop.f32.mrf.mxu0
        %1966 = vdwg.mxu0
        %1967 = vmatprep.subr.bf16.mxu0 0
        %1968 = vmatpush1.bf16.msra.mxu0 %v1310
        %1969 = vmatprep.subr.bf16.mxu0 0
        %1970 = vmatpush1.bf16.msra.mxu0 %v1307
        %1971 = vmatprep.subr.bf16.mxu0 0
        %1972 = vmatpush1.bf16.msra.mxu0 %v1304
        %1973 = vmatprep.subr.bf16.mxu0 0
        %1974 = vmatpush1.bf16.msra.mxu0 %v1301
        %1975 = vmatprep.subr.bf16.mxu0 0
        %1976 = vmatpush1.bf16.msra.mxu0 %v1298
        %1977 = vmatprep.subr.bf16.mxu0 0
        %1978 = vmatpush1.bf16.msra.mxu0 %v1295
        %1979 = vmatprep.subr.bf16.mxu0 0
        %1980 = vmatpush1.bf16.msra.mxu0 %v1292
        %1981 = vmatprep.subr.bf16.mxu0 0
        %1982 = vmatpush1.bf16.msra.mxu0 %v1289
        %1983 = vmatprep.subr.bf16.mxu0 0
        %1984 = vmatpush2.bf16.msra.mxu0 0
        %1985 = vmatprep.subr.bf16.mxu0 0
        %1986 = vmatpush2.bf16.msra.mxu0 0
        %1987 = vmatprep.subr.bf16.mxu0 0
        %1988 = vmatpush2.bf16.msra.mxu0 0
        %1989 = vmatprep.subr.bf16.mxu0 0
        %1990 = vmatpush2.bf16.msra.mxu0 0
        %1991 = vmatprep.subr.bf16.mxu0 0
        %1992 = vmatpush2.bf16.msra.mxu0 0
        %1993 = vmatprep.subr.bf16.mxu0 0
        %1994 = vmatpush2.bf16.msra.mxu0 0
        %1995 = vmatprep.subr.bf16.mxu0 0
        %1996 = vmatpush2.bf16.msra.mxu0 0
        %1997 = vmatprep.subr.bf16.mxu0 0
        %1998 = vmatpush2.bf16.msra.mxu0 0
        %1999 = vmatprep.mubr.bf16.mxu0 0
        %2000 = vmatmul.mubr.bf16.gmra.mxu0 %v1925
        %v2001 = vpop.f32.mrf.mxu0
        %v2002 = vadd.f32 0.0, %v2001
        %v2003 = vpop.f32.mrf.mxu0
        %v2004 = vpop.f32.mrf.mxu0
        %v2005 = vpop.f32.mrf.mxu0
        %2006 = vdwg.mxu0
        %v2007 = vadd.f32 %v1879, %v1961
        %v2008 = vxor.u32 %v2007, 2147483648
        %v2009 = vmul.f32 %v2008, 1.442695
        %v2010 = vpow.pop %v2009
        %v2011 = vadd.f32 %v2010, 1.0
        %v2012 = vrcp.pop %v2011
        %v2013 = vmul.f32 1.0, %v2012
        %v2014 = vadd.f32 %v1881, %v1963
        %v2015 = vxor.u32 %v2014, 2147483648
        %v2016 = vmul.f32 %v2015, 1.442695
        %v2017 = vpow.pop %v2016
        %v2018 = vadd.f32 %v2017, 1.0
        %v2019 = vrcp.pop %v2018
        %v2020 = vmul.f32 1.0, %v2019
        %v2021 = vadd.f32 %v2002, %v1435
        %v2022 = vmul.f32 %v2013, %v2021
        %v2023 = vadd.f32 %v1920, %v2022
        %v2024 = vtanh.pop %v2023
        %v2025 = vsub.f32 1.0, %v2020
        %v2026 = vmul.f32 %v2025, %v2024
        %v2027 = vmul.f32 %v2020, %v1736
        %v2028 = vadd.f32 %v2026, %v2027
        %v2029 = vld [vmem:[#allocation3 + $0x48] sm:$0xff]
        %v2030 = vld [vmem:[#allocation3 + $0x50] sm:$0xff]
        %v2031 = vld [vmem:[#allocation3 + $0x58] sm:$0xff]
        %2032 = vmatprep.subr.bf16.mxu0 %v779
        %2033 = vmatpush1.bf16.msra.mxu0 %v778
        %2034 = vmatprep.subr.bf16.mxu0 %v776
        %2035 = vmatpush1.bf16.msra.mxu0 %v775
        %2036 = vmatprep.subr.bf16.mxu0 %v773
        %2037 = vmatpush1.bf16.msra.mxu0 %v772
        %2038 = vmatprep.subr.bf16.mxu0 %v770
        %2039 = vmatpush1.bf16.msra.mxu0 %v769
        %2040 = vmatprep.subr.bf16.mxu0 %v767
        %2041 = vmatpush1.bf16.msra.mxu0 %v766
        %2042 = vmatprep.subr.bf16.mxu0 %v764
        %2043 = vmatpush1.bf16.msra.mxu0 %v763
        %2044 = vmatprep.subr.bf16.mxu0 %v761
        %2045 = vmatpush1.bf16.msra.mxu0 %v760
        %2046 = vmatprep.subr.bf16.mxu0 %v758
        %2047 = vmatpush1.bf16.msra.mxu0 %v757
        %2048 = vmatprep.subr.bf16.mxu0 0
        %2049 = vmatpush2.bf16.msra.mxu0 0
        %2050 = vmatprep.subr.bf16.mxu0 0
        %2051 = vmatpush2.bf16.msra.mxu0 0
        %2052 = vmatprep.subr.bf16.mxu0 0
        %2053 = vmatpush2.bf16.msra.mxu0 0
        %2054 = vmatprep.subr.bf16.mxu0 0
        %2055 = vmatpush2.bf16.msra.mxu0 0
        %2056 = vmatprep.subr.bf16.mxu0 0
        %2057 = vmatpush2.bf16.msra.mxu0 0
        %2058 = vmatprep.subr.bf16.mxu0 0
        %2059 = vmatpush2.bf16.msra.mxu0 0
        %2060 = vmatprep.subr.bf16.mxu0 0
        %2061 = vmatpush2.bf16.msra.mxu0 0
        %2062 = vmatprep.subr.bf16.mxu0 0
        %2063 = vmatpush2.bf16.msra.mxu0 0
        %2064 = vmatprep.mubr.bf16.mxu0 0
        %2065 = vmatmul.mubr.bf16.gmra.mxu0 %v1843
        %v2066 = vpop.f32.mrf.mxu0
        %v2067 = vadd.f32 0.0, %v2066
        %v2068 = vpop.f32.mrf.mxu0
        %v2069 = vadd.f32 0.0, %v2068
        %v2070 = vpop.f32.mrf.mxu0
        %v2071 = vpop.f32.mrf.mxu0
        %2072 = vdwg.mxu0
        %2073 = vmatprep.subr.bf16.mxu0 0
        %2074 = vmatpush1.bf16.msra.mxu0 %v780
        %2075 = vmatprep.subr.bf16.mxu0 0
        %2076 = vmatpush1.bf16.msra.mxu0 %v777
        %2077 = vmatprep.subr.bf16.mxu0 0
        %2078 = vmatpush1.bf16.msra.mxu0 %v774
        %2079 = vmatprep.subr.bf16.mxu0 0
        %2080 = vmatpush1.bf16.msra.mxu0 %v771
        %2081 = vmatprep.subr.bf16.mxu0 0
        %2082 = vmatpush1.bf16.msra.mxu0 %v768
        %2083 = vmatprep.subr.bf16.mxu0 0
        %2084 = vmatpush1.bf16.msra.mxu0 %v765
        %2085 = vmatprep.subr.bf16.mxu0 0
        %2086 = vmatpush1.bf16.msra.mxu0 %v762
        %2087 = vmatprep.subr.bf16.mxu0 0
        %2088 = vmatpush1.bf16.msra.mxu0 %v759
        %2089 = vmatprep.subr.bf16.mxu0 0
        %2090 = vmatpush2.bf16.msra.mxu0 0
        %2091 = vmatprep.subr.bf16.mxu0 0
        %2092 = vmatpush2.bf16.msra.mxu0 0
        %2093 = vmatprep.subr.bf16.mxu0 0
        %2094 = vmatpush2.bf16.msra.mxu0 0
        %2095 = vmatprep.subr.bf16.mxu0 0
        %2096 = vmatpush2.bf16.msra.mxu0 0
        %2097 = vmatprep.subr.bf16.mxu0 0
        %2098 = vmatpush2.bf16.msra.mxu0 0
        %2099 = vmatprep.subr.bf16.mxu0 0
        %2100 = vmatpush2.bf16.msra.mxu0 0
        %2101 = vmatprep.subr.bf16.mxu0 0
        %2102 = vmatpush2.bf16.msra.mxu0 0
        %2103 = vmatprep.subr.bf16.mxu0 0
        %2104 = vmatpush2.bf16.msra.mxu0 0
        %2105 = vmatprep.mubr.bf16.mxu0 0
        %2106 = vmatmul.mubr.bf16.gmra.mxu0 %v1843
        %v2107 = vpop.f32.mrf.mxu0
        %v2108 = vadd.f32 0.0, %v2107
        %v2109 = vpop.f32.mrf.mxu0
        %v2110 = vpop.f32.mrf.mxu0
        %v2111 = vpop.f32.mrf.mxu0
        %2112 = vdwg.mxu0
        %v2113 = vadd.f32 %v2029, %v2067
        %v2114 = vxor.u32 %v2113, 2147483648
        %v2115 = vmul.f32 %v2114, 1.442695
        %v2116 = vpow.pop %v2115
        %v2117 = vadd.f32 %v2116, 1.0
        %v2118 = vrcp.pop %v2117
        %v2119 = vmul.f32 1.0, %v2118
        %v2120 = vadd.f32 %v2030, %v2069
        %v2121 = vxor.u32 %v2120, 2147483648
        %v2122 = vmul.f32 %v2121, 1.442695
        %v2123 = vpow.pop %v2122
        %v2124 = vadd.f32 %v2123, 1.0
        %v2125 = vrcp.pop %v2124
        %v2126 = vmul.f32 1.0, %v2125
        %v2127 = vadd.f32 %v2108, %v905
        %v2128 = vmul.f32 %v2119, %v2127
        %v2129 = vadd.f32 %v2031, %v2128
        %v2130 = vtanh.pop %v2129
        %v2131 = vsub.f32 1.0, %v2126
        %v2132 = vmul.f32 %v2131, %v2130
        %v2133 = vmul.f32 %v2126, %v1842
        %v2134 = vadd.f32 %v2132, %v2133
        %v2135 = vpack.c.bf16 %v2134, %v2134
        %2136 = vmatprep.subr.bf16.mxu0 %v1067
        %2137 = vmatpush1.bf16.msra.mxu0 %v1066
        %2138 = vmatprep.subr.bf16.mxu0 %v1064
        %2139 = vmatpush1.bf16.msra.mxu0 %v1063
        %2140 = vmatprep.subr.bf16.mxu0 %v1061
        %2141 = vmatpush1.bf16.msra.mxu0 %v1060
        %2142 = vmatprep.subr.bf16.mxu0 %v1058
        %2143 = vmatpush1.bf16.msra.mxu0 %v1057
        %2144 = vmatprep.subr.bf16.mxu0 %v1055
        %2145 = vmatpush1.bf16.msra.mxu0 %v1054
        %2146 = vmatprep.subr.bf16.mxu0 %v1052
        %2147 = vmatpush1.bf16.msra.mxu0 %v1051
        %2148 = vmatprep.subr.bf16.mxu0 %v1049
        %2149 = vmatpush1.bf16.msra.mxu0 %v1048
        %2150 = vmatprep.subr.bf16.mxu0 %v1046
        %2151 = vmatpush1.bf16.msra.mxu0 %v1045
        %2152 = vmatprep.subr.bf16.mxu0 0
        %2153 = vmatpush2.bf16.msra.mxu0 0
        %2154 = vmatprep.subr.bf16.mxu0 0
        %2155 = vmatpush2.bf16.msra.mxu0 0
        %2156 = vmatprep.subr.bf16.mxu0 0
        %2157 = vmatpush2.bf16.msra.mxu0 0
        %2158 = vmatprep.subr.bf16.mxu0 0
        %2159 = vmatpush2.bf16.msra.mxu0 0
        %2160 = vmatprep.subr.bf16.mxu0 0
        %2161 = vmatpush2.bf16.msra.mxu0 0
        %2162 = vmatprep.subr.bf16.mxu0 0
        %2163 = vmatpush2.bf16.msra.mxu0 0
        %2164 = vmatprep.subr.bf16.mxu0 0
        %2165 = vmatpush2.bf16.msra.mxu0 0
        %2166 = vmatprep.subr.bf16.mxu0 0
        %2167 = vmatpush2.bf16.msra.mxu0 0
        %2168 = vmatprep.mubr.bf16.mxu0 0
        %2169 = vmatmul.mubr.bf16.gmra.mxu0 %v2135
        %v2170 = vpop.f32.mrf.mxu0
        %v2171 = vadd.f32 %v953, %v2170
        %v2172 = vpop.f32.mrf.mxu0
        %v2173 = vadd.f32 %v957, %v2172
        %v2174 = vpop.f32.mrf.mxu0
        %v2175 = vpop.f32.mrf.mxu0
        %2176 = vdwg.mxu0
        %2177 = vmatprep.subr.bf16.mxu0 0
        %2178 = vmatpush1.bf16.msra.mxu0 %v1068
        %2179 = vmatprep.subr.bf16.mxu0 0
        %2180 = vmatpush1.bf16.msra.mxu0 %v1065
        %2181 = vmatprep.subr.bf16.mxu0 0
        %2182 = vmatpush1.bf16.msra.mxu0 %v1062
        %2183 = vmatprep.subr.bf16.mxu0 0
        %2184 = vmatpush1.bf16.msra.mxu0 %v1059
        %2185 = vmatprep.subr.bf16.mxu0 0
        %2186 = vmatpush1.bf16.msra.mxu0 %v1056
        %2187 = vmatprep.subr.bf16.mxu0 0
        %2188 = vmatpush1.bf16.msra.mxu0 %v1053
        %2189 = vmatprep.subr.bf16.mxu0 0
        %2190 = vmatpush1.bf16.msra.mxu0 %v1050
        %2191 = vmatprep.subr.bf16.mxu0 0
        %2192 = vmatpush1.bf16.msra.mxu0 %v1047
        %2193 = vmatprep.subr.bf16.mxu0 0
        %2194 = vmatpush2.bf16.msra.mxu0 0
        %2195 = vmatprep.subr.bf16.mxu0 0
        %2196 = vmatpush2.bf16.msra.mxu0 0
        %2197 = vmatprep.subr.bf16.mxu0 0
        %2198 = vmatpush2.bf16.msra.mxu0 0
        %2199 = vmatprep.subr.bf16.mxu0 0
        %2200 = vmatpush2.bf16.msra.mxu0 0
        %2201 = vmatprep.subr.bf16.mxu0 0
        %2202 = vmatpush2.bf16.msra.mxu0 0
        %2203 = vmatprep.subr.bf16.mxu0 0
        %2204 = vmatpush2.bf16.msra.mxu0 0
        %2205 = vmatprep.subr.bf16.mxu0 0
        %2206 = vmatpush2.bf16.msra.mxu0 0
        %2207 = vmatprep.subr.bf16.mxu0 0
        %2208 = vmatpush2.bf16.msra.mxu0 0
        %2209 = vmatprep.mubr.bf16.mxu0 0
        %2210 = vmatmul.mubr.bf16.gmra.mxu0 %v2135
        %v2211 = vpop.f32.mrf.mxu0
        %v2212 = vadd.f32 %v961, %v2211
        %v2213 = vpop.f32.mrf.mxu0
        %v2214 = vpop.f32.mrf.mxu0
        %v2215 = vpop.f32.mrf.mxu0
        %2216 = vdwg.mxu0
        %v2217 = vpack.c.bf16 %v2028, %v2028
        %2218 = vmatprep.subr.bf16.mxu0 %v1309
        %2219 = vmatpush1.bf16.msra.mxu0 %v1308
        %2220 = vmatprep.subr.bf16.mxu0 %v1306
        %2221 = vmatpush1.bf16.msra.mxu0 %v1305
        %2222 = vmatprep.subr.bf16.mxu0 %v1303
        %2223 = vmatpush1.bf16.msra.mxu0 %v1302
        %2224 = vmatprep.subr.bf16.mxu0 %v1300
        %2225 = vmatpush1.bf16.msra.mxu0 %v1299
        %2226 = vmatprep.subr.bf16.mxu0 %v1297
        %2227 = vmatpush1.bf16.msra.mxu0 %v1296
        %2228 = vmatprep.subr.bf16.mxu0 %v1294
        %2229 = vmatpush1.bf16.msra.mxu0 %v1293
        %2230 = vmatprep.subr.bf16.mxu0 %v1291
        %2231 = vmatpush1.bf16.msra.mxu0 %v1290
        %2232 = vmatprep.subr.bf16.mxu0 %v1288
        %2233 = vmatpush1.bf16.msra.mxu0 %v1287
        %2234 = vmatprep.subr.bf16.mxu0 0
        %2235 = vmatpush2.bf16.msra.mxu0 0
        %2236 = vmatprep.subr.bf16.mxu0 0
        %2237 = vmatpush2.bf16.msra.mxu0 0
        %2238 = vmatprep.subr.bf16.mxu0 0
        %2239 = vmatpush2.bf16.msra.mxu0 0
        %2240 = vmatprep.subr.bf16.mxu0 0
        %2241 = vmatpush2.bf16.msra.mxu0 0
        %2242 = vmatprep.subr.bf16.mxu0 0
        %2243 = vmatpush2.bf16.msra.mxu0 0
        %2244 = vmatprep.subr.bf16.mxu0 0
        %2245 = vmatpush2.bf16.msra.mxu0 0
        %2246 = vmatprep.subr.bf16.mxu0 0
        %2247 = vmatpush2.bf16.msra.mxu0 0
        %2248 = vmatprep.subr.bf16.mxu0 0
        %2249 = vmatpush2.bf16.msra.mxu0 0
        %2250 = vmatprep.mubr.bf16.mxu0 0
        %2251 = vmatmul.mubr.bf16.gmra.mxu0 %v2217
        %v2252 = vpop.f32.mrf.mxu0
        %v2253 = vadd.f32 0.0, %v2252
        %v2254 = vpop.f32.mrf.mxu0
        %v2255 = vadd.f32 0.0, %v2254
        %v2256 = vpop.f32.mrf.mxu0
        %v2257 = vpop.f32.mrf.mxu0
        %2258 = vdwg.mxu0
        %2259 = vmatprep.subr.bf16.mxu0 0
        %2260 = vmatpush1.bf16.msra.mxu0 %v1310
        %2261 = vmatprep.subr.bf16.mxu0 0
        %2262 = vmatpush1.bf16.msra.mxu0 %v1307
        %2263 = vmatprep.subr.bf16.mxu0 0
        %2264 = vmatpush1.bf16.msra.mxu0 %v1304
        %2265 = vmatprep.subr.bf16.mxu0 0
        %2266 = vmatpush1.bf16.msra.mxu0 %v1301
        %2267 = vmatprep.subr.bf16.mxu0 0
        %2268 = vmatpush1.bf16.msra.mxu0 %v1298
        %2269 = vmatprep.subr.bf16.mxu0 0
        %2270 = vmatpush1.bf16.msra.mxu0 %v1295
        %2271 = vmatprep.subr.bf16.mxu0 0
        %2272 = vmatpush1.bf16.msra.mxu0 %v1292
        %2273 = vmatprep.subr.bf16.mxu0 0
        %2274 = vmatpush1.bf16.msra.mxu0 %v1289
        %2275 = vmatprep.subr.bf16.mxu0 0
        %2276 = vmatpush2.bf16.msra.mxu0 0
        %2277 = vmatprep.subr.bf16.mxu0 0
        %2278 = vmatpush2.bf16.msra.mxu0 0
        %2279 = vmatprep.subr.bf16.mxu0 0
        %2280 = vmatpush2.bf16.msra.mxu0 0
        %2281 = vmatprep.subr.bf16.mxu0 0
        %2282 = vmatpush2.bf16.msra.mxu0 0
        %2283 = vmatprep.subr.bf16.mxu0 0
        %2284 = vmatpush2.bf16.msra.mxu0 0
        %2285 = vmatprep.subr.bf16.mxu0 0
        %2286 = vmatpush2.bf16.msra.mxu0 0
        %2287 = vmatprep.subr.bf16.mxu0 0
        %2288 = vmatpush2.bf16.msra.mxu0 0
        %2289 = vmatprep.subr.bf16.mxu0 0
        %2290 = vmatpush2.bf16.msra.mxu0 0
        %2291 = vmatprep.mubr.bf16.mxu0 0
        %2292 = vmatmul.mubr.bf16.gmra.mxu0 %v2217
        %v2293 = vpop.f32.mrf.mxu0
        %v2294 = vadd.f32 0.0, %v2293
        %v2295 = vpop.f32.mrf.mxu0
        %v2296 = vpop.f32.mrf.mxu0
        %v2297 = vpop.f32.mrf.mxu0
        %2298 = vdwg.mxu0
        %v2299 = vadd.f32 %v2171, %v2253
        %v2300 = vxor.u32 %v2299, 2147483648
        %v2301 = vmul.f32 %v2300, 1.442695
        %v2302 = vpow.pop %v2301
        %v2303 = vadd.f32 %v2302, 1.0
        %v2304 = vrcp.pop %v2303
        %v2305 = vmul.f32 1.0, %v2304
        %v2306 = vadd.f32 %v2173, %v2255
        %v2307 = vxor.u32 %v2306, 2147483648
        %v2308 = vmul.f32 %v2307, 1.442695
        %v2309 = vpow.pop %v2308
        %v2310 = vadd.f32 %v2309, 1.0
        %v2311 = vrcp.pop %v2310
        %v2312 = vmul.f32 1.0, %v2311
        %v2313 = vadd.f32 %v2294, %v1435
        %v2314 = vmul.f32 %v2305, %v2313
        %v2315 = vadd.f32 %v2212, %v2314
        %v2316 = vtanh.pop %v2315
        %v2317 = vsub.f32 1.0, %v2312
        %v2318 = vmul.f32 %v2317, %v2316
        %v2319 = vmul.f32 %v2312, %v2028
        %v2320 = vadd.f32 %v2318, %v2319
        %2321 = vst [vmem:[#allocation2] sm:$0xff] %v2134
        %2322 = vst [vmem:[%s639] sm:$0xff] %v2320
        %p2323 = scmp.eq.s32.totalorder %s28, 1
        // Predicated region
        $region85: #{tpu_custom_call.1} parent=63 // pred_check
          %p2324 = pneg %p2323
        $region86: #{tpu_custom_call.1} parent=63 // pred_check_branch
          %2326 = sbr.rel (%p2324) target = $region88
        $region87: #{tpu_custom_call.1} parent=63 // pred_region
          %v2327 = vpack.c.bf16 %v2320, %v2320
          %v2328 = vld [vmem:[#allocation10] sm:$0xf]
          %v2329 = vld [vmem:[#allocation10 + $0x4] sm:$0xf]
          %v2330 = vld [vmem:[#allocation10 + $0x8] sm:$0xf]
          %v2331 = vld [vmem:[#allocation10 + $0xc] sm:$0xf]
          %v2332 = vld [vmem:[#allocation10 + $0x10] sm:$0xf]
          %v2333 = vld [vmem:[#allocation10 + $0x14] sm:$0xf]
          %v2334 = vld [vmem:[#allocation10 + $0x18] sm:$0xf]
          %v2335 = vld [vmem:[#allocation10 + $0x1c] sm:$0xf]
          %v2336 = vld [vmem:[#allocation10 + $0x20] sm:$0xf]
          %v2337 = vld [vmem:[#allocation10 + $0x24] sm:$0xf]
          %v2338 = vld [vmem:[#allocation10 + $0x28] sm:$0xf]
          %v2339 = vld [vmem:[#allocation10 + $0x2c] sm:$0xf]
          %v2340 = vld [vmem:[#allocation10 + $0x30] sm:$0xf]
          %v2341 = vld [vmem:[#allocation10 + $0x34] sm:$0xf]
          %v2342 = vld [vmem:[#allocation10 + $0x38] sm:$0xf]
          %v2343 = vld [vmem:[#allocation10 + $0x3c] sm:$0xf]
          %v2344 = vld [vmem:[%s10] sm:$0x1]
          %v2346 = vlaneseq
          %v2347 = vshrl.u32 %v2346, 7
          %v2348 = vsub.s32 0, %v2347
          %v2349 = vrot.slane %v2344, %v2348
          %v2367 = vunpack.c.l.b16 %v2328
          %v2368 = vunpack.c.l.b16 %v2329
          %v2369 = vunpack.c.l.b16 %v2330
          %v2370 = vunpack.c.l.b16 %v2331
          %v2371 = vunpack.c.l.b16 %v2332
          %v2372 = vunpack.c.l.b16 %v2333
          %v2373 = vunpack.c.l.b16 %v2334
          %v2374 = vunpack.c.l.b16 %v2335
          %v2375 = vunpack.c.l.b16 %v2336
          %v2376 = vunpack.c.l.b16 %v2337
          %v2377 = vunpack.c.l.b16 %v2338
          %v2378 = vunpack.c.l.b16 %v2339
          %v2379 = vunpack.c.l.b16 %v2340
          %v2380 = vunpack.c.l.b16 %v2341
          %v2381 = vunpack.c.l.b16 %v2342
          %v2382 = vunpack.c.l.b16 %v2343
          %v2383 = vpack.c.b16 %v2368, %v2367
          %v2384 = vpack.c.b16 %v2370, %v2369
          %v2385 = vpack.c.b16 %v2372, %v2371
          %v2386 = vpack.c.b16 %v2374, %v2373
          %v2387 = vpack.c.b16 %v2376, %v2375
          %v2388 = vpack.c.b16 %v2378, %v2377
          %v2389 = vpack.c.b16 %v2380, %v2379
          %v2390 = vpack.c.b16 %v2382, %v2381
          %2399 = vmatprep.subr.bf16.mxu0 0
          %2400 = vmatpush1.bf16.msra.mxu0 %v2390
          %2401 = vmatprep.subr.bf16.mxu0 0
          %2402 = vmatpush1.bf16.msra.mxu0 %v2389
          %2403 = vmatprep.subr.bf16.mxu0 0
          %2404 = vmatpush1.bf16.msra.mxu0 %v2388
          %2405 = vmatprep.subr.bf16.mxu0 0
          %2406 = vmatpush1.bf16.msra.mxu0 %v2387
          %2407 = vmatprep.subr.bf16.mxu0 0
          %2408 = vmatpush1.bf16.msra.mxu0 %v2386
          %2409 = vmatprep.subr.bf16.mxu0 0
          %2410 = vmatpush1.bf16.msra.mxu0 %v2385
          %2411 = vmatprep.subr.bf16.mxu0 0
          %2412 = vmatpush1.bf16.msra.mxu0 %v2384
          %2413 = vmatprep.subr.bf16.mxu0 0
          %2414 = vmatpush1.bf16.msra.mxu0 %v2383
          %2415 = vmatprep.subr.bf16.mxu0 0
          %2416 = vmatpush2.bf16.msra.mxu0 0
          %2417 = vmatprep.subr.bf16.mxu0 0
          %2418 = vmatpush2.bf16.msra.mxu0 0
          %2419 = vmatprep.subr.bf16.mxu0 0
          %2420 = vmatpush2.bf16.msra.mxu0 0
          %2421 = vmatprep.subr.bf16.mxu0 0
          %2422 = vmatpush2.bf16.msra.mxu0 0
          %2423 = vmatprep.subr.bf16.mxu0 0
          %2424 = vmatpush2.bf16.msra.mxu0 0
          %2425 = vmatprep.subr.bf16.mxu0 0
          %2426 = vmatpush2.bf16.msra.mxu0 0
          %2427 = vmatprep.subr.bf16.mxu0 0
          %2428 = vmatpush2.bf16.msra.mxu0 0
          %2429 = vmatprep.subr.bf16.mxu0 0
          %2430 = vmatpush2.bf16.msra.mxu0 0
          %2431 = vmatprep.mubr.bf16.mxu0 0
          %2432 = vmatmul.mubr.bf16.gmra.mxu0 %v2327
          %v2433 = vpop.f32.mrf.mxu0
          %v2434 = vadd.f32 %v2349, %v2433
          %v2435 = vpop.f32.mrf.mxu0
          %v2436 = vpop.f32.mrf.mxu0
          %v2437 = vpop.f32.mrf.mxu0
          %2438 = vdwg.mxu0
          %2439 = vmax.xlane.f32.xlu0 %v2434
          %v2440 = vpop.xlane.xlu0 %2439
          %v2441 = vsub.f32 %v2434, %v2440
          %v2442 = vmul.f32 %v2441, 1.442695
          %v2443 = vpow.pop %v2442
          %2444 = vadd.xlane.f32.xlu0 %v2443
          %v2445 = vpop.xlane.xlu0 %2444
          %v2446 = vlog2.pop %v2445
          %v2447 = vmul.f32 %v2446, 0.6931472
          %v2448 = vadd.f32 %v2440, %v2447
          %v2449 = vsub.f32 %v2434, %v2448
          %2450 = vst [vmem:[#allocation12] sm:$0xff] %v2449
          %v2451 = vlaneseq
          %v2452 = vand.u32 %v2451, 127
          %vm2453 = vcmp.eq.f32.partialorder %v2434, %v2440
          %v2454 = vsel %vm2453, %v2452, 128
          %v2455 = vand.u32 %v2454, 65535
          %v2456 = vshra.s32 %v2454, 16
          %v2457 = vcvt.s32.f32 %v2455
          %v2458 = vcvt.s32.f32 %v2456
          %2459 = vmin.xlane.f32.xlu0 %v2458
          %v2460 = vpop.xlane.xlu0 %2459
          %vm2461 = vcmp.eq.f32.partialorder %v2458, %v2460
          %v2462 = vsel %vm2461, %v2457, inf
          %2463 = vmin.xlane.f32.xlu0 %v2462
          %v2464 = vpop.xlane.xlu0 %2463
          %v2465 = vcvt.f32.s32 %v2464
          %v2466 = vcvt.f32.s32 %v2460
          %v2467 = vshll.u32 %v2466, 16
          %v2468 = vadd.s32 %v2467, %v2465
          %vm2469 = vcmask 7168
          %2470 = vst.msk [vmem:[%s11] sm:$0xff] %vm2469, %v2468
        $region88: #{tpu_custom_call.1} parent=63 // pred_fallthru
          _
        // Predicated region
        $region89: #{tpu_custom_call.1} parent=63 // pred_check
          %p2471 = pneg %p277
        $region90: #{tpu_custom_call.1} parent=63 // pred_check_branch
          %2473 = sbr.rel (%p2471) target = $region92
        $region91: #{tpu_custom_call.1} parent=63 // pred_region
          _
        $region92: #{tpu_custom_call.1} parent=63 // pred_fallthru
          _
        // Predicated region
        $region93: #{tpu_custom_call.1} parent=63 // pred_check
          %p2474 = pneg %p298
        $region94: #{tpu_custom_call.1} parent=63 // pred_check_branch
          %2476 = sbr.rel (%p2474) target = $region96
        $region95: #{tpu_custom_call.1} parent=63 // pred_region
          %s2478 = ssub.s32 128, 128
          %2479 = vsyncadd [#allocation6], %s2478
          %s2481 = sshll.u32 [#allocation12], 4
          %s2482 = int_to_ptr.vmem [resolvable:$true] %s2481
          %2484 = dma.vmem_to_hbm [thread:$0]  %s2482, 128, %s12, [#allocation6]
        $region96: #{tpu_custom_call.1} parent=63 // pred_fallthru
          _
        // Predicated region
        $region97: #{tpu_custom_call.1} parent=63 // pred_check
          %p2485 = pneg %p277
        $region98: #{tpu_custom_call.1} parent=63 // pred_check_branch
          %2487 = sbr.rel (%p2485) target = $region100
        $region99: #{tpu_custom_call.1} parent=63 // pred_region
          _
        $region100: #{tpu_custom_call.1} parent=63 // pred_fallthru
          _
        // Predicated region
        $region101: #{tpu_custom_call.1} parent=63 // pred_check
          %p2488 = pneg %p298
        $region102: #{tpu_custom_call.1} parent=63 // pred_check_branch
          %2490 = sbr.rel (%p2488) target = $region104
        $region103: #{tpu_custom_call.1} parent=63 // pred_region
          %2491 = dma.done [#allocation6], 128
        $region104: #{tpu_custom_call.1} parent=63 // pred_fallthru
          _
      $region64: #{tpu_custom_call.1} parent=5 // pred_fallthru
        _
      %p2492 = scmp.le.s32.totalorder 2, %s23
      // Predicated region
      $region105: #{tpu_custom_call.1} parent=5 // pred_check
        %p2493 = pneg %p2492
      $region106: #{tpu_custom_call.1} parent=5 // pred_check_branch
        %2495 = sbr.rel (%p2493) target = $region108
      $region107: #{tpu_custom_call.1} parent=5 // pred_region
        %s2496 = ssub.s32 %s23, 2
      $region108: #{tpu_custom_call.1} parent=5 // pred_fallthru
        _
    $region6: #{tpu_custom_call.1} parent=1 // loop_footer
      %s27 = sadd.s32 1, %s23
    $region7: #{tpu_custom_call.1} parent=1 // loop_footer_branch
      %22 = sbr.rel target = $region3
    $region8: #{tpu_custom_call.1} parent=1 // loop_exit
      _
    %2497 = vsyncpa [#allocation5], 1
    %s2498 = scalar_lea.sflag [#allocation5], 1
    %2499 = vsyncpa %s2498, 1
    %2500 = vsyncpa [#allocation8], 1
    %2501 = vsyncpa [#allocation11], 1
    %2502 = vsyncpa [#allocation6], 1
    %s2503 = scalar_lea.sflag [#allocation6], 1
    %2504 = vsyncpa %s2503, 1

</llo_original>
